<compile_context>
chip_gen: v5e
topology: v5e:2x2
jax: 0.10.0
libtpu: 0.0.40
codegen_flags: <defaults>
</compile_context>

<pallas_src>
import functools

import jax
import jax.numpy as jnp
import numpy as np
from jax.experimental import pallas as pl
from jax.experimental.pallas import tpu as pltpu

B = 2
CIN = 3            # fixed by AttentionOneBlock (Conv2d(3, ...))
H = W = 16
BACKBONE_DIM = 32
FEATURES_DIM = 128

_NEG = -1e30


# --------------------------------------------------------------------------- #
# Fused kernel: conv stack -> softmax -> att*x -> backbone -> MLP -> normalize
# --------------------------------------------------------------------------- #
def _fused_kernel(pw, seg, nb, cin,
                  x0_ref, mask_ref,
                  w1_ref, b1_ref, w2_ref, b2_ref, w3_ref, b3_ref,
                  wbp_ref, bb_ref, wh1_ref, bh1_ref, wh2_ref, bh2_ref,
                  o_ref):
    tot = nb * seg
    x0 = x0_ref[...]        # (cin, tot) padded-flat input planes, zero ring/margin
    mask = mask_ref[...]    # (1, tot)  1.0 at interior pixels, 0.0 elsewhere

    # tap offsets in padded-flat coordinates (stride pw per image row)
    offs = [(dh - 1) * pw + (dw - 1) for dh in range(3) for dw in range(3)]

    def conv3x3(a, w_ref, b_ref):
        # a: (cin_l, tot) with zero padding ring; w_ref: (9, cout, cin_l)
        acc = None
        for k, off in enumerate(offs):
            sh = (-off) % tot
            shifted = pltpu.roll(a, shift=sh, axis=1) if sh else a
            t = jnp.dot(w_ref[k], shifted, preferred_element_type=jnp.float32)
            acc = t if acc is None else acc + t
        return acc + b_ref[...]

    # AttentionOneBlock conv stack (ReLU + re-zero ring/margin between layers)
    a = jnp.maximum(conv3x3(x0, w1_ref, b1_ref), 0.0) * mask
    a = jnp.maximum(conv3x3(a, w2_ref, b2_ref), 0.0) * mask
    logits = conv3x3(a, w3_ref, b3_ref)                      # (1, tot)

    # Per-image: softmax over the flattened spatial map, attended image, head.
    for b in range(nb):
        sl = slice(b * seg, (b + 1) * seg)
        lb = jnp.where(mask[:, sl] > 0.0, logits[:, sl], _NEG)
        m = jnp.max(lb, axis=1, keepdims=True)
        e = jnp.exp(lb - m)                                  # 0 at masked lanes
        s = jnp.sum(e, axis=1, keepdims=True)
        att = e * pl.reciprocal(s, approx=True)              # (1, seg) softmax

        # backbone: flatten(att*x) @ Wb  (Wb pre-permuted to padded-flat order)
        f0 = bb_ref[...]                                     # (1, bdim)
        for c in range(cin):
            yc = att * x0[c:c + 1, sl]                       # (1, seg)
            f0 = f0 + jnp.dot(yc, wbp_ref[c],
                              preferred_element_type=jnp.float32)

        # MLP head + F.normalize(dim=1)
        h = jnp.maximum(
            jnp.dot(f0, wh1_ref[...], preferred_element_type=jnp.float32)
            + bh1_ref[...], 0.0)
        o = jnp.dot(h, wh2_ref[...], preferred_element_type=jnp.float32) \
            + bh2_ref[...]
        n2 = jnp.sum(o * o, axis=1, keepdims=True)
        o_ref[b:b + 1, :] = o * jax.lax.rsqrt(jnp.maximum(n2, 1e-24))


# --------------------------------------------------------------------------- #
# Wrapper: layout prep (tiny, fused by XLA under jit) + single pallas_call
# --------------------------------------------------------------------------- #
def contrastive_att_patch_forward(x, p):
    bsz, cin, hh, ww = x.shape
    ph, pw = hh + 2, ww + 2
    plane = ph * pw
    seg = ((plane + 127) // 128) * 128          # lane-dense per-image segment
    tot = bsz * seg

    # padded-flat input planes: (cin, bsz*seg), zero ring + zero margin
    xpad = jnp.pad(x, ((0, 0), (0, 0), (1, 1), (1, 1))).reshape(bsz, cin, plane)
    x0 = jnp.pad(xpad, ((0, 0), (0, 0), (0, seg - plane)))
    x0 = jnp.transpose(x0, (1, 0, 2)).reshape(cin, tot)

    # interior-pixel mask (trace-time constant)
    q = np.arange(seg)
    r, c = q // pw, q % pw
    m = ((q < plane) & (r >= 1) & (r <= hh) & (c >= 1) & (c <= ww))
    mask = jnp.asarray(np.tile(m.astype(np.float32), bsz)[None, :])  # (1, tot)

    # conv weights per tap: (9, cout, cin_l), k = dh*3+dw
    w1t = p['w1'].transpose(2, 3, 0, 1).reshape(9, 8, cin)
    w2t = p['w2'].transpose(2, 3, 0, 1).reshape(9, 8, 8)
    w3t = p['w3'].transpose(2, 3, 0, 1).reshape(9, 1, 8)

    # backbone weight re-indexed to the padded-flat layout: (cin, seg, bdim)
    bdim = p['wb'].shape[1]
    wbp = p['wb'].reshape(cin, hh, ww, bdim)
    wbp = jnp.pad(wbp, ((0, 0), (1, 1), (1, 1), (0, 0))).reshape(cin, plane, bdim)
    wbp = jnp.pad(wbp, ((0, 0), (0, seg - plane), (0, 0)))

    kern = functools.partial(_fused_kernel, pw, seg, bsz, cin)
    return pl.pallas_call(
        kern,
        out_shape=jax.ShapeDtypeStruct((bsz, p['wh2'].shape[1]), jnp.float32),
    )(x0, mask,
      w1t, p['b1'].reshape(-1, 1), w2t, p['b2'].reshape(-1, 1),
      w3t, p['b3'].reshape(-1, 1),
      wbp, p['bb'].reshape(1, -1),
      p['wh1'], p['bh1'].reshape(1, -1),
      p['wh2'], p['bh2'].reshape(1, -1))


# --------------------------------------------------------------------------- #
# Deterministic parameter init (shapes per the module __init__)
# --------------------------------------------------------------------------- #
def init_params(key):
    ks = jax.random.split(key, 12)
    K = CIN * H * W
    return {
        'w1': jax.random.normal(ks[0], (8, 3, 3, 3), jnp.float32) * 0.2,
        'b1': jax.random.normal(ks[1], (8,), jnp.float32) * 0.1,
        'w2': jax.random.normal(ks[2], (8, 8, 3, 3), jnp.float32) * 0.2,
        'b2': jax.random.normal(ks[3], (8,), jnp.float32) * 0.1,
        'w3': jax.random.normal(ks[4], (1, 8, 3, 3), jnp.float32) * 0.2,
        'b3': jax.random.normal(ks[5], (1,), jnp.float32) * 0.1,
        'wb': jax.random.normal(ks[6], (K, BACKBONE_DIM), jnp.float32) / np.sqrt(K),
        'bb': jax.random.normal(ks[7], (BACKBONE_DIM,), jnp.float32) * 0.05,
        'wh1': jax.random.normal(ks[8], (BACKBONE_DIM, BACKBONE_DIM), jnp.float32)
               / np.sqrt(BACKBONE_DIM),
        'bh1': jax.random.normal(ks[9], (BACKBONE_DIM,), jnp.float32) * 0.05,
        'wh2': jax.random.normal(ks[10], (BACKBONE_DIM, FEATURES_DIM), jnp.float32)
               / np.sqrt(BACKBONE_DIM),
        'bh2': jax.random.normal(ks[11], (FEATURES_DIM,), jnp.float32) * 0.05,
    }


# --------------------------------------------------------------------------- #
# Pure-JAX reference (mirrors the PyTorch forward semantics)
# --------------------------------------------------------------------------- #
def ref_forward(x, p):
    dn = ('NCHW', 'OIHW', 'NCHW')
    a = jax.lax.conv_general_dilated(x, p['w1'], (1, 1), 'SAME',
                                     dimension_numbers=dn) + p['b1'][None, :, None, None]
    a = jnp.maximum(a, 0.0)
    a = jax.lax.conv_general_dilated(a, p['w2'], (1, 1), 'SAME',
                                     dimension_numbers=dn) + p['b2'][None, :, None, None]
    a = jnp.maximum(a, 0.0)
    a = jax.lax.conv_general_dilated(a, p['w3'], (1, 1), 'SAME',
                                     dimension_numbers=dn) + p['b3'][None, :, None, None]
    Bx = x.shape[0]
    att = jax.nn.softmax(a.reshape(Bx, -1), axis=1).reshape(a.shape)
    y = att * x
    yf = y.reshape(Bx, -1)
    f0 = yf @ p['wb'] + p['bb']
    h = jnp.maximum(f0 @ p['wh1'] + p['bh1'], 0.0)
    o = h @ p['wh2'] + p['bh2']
    n = jnp.sqrt(jnp.sum(o * o, axis=1, keepdims=True))
    return o / jnp.maximum(n, 1e-12)


if __name__ == "__main__":
    key = jax.random.PRNGKey(0)
    kx, kp = jax.random.split(key)
    x = jax.random.normal(kx, (B, CIN, H, W), jnp.float32)
    params = init_params(kp)

    fwd = jax.jit(contrastive_att_patch_forward)
    out = jax.block_until_ready(fwd(x, params))

    ref = ref_forward(x, params)
    assert out.shape == (B, FEATURES_DIM)
    assert bool(jnp.all(jnp.isfinite(out)))
    np.testing.assert_allclose(np.asarray(out), np.asarray(ref),
                               atol=2e-2, rtol=2e-2)
    print("KERNEL_OK")
</pallas_src>

<mosaic_0001>
module attributes {stable_mosaic.version = 11 : i64} {
  func.func @_fused_kernel(%arg0: memref<3x768xf32, #tpu.memory_space<vmem>>, %arg1: memref<1x768xf32, #tpu.memory_space<vmem>>, %arg2: memref<9x8x3xf32, #tpu.memory_space<vmem>>, %arg3: memref<8x1xf32, #tpu.memory_space<vmem>>, %arg4: memref<9x8x8xf32, #tpu.memory_space<vmem>>, %arg5: memref<8x1xf32, #tpu.memory_space<vmem>>, %arg6: memref<9x1x8xf32, #tpu.memory_space<vmem>>, %arg7: memref<1x1xf32, #tpu.memory_space<vmem>>, %arg8: memref<3x384x32xf32, #tpu.memory_space<vmem>>, %arg9: memref<1x32xf32, #tpu.memory_space<vmem>>, %arg10: memref<32x32xf32, #tpu.memory_space<vmem>>, %arg11: memref<1x32xf32, #tpu.memory_space<vmem>>, %arg12: memref<32x128xf32, #tpu.memory_space<vmem>>, %arg13: memref<1x128xf32, #tpu.memory_space<vmem>>, %arg14: memref<2x128xf32, #tpu.memory_space<vmem>>) attributes {dimension_semantics = [], scalar_prefetch = 0 : i64, scratch_operands = 0 : i64, tpu.core_type = #tpu.core_type<tc>} {
    %c0 = arith.constant 0 : index
    %c0_0 = arith.constant 0 : index
    %0 = vector.load %arg0[%c0, %c0_0] : memref<3x768xf32, #tpu.memory_space<vmem>>, vector<3x768xf32>
    %c0_1 = arith.constant 0 : index
    %c0_2 = arith.constant 0 : index
    %1 = vector.load %arg1[%c0_1, %c0_2] : memref<1x768xf32, #tpu.memory_space<vmem>>, vector<1x768xf32>
    %c19_i32 = arith.constant 19 : i32
    %2 = tpu.dynamic_rotate %0 by %c19_i32 dim 1 : vector<3x768xf32>, i32 -> vector<3x768xf32>
    %c0_3 = arith.constant 0 : index
    %c0_4 = arith.constant 0 : index
    %c0_5 = arith.constant 0 : index
    %3 = vector.load %arg2[%c0_3, %c0_4, %c0_5] : memref<9x8x3xf32, #tpu.memory_space<vmem>>, vector<1x8x3xf32>
    %4 = vector.shape_cast %3 : vector<1x8x3xf32> to vector<8x3xf32>
    %cst = arith.constant dense<0.000000e+00> : vector<8x768xf32>
    %5 = tpu.matmul %4, %2, %cst {dimension_numbers = #tpu.dot_dimension_numbers<[1], [0], [0], [1], [0, 0, 1, 1], [], []>} : vector<8x3xf32>, vector<3x768xf32>, vector<8x768xf32> -> vector<8x768xf32>
    %c18_i32 = arith.constant 18 : i32
    %6 = tpu.dynamic_rotate %0 by %c18_i32 dim 1 : vector<3x768xf32>, i32 -> vector<3x768xf32>
    %c1 = arith.constant 1 : index
    %c0_6 = arith.constant 0 : index
    %c0_7 = arith.constant 0 : index
    %7 = vector.load %arg2[%c1, %c0_6, %c0_7] : memref<9x8x3xf32, #tpu.memory_space<vmem>>, vector<1x8x3xf32>
    %8 = vector.shape_cast %7 : vector<1x8x3xf32> to vector<8x3xf32>
    %cst_8 = arith.constant dense<0.000000e+00> : vector<8x768xf32>
    %9 = tpu.matmul %8, %6, %cst_8 {dimension_numbers = #tpu.dot_dimension_numbers<[1], [0], [0], [1], [0, 0, 1, 1], [], []>} : vector<8x3xf32>, vector<3x768xf32>, vector<8x768xf32> -> vector<8x768xf32>
    %10 = arith.addf %5, %9 : vector<8x768xf32>
    %c17_i32 = arith.constant 17 : i32
    %11 = tpu.dynamic_rotate %0 by %c17_i32 dim 1 : vector<3x768xf32>, i32 -> vector<3x768xf32>
    %c2 = arith.constant 2 : index
    %c0_9 = arith.constant 0 : index
    %c0_10 = arith.constant 0 : index
    %12 = vector.load %arg2[%c2, %c0_9, %c0_10] : memref<9x8x3xf32, #tpu.memory_space<vmem>>, vector<1x8x3xf32>
    %13 = vector.shape_cast %12 : vector<1x8x3xf32> to vector<8x3xf32>
    %cst_11 = arith.constant dense<0.000000e+00> : vector<8x768xf32>
    %14 = tpu.matmul %13, %11, %cst_11 {dimension_numbers = #tpu.dot_dimension_numbers<[1], [0], [0], [1], [0, 0, 1, 1], [], []>} : vector<8x3xf32>, vector<3x768xf32>, vector<8x768xf32> -> vector<8x768xf32>
    %15 = arith.addf %10, %14 : vector<8x768xf32>
    %c1_i32 = arith.constant 1 : i32
    %16 = tpu.dynamic_rotate %0 by %c1_i32 dim 1 : vector<3x768xf32>, i32 -> vector<3x768xf32>
    %c3 = arith.constant 3 : index
    %c0_12 = arith.constant 0 : index
    %c0_13 = arith.constant 0 : index
    %17 = vector.load %arg2[%c3, %c0_12, %c0_13] : memref<9x8x3xf32, #tpu.memory_space<vmem>>, vector<1x8x3xf32>
    %18 = vector.shape_cast %17 : vector<1x8x3xf32> to vector<8x3xf32>
    %cst_14 = arith.constant dense<0.000000e+00> : vector<8x768xf32>
    %19 = tpu.matmul %18, %16, %cst_14 {dimension_numbers = #tpu.dot_dimension_numbers<[1], [0], [0], [1], [0, 0, 1, 1], [], []>} : vector<8x3xf32>, vector<3x768xf32>, vector<8x768xf32> -> vector<8x768xf32>
    %20 = arith.addf %15, %19 : vector<8x768xf32>
    %c4 = arith.constant 4 : index
    %c0_15 = arith.constant 0 : index
    %c0_16 = arith.constant 0 : index
    %21 = vector.load %arg2[%c4, %c0_15, %c0_16] : memref<9x8x3xf32, #tpu.memory_space<vmem>>, vector<1x8x3xf32>
    %22 = vector.shape_cast %21 : vector<1x8x3xf32> to vector<8x3xf32>
    %cst_17 = arith.constant dense<0.000000e+00> : vector<8x768xf32>
    %23 = tpu.matmul %22, %0, %cst_17 {dimension_numbers = #tpu.dot_dimension_numbers<[1], [0], [0], [1], [0, 0, 1, 1], [], []>} : vector<8x3xf32>, vector<3x768xf32>, vector<8x768xf32> -> vector<8x768xf32>
    %24 = arith.addf %20, %23 : vector<8x768xf32>
    %c767_i32 = arith.constant 767 : i32
    %25 = tpu.dynamic_rotate %0 by %c767_i32 dim 1 : vector<3x768xf32>, i32 -> vector<3x768xf32>
    %c5 = arith.constant 5 : index
    %c0_18 = arith.constant 0 : index
    %c0_19 = arith.constant 0 : index
    %26 = vector.load %arg2[%c5, %c0_18, %c0_19] : memref<9x8x3xf32, #tpu.memory_space<vmem>>, vector<1x8x3xf32>
    %27 = vector.shape_cast %26 : vector<1x8x3xf32> to vector<8x3xf32>
    %cst_20 = arith.constant dense<0.000000e+00> : vector<8x768xf32>
    %28 = tpu.matmul %27, %25, %cst_20 {dimension_numbers = #tpu.dot_dimension_numbers<[1], [0], [0], [1], [0, 0, 1, 1], [], []>} : vector<8x3xf32>, vector<3x768xf32>, vector<8x768xf32> -> vector<8x768xf32>
    %29 = arith.addf %24, %28 : vector<8x768xf32>
    %c751_i32 = arith.constant 751 : i32
    %30 = tpu.dynamic_rotate %0 by %c751_i32 dim 1 : vector<3x768xf32>, i32 -> vector<3x768xf32>
    %c6 = arith.constant 6 : index
    %c0_21 = arith.constant 0 : index
    %c0_22 = arith.constant 0 : index
    %31 = vector.load %arg2[%c6, %c0_21, %c0_22] : memref<9x8x3xf32, #tpu.memory_space<vmem>>, vector<1x8x3xf32>
    %32 = vector.shape_cast %31 : vector<1x8x3xf32> to vector<8x3xf32>
    %cst_23 = arith.constant dense<0.000000e+00> : vector<8x768xf32>
    %33 = tpu.matmul %32, %30, %cst_23 {dimension_numbers = #tpu.dot_dimension_numbers<[1], [0], [0], [1], [0, 0, 1, 1], [], []>} : vector<8x3xf32>, vector<3x768xf32>, vector<8x768xf32> -> vector<8x768xf32>
    %34 = arith.addf %29, %33 : vector<8x768xf32>
    %c750_i32 = arith.constant 750 : i32
    %35 = tpu.dynamic_rotate %0 by %c750_i32 dim 1 : vector<3x768xf32>, i32 -> vector<3x768xf32>
    %c7 = arith.constant 7 : index
    %c0_24 = arith.constant 0 : index
    %c0_25 = arith.constant 0 : index
    %36 = vector.load %arg2[%c7, %c0_24, %c0_25] : memref<9x8x3xf32, #tpu.memory_space<vmem>>, vector<1x8x3xf32>
    %37 = vector.shape_cast %36 : vector<1x8x3xf32> to vector<8x3xf32>
    %cst_26 = arith.constant dense<0.000000e+00> : vector<8x768xf32>
    %38 = tpu.matmul %37, %35, %cst_26 {dimension_numbers = #tpu.dot_dimension_numbers<[1], [0], [0], [1], [0, 0, 1, 1], [], []>} : vector<8x3xf32>, vector<3x768xf32>, vector<8x768xf32> -> vector<8x768xf32>
    %39 = arith.addf %34, %38 : vector<8x768xf32>
    %c749_i32 = arith.constant 749 : i32
    %40 = tpu.dynamic_rotate %0 by %c749_i32 dim 1 : vector<3x768xf32>, i32 -> vector<3x768xf32>
    %c8 = arith.constant 8 : index
    %c0_27 = arith.constant 0 : index
    %c0_28 = arith.constant 0 : index
    %41 = vector.load %arg2[%c8, %c0_27, %c0_28] : memref<9x8x3xf32, #tpu.memory_space<vmem>>, vector<1x8x3xf32>
    %42 = vector.shape_cast %41 : vector<1x8x3xf32> to vector<8x3xf32>
    %cst_29 = arith.constant dense<0.000000e+00> : vector<8x768xf32>
    %43 = tpu.matmul %42, %40, %cst_29 {dimension_numbers = #tpu.dot_dimension_numbers<[1], [0], [0], [1], [0, 0, 1, 1], [], []>} : vector<8x3xf32>, vector<3x768xf32>, vector<8x768xf32> -> vector<8x768xf32>
    %44 = arith.addf %39, %43 : vector<8x768xf32>
    %c0_30 = arith.constant 0 : index
    %c0_31 = arith.constant 0 : index
    %45 = vector.load %arg3[%c0_30, %c0_31] : memref<8x1xf32, #tpu.memory_space<vmem>>, vector<8x1xf32>
    %46 = vector.broadcast %45 : vector<8x1xf32> to vector<8x768xf32>
    %47 = arith.addf %44, %46 : vector<8x768xf32>
    %cst_32 = arith.constant 0.000000e+00 : f32
    %48 = vector.broadcast %cst_32 : f32 to vector<8x768xf32>
    %49 = arith.maximumf %47, %48 : vector<8x768xf32>
    %50 = vector.broadcast %1 : vector<1x768xf32> to vector<8x768xf32>
    %51 = arith.mulf %49, %50 : vector<8x768xf32>
    %c19_i32_33 = arith.constant 19 : i32
    %52 = tpu.dynamic_rotate %51 by %c19_i32_33 dim 1 : vector<8x768xf32>, i32 -> vector<8x768xf32>
    %c0_34 = arith.constant 0 : index
    %c0_35 = arith.constant 0 : index
    %c0_36 = arith.constant 0 : index
    %53 = vector.load %arg4[%c0_34, %c0_35, %c0_36] : memref<9x8x8xf32, #tpu.memory_space<vmem>>, vector<1x8x8xf32>
    %54 = vector.shape_cast %53 : vector<1x8x8xf32> to vector<8x8xf32>
    %cst_37 = arith.constant dense<0.000000e+00> : vector<8x768xf32>
    %55 = tpu.matmul %54, %52, %cst_37 {dimension_numbers = #tpu.dot_dimension_numbers<[1], [0], [0], [1], [0, 0, 1, 1], [], []>} : vector<8x8xf32>, vector<8x768xf32>, vector<8x768xf32> -> vector<8x768xf32>
    %c18_i32_38 = arith.constant 18 : i32
    %56 = tpu.dynamic_rotate %51 by %c18_i32_38 dim 1 : vector<8x768xf32>, i32 -> vector<8x768xf32>
    %c1_39 = arith.constant 1 : index
    %c0_40 = arith.constant 0 : index
    %c0_41 = arith.constant 0 : index
    %57 = vector.load %arg4[%c1_39, %c0_40, %c0_41] : memref<9x8x8xf32, #tpu.memory_space<vmem>>, vector<1x8x8xf32>
    %58 = vector.shape_cast %57 : vector<1x8x8xf32> to vector<8x8xf32>
    %cst_42 = arith.constant dense<0.000000e+00> : vector<8x768xf32>
    %59 = tpu.matmul %58, %56, %cst_42 {dimension_numbers = #tpu.dot_dimension_numbers<[1], [0], [0], [1], [0, 0, 1, 1], [], []>} : vector<8x8xf32>, vector<8x768xf32>, vector<8x768xf32> -> vector<8x768xf32>
    %60 = arith.addf %55, %59 : vector<8x768xf32>
    %c17_i32_43 = arith.constant 17 : i32
    %61 = tpu.dynamic_rotate %51 by %c17_i32_43 dim 1 : vector<8x768xf32>, i32 -> vector<8x768xf32>
    %c2_44 = arith.constant 2 : index
    %c0_45 = arith.constant 0 : index
    %c0_46 = arith.constant 0 : index
    %62 = vector.load %arg4[%c2_44, %c0_45, %c0_46] : memref<9x8x8xf32, #tpu.memory_space<vmem>>, vector<1x8x8xf32>
    %63 = vector.shape_cast %62 : vector<1x8x8xf32> to vector<8x8xf32>
    %cst_47 = arith.constant dense<0.000000e+00> : vector<8x768xf32>
    %64 = tpu.matmul %63, %61, %cst_47 {dimension_numbers = #tpu.dot_dimension_numbers<[1], [0], [0], [1], [0, 0, 1, 1], [], []>} : vector<8x8xf32>, vector<8x768xf32>, vector<8x768xf32> -> vector<8x768xf32>
    %65 = arith.addf %60, %64 : vector<8x768xf32>
    %c1_i32_48 = arith.constant 1 : i32
    %66 = tpu.dynamic_rotate %51 by %c1_i32_48 dim 1 : vector<8x768xf32>, i32 -> vector<8x768xf32>
    %c3_49 = arith.constant 3 : index
    %c0_50 = arith.constant 0 : index
    %c0_51 = arith.constant 0 : index
    %67 = vector.load %arg4[%c3_49, %c0_50, %c0_51] : memref<9x8x8xf32, #tpu.memory_space<vmem>>, vector<1x8x8xf32>
    %68 = vector.shape_cast %67 : vector<1x8x8xf32> to vector<8x8xf32>
    %cst_52 = arith.constant dense<0.000000e+00> : vector<8x768xf32>
    %69 = tpu.matmul %68, %66, %cst_52 {dimension_numbers = #tpu.dot_dimension_numbers<[1], [0], [0], [1], [0, 0, 1, 1], [], []>} : vector<8x8xf32>, vector<8x768xf32>, vector<8x768xf32> -> vector<8x768xf32>
    %70 = arith.addf %65, %69 : vector<8x768xf32>
    %c4_53 = arith.constant 4 : index
    %c0_54 = arith.constant 0 : index
    %c0_55 = arith.constant 0 : index
    %71 = vector.load %arg4[%c4_53, %c0_54, %c0_55] : memref<9x8x8xf32, #tpu.memory_space<vmem>>, vector<1x8x8xf32>
    %72 = vector.shape_cast %71 : vector<1x8x8xf32> to vector<8x8xf32>
    %cst_56 = arith.constant dense<0.000000e+00> : vector<8x768xf32>
    %73 = tpu.matmul %72, %51, %cst_56 {dimension_numbers = #tpu.dot_dimension_numbers<[1], [0], [0], [1], [0, 0, 1, 1], [], []>} : vector<8x8xf32>, vector<8x768xf32>, vector<8x768xf32> -> vector<8x768xf32>
    %74 = arith.addf %70, %73 : vector<8x768xf32>
    %c767_i32_57 = arith.constant 767 : i32
    %75 = tpu.dynamic_rotate %51 by %c767_i32_57 dim 1 : vector<8x768xf32>, i32 -> vector<8x768xf32>
    %c5_58 = arith.constant 5 : index
    %c0_59 = arith.constant 0 : index
    %c0_60 = arith.constant 0 : index
    %76 = vector.load %arg4[%c5_58, %c0_59, %c0_60] : memref<9x8x8xf32, #tpu.memory_space<vmem>>, vector<1x8x8xf32>
    %77 = vector.shape_cast %76 : vector<1x8x8xf32> to vector<8x8xf32>
    %cst_61 = arith.constant dense<0.000000e+00> : vector<8x768xf32>
    %78 = tpu.matmul %77, %75, %cst_61 {dimension_numbers = #tpu.dot_dimension_numbers<[1], [0], [0], [1], [0, 0, 1, 1], [], []>} : vector<8x8xf32>, vector<8x768xf32>, vector<8x768xf32> -> vector<8x768xf32>
    %79 = arith.addf %74, %78 : vector<8x768xf32>
    %c751_i32_62 = arith.constant 751 : i32
    %80 = tpu.dynamic_rotate %51 by %c751_i32_62 dim 1 : vector<8x768xf32>, i32 -> vector<8x768xf32>
    %c6_63 = arith.constant 6 : index
    %c0_64 = arith.constant 0 : index
    %c0_65 = arith.constant 0 : index
    %81 = vector.load %arg4[%c6_63, %c0_64, %c0_65] : memref<9x8x8xf32, #tpu.memory_space<vmem>>, vector<1x8x8xf32>
    %82 = vector.shape_cast %81 : vector<1x8x8xf32> to vector<8x8xf32>
    %cst_66 = arith.constant dense<0.000000e+00> : vector<8x768xf32>
    %83 = tpu.matmul %82, %80, %cst_66 {dimension_numbers = #tpu.dot_dimension_numbers<[1], [0], [0], [1], [0, 0, 1, 1], [], []>} : vector<8x8xf32>, vector<8x768xf32>, vector<8x768xf32> -> vector<8x768xf32>
    %84 = arith.addf %79, %83 : vector<8x768xf32>
    %c750_i32_67 = arith.constant 750 : i32
    %85 = tpu.dynamic_rotate %51 by %c750_i32_67 dim 1 : vector<8x768xf32>, i32 -> vector<8x768xf32>
    %c7_68 = arith.constant 7 : index
    %c0_69 = arith.constant 0 : index
    %c0_70 = arith.constant 0 : index
    %86 = vector.load %arg4[%c7_68, %c0_69, %c0_70] : memref<9x8x8xf32, #tpu.memory_space<vmem>>, vector<1x8x8xf32>
    %87 = vector.shape_cast %86 : vector<1x8x8xf32> to vector<8x8xf32>
    %cst_71 = arith.constant dense<0.000000e+00> : vector<8x768xf32>
    %88 = tpu.matmul %87, %85, %cst_71 {dimension_numbers = #tpu.dot_dimension_numbers<[1], [0], [0], [1], [0, 0, 1, 1], [], []>} : vector<8x8xf32>, vector<8x768xf32>, vector<8x768xf32> -> vector<8x768xf32>
    %89 = arith.addf %84, %88 : vector<8x768xf32>
    %c749_i32_72 = arith.constant 749 : i32
    %90 = tpu.dynamic_rotate %51 by %c749_i32_72 dim 1 : vector<8x768xf32>, i32 -> vector<8x768xf32>
    %c8_73 = arith.constant 8 : index
    %c0_74 = arith.constant 0 : index
    %c0_75 = arith.constant 0 : index
    %91 = vector.load %arg4[%c8_73, %c0_74, %c0_75] : memref<9x8x8xf32, #tpu.memory_space<vmem>>, vector<1x8x8xf32>
    %92 = vector.shape_cast %91 : vector<1x8x8xf32> to vector<8x8xf32>
    %cst_76 = arith.constant dense<0.000000e+00> : vector<8x768xf32>
    %93 = tpu.matmul %92, %90, %cst_76 {dimension_numbers = #tpu.dot_dimension_numbers<[1], [0], [0], [1], [0, 0, 1, 1], [], []>} : vector<8x8xf32>, vector<8x768xf32>, vector<8x768xf32> -> vector<8x768xf32>
    %94 = arith.addf %89, %93 : vector<8x768xf32>
    %c0_77 = arith.constant 0 : index
    %c0_78 = arith.constant 0 : index
    %95 = vector.load %arg5[%c0_77, %c0_78] : memref<8x1xf32, #tpu.memory_space<vmem>>, vector<8x1xf32>
    %96 = vector.broadcast %95 : vector<8x1xf32> to vector<8x768xf32>
    %97 = arith.addf %94, %96 : vector<8x768xf32>
    %cst_79 = arith.constant 0.000000e+00 : f32
    %98 = vector.broadcast %cst_79 : f32 to vector<8x768xf32>
    %99 = arith.maximumf %97, %98 : vector<8x768xf32>
    %100 = vector.broadcast %1 : vector<1x768xf32> to vector<8x768xf32>
    %101 = arith.mulf %99, %100 : vector<8x768xf32>
    %c19_i32_80 = arith.constant 19 : i32
    %102 = tpu.dynamic_rotate %101 by %c19_i32_80 dim 1 : vector<8x768xf32>, i32 -> vector<8x768xf32>
    %c0_81 = arith.constant 0 : index
    %c0_82 = arith.constant 0 : index
    %c0_83 = arith.constant 0 : index
    %103 = vector.load %arg6[%c0_81, %c0_82, %c0_83] : memref<9x1x8xf32, #tpu.memory_space<vmem>>, vector<1x1x8xf32>
    %104 = vector.shape_cast %103 : vector<1x1x8xf32> to vector<1x8xf32>
    %cst_84 = arith.constant dense<0.000000e+00> : vector<1x768xf32>
    %105 = tpu.matmul %104, %102, %cst_84 {dimension_numbers = #tpu.dot_dimension_numbers<[1], [0], [0], [1], [0, 0, 1, 1], [], []>} : vector<1x8xf32>, vector<8x768xf32>, vector<1x768xf32> -> vector<1x768xf32>
    %c18_i32_85 = arith.constant 18 : i32
    %106 = tpu.dynamic_rotate %101 by %c18_i32_85 dim 1 : vector<8x768xf32>, i32 -> vector<8x768xf32>
    %c1_86 = arith.constant 1 : index
    %c0_87 = arith.constant 0 : index
    %c0_88 = arith.constant 0 : index
    %107 = vector.load %arg6[%c1_86, %c0_87, %c0_88] : memref<9x1x8xf32, #tpu.memory_space<vmem>>, vector<1x1x8xf32>
    %108 = vector.shape_cast %107 : vector<1x1x8xf32> to vector<1x8xf32>
    %cst_89 = arith.constant dense<0.000000e+00> : vector<1x768xf32>
    %109 = tpu.matmul %108, %106, %cst_89 {dimension_numbers = #tpu.dot_dimension_numbers<[1], [0], [0], [1], [0, 0, 1, 1], [], []>} : vector<1x8xf32>, vector<8x768xf32>, vector<1x768xf32> -> vector<1x768xf32>
    %110 = arith.addf %105, %109 : vector<1x768xf32>
    %c17_i32_90 = arith.constant 17 : i32
    %111 = tpu.dynamic_rotate %101 by %c17_i32_90 dim 1 : vector<8x768xf32>, i32 -> vector<8x768xf32>
    %c2_91 = arith.constant 2 : index
    %c0_92 = arith.constant 0 : index
    %c0_93 = arith.constant 0 : index
    %112 = vector.load %arg6[%c2_91, %c0_92, %c0_93] : memref<9x1x8xf32, #tpu.memory_space<vmem>>, vector<1x1x8xf32>
    %113 = vector.shape_cast %112 : vector<1x1x8xf32> to vector<1x8xf32>
    %cst_94 = arith.constant dense<0.000000e+00> : vector<1x768xf32>
    %114 = tpu.matmul %113, %111, %cst_94 {dimension_numbers = #tpu.dot_dimension_numbers<[1], [0], [0], [1], [0, 0, 1, 1], [], []>} : vector<1x8xf32>, vector<8x768xf32>, vector<1x768xf32> -> vector<1x768xf32>
    %115 = arith.addf %110, %114 : vector<1x768xf32>
    %c1_i32_95 = arith.constant 1 : i32
    %116 = tpu.dynamic_rotate %101 by %c1_i32_95 dim 1 : vector<8x768xf32>, i32 -> vector<8x768xf32>
    %c3_96 = arith.constant 3 : index
    %c0_97 = arith.constant 0 : index
    %c0_98 = arith.constant 0 : index
    %117 = vector.load %arg6[%c3_96, %c0_97, %c0_98] : memref<9x1x8xf32, #tpu.memory_space<vmem>>, vector<1x1x8xf32>
    %118 = vector.shape_cast %117 : vector<1x1x8xf32> to vector<1x8xf32>
    %cst_99 = arith.constant dense<0.000000e+00> : vector<1x768xf32>
    %119 = tpu.matmul %118, %116, %cst_99 {dimension_numbers = #tpu.dot_dimension_numbers<[1], [0], [0], [1], [0, 0, 1, 1], [], []>} : vector<1x8xf32>, vector<8x768xf32>, vector<1x768xf32> -> vector<1x768xf32>
    %120 = arith.addf %115, %119 : vector<1x768xf32>
    %c4_100 = arith.constant 4 : index
    %c0_101 = arith.constant 0 : index
    %c0_102 = arith.constant 0 : index
    %121 = vector.load %arg6[%c4_100, %c0_101, %c0_102] : memref<9x1x8xf32, #tpu.memory_space<vmem>>, vector<1x1x8xf32>
    %122 = vector.shape_cast %121 : vector<1x1x8xf32> to vector<1x8xf32>
    %cst_103 = arith.constant dense<0.000000e+00> : vector<1x768xf32>
    %123 = tpu.matmul %122, %101, %cst_103 {dimension_numbers = #tpu.dot_dimension_numbers<[1], [0], [0], [1], [0, 0, 1, 1], [], []>} : vector<1x8xf32>, vector<8x768xf32>, vector<1x768xf32> -> vector<1x768xf32>
    %124 = arith.addf %120, %123 : vector<1x768xf32>
    %c767_i32_104 = arith.constant 767 : i32
    %125 = tpu.dynamic_rotate %101 by %c767_i32_104 dim 1 : vector<8x768xf32>, i32 -> vector<8x768xf32>
    %c5_105 = arith.constant 5 : index
    %c0_106 = arith.constant 0 : index
    %c0_107 = arith.constant 0 : index
    %126 = vector.load %arg6[%c5_105, %c0_106, %c0_107] : memref<9x1x8xf32, #tpu.memory_space<vmem>>, vector<1x1x8xf32>
    %127 = vector.shape_cast %126 : vector<1x1x8xf32> to vector<1x8xf32>
    %cst_108 = arith.constant dense<0.000000e+00> : vector<1x768xf32>
    %128 = tpu.matmul %127, %125, %cst_108 {dimension_numbers = #tpu.dot_dimension_numbers<[1], [0], [0], [1], [0, 0, 1, 1], [], []>} : vector<1x8xf32>, vector<8x768xf32>, vector<1x768xf32> -> vector<1x768xf32>
    %129 = arith.addf %124, %128 : vector<1x768xf32>
    %c751_i32_109 = arith.constant 751 : i32
    %130 = tpu.dynamic_rotate %101 by %c751_i32_109 dim 1 : vector<8x768xf32>, i32 -> vector<8x768xf32>
    %c6_110 = arith.constant 6 : index
    %c0_111 = arith.constant 0 : index
    %c0_112 = arith.constant 0 : index
    %131 = vector.load %arg6[%c6_110, %c0_111, %c0_112] : memref<9x1x8xf32, #tpu.memory_space<vmem>>, vector<1x1x8xf32>
    %132 = vector.shape_cast %131 : vector<1x1x8xf32> to vector<1x8xf32>
    %cst_113 = arith.constant dense<0.000000e+00> : vector<1x768xf32>
    %133 = tpu.matmul %132, %130, %cst_113 {dimension_numbers = #tpu.dot_dimension_numbers<[1], [0], [0], [1], [0, 0, 1, 1], [], []>} : vector<1x8xf32>, vector<8x768xf32>, vector<1x768xf32> -> vector<1x768xf32>
    %134 = arith.addf %129, %133 : vector<1x768xf32>
    %c750_i32_114 = arith.constant 750 : i32
    %135 = tpu.dynamic_rotate %101 by %c750_i32_114 dim 1 : vector<8x768xf32>, i32 -> vector<8x768xf32>
    %c7_115 = arith.constant 7 : index
    %c0_116 = arith.constant 0 : index
    %c0_117 = arith.constant 0 : index
    %136 = vector.load %arg6[%c7_115, %c0_116, %c0_117] : memref<9x1x8xf32, #tpu.memory_space<vmem>>, vector<1x1x8xf32>
    %137 = vector.shape_cast %136 : vector<1x1x8xf32> to vector<1x8xf32>
    %cst_118 = arith.constant dense<0.000000e+00> : vector<1x768xf32>
    %138 = tpu.matmul %137, %135, %cst_118 {dimension_numbers = #tpu.dot_dimension_numbers<[1], [0], [0], [1], [0, 0, 1, 1], [], []>} : vector<1x8xf32>, vector<8x768xf32>, vector<1x768xf32> -> vector<1x768xf32>
    %139 = arith.addf %134, %138 : vector<1x768xf32>
    %c749_i32_119 = arith.constant 749 : i32
    %140 = tpu.dynamic_rotate %101 by %c749_i32_119 dim 1 : vector<8x768xf32>, i32 -> vector<8x768xf32>
    %c8_120 = arith.constant 8 : index
    %c0_121 = arith.constant 0 : index
    %c0_122 = arith.constant 0 : index
    %141 = vector.load %arg6[%c8_120, %c0_121, %c0_122] : memref<9x1x8xf32, #tpu.memory_space<vmem>>, vector<1x1x8xf32>
    %142 = vector.shape_cast %141 : vector<1x1x8xf32> to vector<1x8xf32>
    %cst_123 = arith.constant dense<0.000000e+00> : vector<1x768xf32>
    %143 = tpu.matmul %142, %140, %cst_123 {dimension_numbers = #tpu.dot_dimension_numbers<[1], [0], [0], [1], [0, 0, 1, 1], [], []>} : vector<1x8xf32>, vector<8x768xf32>, vector<1x768xf32> -> vector<1x768xf32>
    %144 = arith.addf %139, %143 : vector<1x768xf32>
    %c0_124 = arith.constant 0 : index
    %c0_125 = arith.constant 0 : index
    %145 = vector.load %arg7[%c0_124, %c0_125] : memref<1x1xf32, #tpu.memory_space<vmem>>, vector<1x1xf32>
    %146 = vector.broadcast %145 : vector<1x1xf32> to vector<1x768xf32>
    %147 = arith.addf %144, %146 : vector<1x768xf32>
    %148 = vector.extract_strided_slice %1 {offsets = [0, 0], sizes = [1, 384], strides = [1, 1]} : vector<1x768xf32> to vector<1x384xf32>
    %cst_126 = arith.constant 0.000000e+00 : f32
    %149 = vector.broadcast %cst_126 : f32 to vector<1x384xf32>
    %150 = arith.cmpf ogt, %148, %149 : vector<1x384xf32>
    %151 = vector.extract_strided_slice %147 {offsets = [0, 0], sizes = [1, 384], strides = [1, 1]} : vector<1x768xf32> to vector<1x384xf32>
    %cst_127 = arith.constant -1.000000e+30 : f32
    %152 = vector.broadcast %cst_127 : f32 to vector<1x384xf32>
    %153 = arith.select %150, %151, %152 : vector<1x384xi1>, vector<1x384xf32>
    %cst_128 = arith.constant dense<0xFF800000> : vector<1xf32>
    %154 = vector.multi_reduction <maximumf>, %153, %cst_128 [1] : vector<1x384xf32> to vector<1xf32>
    %155 = vector.shape_cast %154 : vector<1xf32> to vector<1x1xf32>
    %156 = vector.broadcast %155 : vector<1x1xf32> to vector<1x384xf32>
    %157 = arith.subf %153, %156 : vector<1x384xf32>
    %158 = math.exp %157 : vector<1x384xf32>
    %cst_129 = arith.constant dense<0.000000e+00> : vector<1xf32>
    %159 = vector.multi_reduction <add>, %158, %cst_129 [1] : vector<1x384xf32> to vector<1xf32>
    %160 = vector.shape_cast %159 : vector<1xf32> to vector<1x1xf32>
    %161 = tpu.reciprocal %160 {approx = true} : vector<1x1xf32> -> vector<1x1xf32>
    %162 = vector.broadcast %161 : vector<1x1xf32> to vector<1x384xf32>
    %163 = arith.mulf %158, %162 : vector<1x384xf32>
    %c0_130 = arith.constant 0 : index
    %c0_131 = arith.constant 0 : index
    %164 = vector.load %arg9[%c0_130, %c0_131] : memref<1x32xf32, #tpu.memory_space<vmem>>, vector<1x32xf32>
    %165 = vector.extract_strided_slice %0 {offsets = [0, 0], sizes = [1, 384], strides = [1, 1]} : vector<3x768xf32> to vector<1x384xf32>
    %166 = arith.mulf %163, %165 : vector<1x384xf32>
    %c0_132 = arith.constant 0 : index
    %c0_133 = arith.constant 0 : index
    %c0_134 = arith.constant 0 : index
    %167 = vector.load %arg8[%c0_132, %c0_133, %c0_134] : memref<3x384x32xf32, #tpu.memory_space<vmem>>, vector<1x384x32xf32>
    %168 = vector.shape_cast %167 : vector<1x384x32xf32> to vector<384x32xf32>
    %cst_135 = arith.constant dense<0.000000e+00> : vector<1x32xf32>
    %169 = tpu.matmul %166, %168, %cst_135 {dimension_numbers = #tpu.dot_dimension_numbers<[1], [0], [0], [1], [0, 0, 1, 1], [], []>} : vector<1x384xf32>, vector<384x32xf32>, vector<1x32xf32> -> vector<1x32xf32>
    %170 = arith.addf %164, %169 : vector<1x32xf32>
    %171 = vector.extract_strided_slice %0 {offsets = [1, 0], sizes = [1, 384], strides = [1, 1]} : vector<3x768xf32> to vector<1x384xf32>
    %172 = arith.mulf %163, %171 : vector<1x384xf32>
    %c1_136 = arith.constant 1 : index
    %c0_137 = arith.constant 0 : index
    %c0_138 = arith.constant 0 : index
    %173 = vector.load %arg8[%c1_136, %c0_137, %c0_138] : memref<3x384x32xf32, #tpu.memory_space<vmem>>, vector<1x384x32xf32>
    %174 = vector.shape_cast %173 : vector<1x384x32xf32> to vector<384x32xf32>
    %cst_139 = arith.constant dense<0.000000e+00> : vector<1x32xf32>
    %175 = tpu.matmul %172, %174, %cst_139 {dimension_numbers = #tpu.dot_dimension_numbers<[1], [0], [0], [1], [0, 0, 1, 1], [], []>} : vector<1x384xf32>, vector<384x32xf32>, vector<1x32xf32> -> vector<1x32xf32>
    %176 = arith.addf %170, %175 : vector<1x32xf32>
    %177 = vector.extract_strided_slice %0 {offsets = [2, 0], sizes = [1, 384], strides = [1, 1]} : vector<3x768xf32> to vector<1x384xf32>
    %178 = arith.mulf %163, %177 : vector<1x384xf32>
    %c2_140 = arith.constant 2 : index
    %c0_141 = arith.constant 0 : index
    %c0_142 = arith.constant 0 : index
    %179 = vector.load %arg8[%c2_140, %c0_141, %c0_142] : memref<3x384x32xf32, #tpu.memory_space<vmem>>, vector<1x384x32xf32>
    %180 = vector.shape_cast %179 : vector<1x384x32xf32> to vector<384x32xf32>
    %cst_143 = arith.constant dense<0.000000e+00> : vector<1x32xf32>
    %181 = tpu.matmul %178, %180, %cst_143 {dimension_numbers = #tpu.dot_dimension_numbers<[1], [0], [0], [1], [0, 0, 1, 1], [], []>} : vector<1x384xf32>, vector<384x32xf32>, vector<1x32xf32> -> vector<1x32xf32>
    %182 = arith.addf %176, %181 : vector<1x32xf32>
    %c0_144 = arith.constant 0 : index
    %c0_145 = arith.constant 0 : index
    %183 = vector.load %arg10[%c0_144, %c0_145] : memref<32x32xf32, #tpu.memory_space<vmem>>, vector<32x32xf32>
    %cst_146 = arith.constant dense<0.000000e+00> : vector<1x32xf32>
    %184 = tpu.matmul %182, %183, %cst_146 {dimension_numbers = #tpu.dot_dimension_numbers<[1], [0], [0], [1], [0, 0, 1, 1], [], []>} : vector<1x32xf32>, vector<32x32xf32>, vector<1x32xf32> -> vector<1x32xf32>
    %c0_147 = arith.constant 0 : index
    %c0_148 = arith.constant 0 : index
    %185 = vector.load %arg11[%c0_147, %c0_148] : memref<1x32xf32, #tpu.memory_space<vmem>>, vector<1x32xf32>
    %186 = arith.addf %184, %185 : vector<1x32xf32>
    %cst_149 = arith.constant 0.000000e+00 : f32
    %187 = vector.broadcast %cst_149 : f32 to vector<1x32xf32>
    %188 = arith.maximumf %186, %187 : vector<1x32xf32>
    %c0_150 = arith.constant 0 : index
    %c0_151 = arith.constant 0 : index
    %189 = vector.load %arg12[%c0_150, %c0_151] : memref<32x128xf32, #tpu.memory_space<vmem>>, vector<32x128xf32>
    %cst_152 = arith.constant dense<0.000000e+00> : vector<1x128xf32>
    %190 = tpu.matmul %188, %189, %cst_152 {dimension_numbers = #tpu.dot_dimension_numbers<[1], [0], [0], [1], [0, 0, 1, 1], [], []>} : vector<1x32xf32>, vector<32x128xf32>, vector<1x128xf32> -> vector<1x128xf32>
    %c0_153 = arith.constant 0 : index
    %c0_154 = arith.constant 0 : index
    %191 = vector.load %arg13[%c0_153, %c0_154] : memref<1x128xf32, #tpu.memory_space<vmem>>, vector<1x128xf32>
    %192 = arith.addf %190, %191 : vector<1x128xf32>
    %193 = arith.mulf %192, %192 : vector<1x128xf32>
    %cst_155 = arith.constant dense<0.000000e+00> : vector<1xf32>
    %194 = vector.multi_reduction <add>, %193, %cst_155 [1] : vector<1x128xf32> to vector<1xf32>
    %195 = vector.shape_cast %194 : vector<1xf32> to vector<1x1xf32>
    %cst_156 = arith.constant 1.000000e-24 : f32
    %196 = vector.broadcast %cst_156 : f32 to vector<1x1xf32>
    %197 = arith.maximumf %195, %196 : vector<1x1xf32>
    %198 = math.rsqrt %197 : vector<1x1xf32>
    %199 = vector.broadcast %198 : vector<1x1xf32> to vector<1x128xf32>
    %200 = arith.mulf %192, %199 : vector<1x128xf32>
    %c0_157 = arith.constant 0 : index
    %c0_158 = arith.constant 0 : index
    %201 = vector.load %arg14[%c0_157, %c0_158] : memref<2x128xf32, #tpu.memory_space<vmem>>, vector<1x128xf32>
    tpu.vector_store %arg14[%c0_157, %c0_158], %200 {strides = array<i32>} : memref<2x128xf32, #tpu.memory_space<vmem>>, vector<1x128xf32>,
    %202 = vector.extract_strided_slice %1 {offsets = [0, 384], sizes = [1, 384], strides = [1, 1]} : vector<1x768xf32> to vector<1x384xf32>
    %cst_159 = arith.constant 0.000000e+00 : f32
    %203 = vector.broadcast %cst_159 : f32 to vector<1x384xf32>
    %204 = arith.cmpf ogt, %202, %203 : vector<1x384xf32>
    %205 = vector.extract_strided_slice %147 {offsets = [0, 384], sizes = [1, 384], strides = [1, 1]} : vector<1x768xf32> to vector<1x384xf32>
    %cst_160 = arith.constant -1.000000e+30 : f32
    %206 = vector.broadcast %cst_160 : f32 to vector<1x384xf32>
    %207 = arith.select %204, %205, %206 : vector<1x384xi1>, vector<1x384xf32>
    %cst_161 = arith.constant dense<0xFF800000> : vector<1xf32>
    %208 = vector.multi_reduction <maximumf>, %207, %cst_161 [1] : vector<1x384xf32> to vector<1xf32>
    %209 = vector.shape_cast %208 : vector<1xf32> to vector<1x1xf32>
    %210 = vector.broadcast %209 : vector<1x1xf32> to vector<1x384xf32>
    %211 = arith.subf %207, %210 : vector<1x384xf32>
    %212 = math.exp %211 : vector<1x384xf32>
    %cst_162 = arith.constant dense<0.000000e+00> : vector<1xf32>
    %213 = vector.multi_reduction <add>, %212, %cst_162 [1] : vector<1x384xf32> to vector<1xf32>
    %214 = vector.shape_cast %213 : vector<1xf32> to vector<1x1xf32>
    %215 = tpu.reciprocal %214 {approx = true} : vector<1x1xf32> -> vector<1x1xf32>
    %216 = vector.broadcast %215 : vector<1x1xf32> to vector<1x384xf32>
    %217 = arith.mulf %212, %216 : vector<1x384xf32>
    %c0_163 = arith.constant 0 : index
    %c0_164 = arith.constant 0 : index
    %218 = vector.load %arg9[%c0_163, %c0_164] : memref<1x32xf32, #tpu.memory_space<vmem>>, vector<1x32xf32>
    %219 = vector.extract_strided_slice %0 {offsets = [0, 384], sizes = [1, 384], strides = [1, 1]} : vector<3x768xf32> to vector<1x384xf32>
    %220 = arith.mulf %217, %219 : vector<1x384xf32>
    %c0_165 = arith.constant 0 : index
    %c0_166 = arith.constant 0 : index
    %c0_167 = arith.constant 0 : index
    %221 = vector.load %arg8[%c0_165, %c0_166, %c0_167] : memref<3x384x32xf32, #tpu.memory_space<vmem>>, vector<1x384x32xf32>
    %222 = vector.shape_cast %221 : vector<1x384x32xf32> to vector<384x32xf32>
    %cst_168 = arith.constant dense<0.000000e+00> : vector<1x32xf32>
    %223 = tpu.matmul %220, %222, %cst_168 {dimension_numbers = #tpu.dot_dimension_numbers<[1], [0], [0], [1], [0, 0, 1, 1], [], []>} : vector<1x384xf32>, vector<384x32xf32>, vector<1x32xf32> -> vector<1x32xf32>
    %224 = arith.addf %218, %223 : vector<1x32xf32>
    %225 = vector.extract_strided_slice %0 {offsets = [1, 384], sizes = [1, 384], strides = [1, 1]} : vector<3x768xf32> to vector<1x384xf32>
    %226 = arith.mulf %217, %225 : vector<1x384xf32>
    %c1_169 = arith.constant 1 : index
    %c0_170 = arith.constant 0 : index
    %c0_171 = arith.constant 0 : index
    %227 = vector.load %arg8[%c1_169, %c0_170, %c0_171] : memref<3x384x32xf32, #tpu.memory_space<vmem>>, vector<1x384x32xf32>
    %228 = vector.shape_cast %227 : vector<1x384x32xf32> to vector<384x32xf32>
    %cst_172 = arith.constant dense<0.000000e+00> : vector<1x32xf32>
    %229 = tpu.matmul %226, %228, %cst_172 {dimension_numbers = #tpu.dot_dimension_numbers<[1], [0], [0], [1], [0, 0, 1, 1], [], []>} : vector<1x384xf32>, vector<384x32xf32>, vector<1x32xf32> -> vector<1x32xf32>
    %230 = arith.addf %224, %229 : vector<1x32xf32>
    %231 = vector.extract_strided_slice %0 {offsets = [2, 384], sizes = [1, 384], strides = [1, 1]} : vector<3x768xf32> to vector<1x384xf32>
    %232 = arith.mulf %217, %231 : vector<1x384xf32>
    %c2_173 = arith.constant 2 : index
    %c0_174 = arith.constant 0 : index
    %c0_175 = arith.constant 0 : index
    %233 = vector.load %arg8[%c2_173, %c0_174, %c0_175] : memref<3x384x32xf32, #tpu.memory_space<vmem>>, vector<1x384x32xf32>
    %234 = vector.shape_cast %233 : vector<1x384x32xf32> to vector<384x32xf32>
    %cst_176 = arith.constant dense<0.000000e+00> : vector<1x32xf32>
    %235 = tpu.matmul %232, %234, %cst_176 {dimension_numbers = #tpu.dot_dimension_numbers<[1], [0], [0], [1], [0, 0, 1, 1], [], []>} : vector<1x384xf32>, vector<384x32xf32>, vector<1x32xf32> -> vector<1x32xf32>
    %236 = arith.addf %230, %235 : vector<1x32xf32>
    %c0_177 = arith.constant 0 : index
    %c0_178 = arith.constant 0 : index
    %237 = vector.load %arg10[%c0_177, %c0_178] : memref<32x32xf32, #tpu.memory_space<vmem>>, vector<32x32xf32>
    %cst_179 = arith.constant dense<0.000000e+00> : vector<1x32xf32>
    %238 = tpu.matmul %236, %237, %cst_179 {dimension_numbers = #tpu.dot_dimension_numbers<[1], [0], [0], [1], [0, 0, 1, 1], [], []>} : vector<1x32xf32>, vector<32x32xf32>, vector<1x32xf32> -> vector<1x32xf32>
    %c0_180 = arith.constant 0 : index
    %c0_181 = arith.constant 0 : index
    %239 = vector.load %arg11[%c0_180, %c0_181] : memref<1x32xf32, #tpu.memory_space<vmem>>, vector<1x32xf32>
    %240 = arith.addf %238, %239 : vector<1x32xf32>
    %cst_182 = arith.constant 0.000000e+00 : f32
    %241 = vector.broadcast %cst_182 : f32 to vector<1x32xf32>
    %242 = arith.maximumf %240, %241 : vector<1x32xf32>
    %c0_183 = arith.constant 0 : index
    %c0_184 = arith.constant 0 : index
    %243 = vector.load %arg12[%c0_183, %c0_184] : memref<32x128xf32, #tpu.memory_space<vmem>>, vector<32x128xf32>
    %cst_185 = arith.constant dense<0.000000e+00> : vector<1x128xf32>
    %244 = tpu.matmul %242, %243, %cst_185 {dimension_numbers = #tpu.dot_dimension_numbers<[1], [0], [0], [1], [0, 0, 1, 1], [], []>} : vector<1x32xf32>, vector<32x128xf32>, vector<1x128xf32> -> vector<1x128xf32>
    %c0_186 = arith.constant 0 : index
    %c0_187 = arith.constant 0 : index
    %245 = vector.load %arg13[%c0_186, %c0_187] : memref<1x128xf32, #tpu.memory_space<vmem>>, vector<1x128xf32>
    %246 = arith.addf %244, %245 : vector<1x128xf32>
    %247 = arith.mulf %246, %246 : vector<1x128xf32>
    %cst_188 = arith.constant dense<0.000000e+00> : vector<1xf32>
    %248 = vector.multi_reduction <add>, %247, %cst_188 [1] : vector<1x128xf32> to vector<1xf32>
    %249 = vector.shape_cast %248 : vector<1xf32> to vector<1x1xf32>
    %cst_189 = arith.constant 1.000000e-24 : f32
    %250 = vector.broadcast %cst_189 : f32 to vector<1x1xf32>
    %251 = arith.maximumf %249, %250 : vector<1x1xf32>
    %252 = math.rsqrt %251 : vector<1x1xf32>
    %253 = vector.broadcast %252 : vector<1x1xf32> to vector<1x128xf32>
    %254 = arith.mulf %246, %253 : vector<1x128xf32>
    %c1_190 = arith.constant 1 : index
    %c0_191 = arith.constant 0 : index
    %255 = vector.load %arg14[%c1_190, %c0_191] : memref<2x128xf32, #tpu.memory_space<vmem>>, vector<1x128xf32>
    tpu.vector_store %arg14[%c1_190, %c0_191], %254 {strides = array<i32>} : memref<2x128xf32, #tpu.memory_space<vmem>>, vector<1x128xf32>,
    return
  }
}

</mosaic_0001>

<llo_original>
// kernel: contrastive_att_patch_forward.1
$region0: #{contrastive_att_patch_forward.1}
  #allocation0 [shape = 'u32[]', space=smem, size = 0x4, offset = 0x4, fixed_abs, tag = 'smem constant byte address 0x4 - core index']
  #allocation1 [shape = 'u32[72,128]{1,0:T(1,128)}', space=vmem, size = 0x9000, scoped, tag = 'internal scratch']
  #allocation2 [shape = 'f32[1,1]{1,0:T(1,128)S(1)}', space=vmem, size = 0x200, scoped, tag = 'scoped memory for contrastive_att_patch_forward.1']
  %s0 = inlined_call_operand.vmem [shape: f32[3,768], index: 0, kind: input, shape index: {}]
  %s1 = inlined_call_operand.vmem [shape: f32[1,768], index: 1, kind: input, shape index: {}]
  %s2 = inlined_call_operand.vmem [shape: f32[9,8,3], index: 2, kind: input, shape index: {}]
  %s3 = inlined_call_operand.vmem [shape: f32[8,1], index: 3, kind: input, shape index: {}]
  %s4 = inlined_call_operand.vmem [shape: f32[9,8,8], index: 4, kind: input, shape index: {}]
  %s5 = inlined_call_operand.vmem [shape: f32[8,1], index: 5, kind: input, shape index: {}]
  %s6 = inlined_call_operand.vmem [shape: f32[9,1,8], index: 6, kind: input, shape index: {}]
  %s7 = inlined_call_operand.<no memory space> [shape: f32[1,1], index: 7, kind: input, shape index: {}]
  %s8 = inlined_call_operand.vmem [shape: f32[3,384,32], index: 8, kind: input, shape index: {}]
  %s9 = inlined_call_operand.vmem [shape: f32[1,32], index: 9, kind: input, shape index: {}]
  %s10 = inlined_call_operand.vmem [shape: f32[32,32], index: 10, kind: input, shape index: {}]
  %s11 = inlined_call_operand.vmem [shape: f32[1,32], index: 11, kind: input, shape index: {}]
  %s12 = inlined_call_operand.vmem [shape: f32[32,128], index: 12, kind: input, shape index: {}]
  %s13 = inlined_call_operand.vmem [shape: f32[1,128], index: 13, kind: input, shape index: {}]
  %s14 = inlined_call_operand.hbm [shape: f32[2,128], index: 14, kind: output, shape index: {}]
  %s15 = sld [smem:[#allocation0]]
  $region66: #{contrastive_att_patch_forward.1} parent=0
    _
  %s17 = ssub.s32 1, %s15
  %s18 = scalar_select 0, %s17, %s15
  %v19 = vstv %s7
  %20 = vst [vmem:[#allocation2] sm:$0x1] %v19
  $region1: #{contrastive_att_patch_forward.1} parent=0
    #allocation3 [shape = 'u8[1024]{0}', space=vmem, size = 0x400, scoped, tag = 'output window, operand 0, single buffered']
    #allocation4 [shape = 's32[1]{0}', space=sflag, size = 0x4, scoped, tag = 'scoped memory for contrastive_att_patch_forward.1']
    %21 = vsyncpa [#allocation4], 0
    // Predicated region
    $region2: #{contrastive_att_patch_forward.1} parent=1 // pred_check
      _
    $region3: #{contrastive_att_patch_forward.1} parent=1 // pred_check_branch
      %23 = sbr.rel (0) target = $region5
    $region4: #{contrastive_att_patch_forward.1} parent=1 // pred_region
      _
    $region5: #{contrastive_att_patch_forward.1} parent=1 // pred_fallthru
      _
    // Predicated region
    $region6: #{contrastive_att_patch_forward.1} parent=1 // pred_check
      _
    $region7: #{contrastive_att_patch_forward.1} parent=1 // pred_check_branch
      %25 = sbr.rel (0) target = $region9
    $region8: #{contrastive_att_patch_forward.1} parent=1 // pred_region
      _
    $region9: #{contrastive_att_patch_forward.1} parent=1 // pred_fallthru
      _
    // Predicated region
    $region10: #{contrastive_att_patch_forward.1} parent=1 // pred_check
      _
    $region11: #{contrastive_att_patch_forward.1} parent=1 // pred_check_branch
      %27 = sbr.rel (0) target = $region13
    $region12: #{contrastive_att_patch_forward.1} parent=1 // pred_region
      _
    $region13: #{contrastive_att_patch_forward.1} parent=1 // pred_fallthru
      _
    // Predicated region
    $region14: #{contrastive_att_patch_forward.1} parent=1 // pred_check
      _
    $region15: #{contrastive_att_patch_forward.1} parent=1 // pred_check_branch
      %29 = sbr.rel (0) target = $region17
    $region16: #{contrastive_att_patch_forward.1} parent=1 // pred_region
      _
    $region17: #{contrastive_att_patch_forward.1} parent=1 // pred_fallthru
      _
    // Predicated region
    $region18: #{contrastive_att_patch_forward.1} parent=1 // pred_check
      _
    $region19: #{contrastive_att_patch_forward.1} parent=1 // pred_check_branch
      %31 = sbr.rel (0) target = $region21
    $region20: #{contrastive_att_patch_forward.1} parent=1 // pred_region
      _
    $region21: #{contrastive_att_patch_forward.1} parent=1 // pred_fallthru
      _
    // Predicated region
    $region22: #{contrastive_att_patch_forward.1} parent=1 // pred_check
      _
    $region23: #{contrastive_att_patch_forward.1} parent=1 // pred_check_branch
      %33 = sbr.rel (0) target = $region25
    $region24: #{contrastive_att_patch_forward.1} parent=1 // pred_region
      _
    $region25: #{contrastive_att_patch_forward.1} parent=1 // pred_fallthru
      _
    // Predicated region
    $region26: #{contrastive_att_patch_forward.1} parent=1 // pred_check
      _
    $region27: #{contrastive_att_patch_forward.1} parent=1 // pred_check_branch
      %35 = sbr.rel (0) target = $region29
    $region28: #{contrastive_att_patch_forward.1} parent=1 // pred_region
      _
    $region29: #{contrastive_att_patch_forward.1} parent=1 // pred_fallthru
      _
    // Predicated region
    $region30: #{contrastive_att_patch_forward.1} parent=1 // pred_check
      _
    $region31: #{contrastive_att_patch_forward.1} parent=1 // pred_check_branch
      %37 = sbr.rel (0) target = $region33
    $region32: #{contrastive_att_patch_forward.1} parent=1 // pred_region
      _
    $region33: #{contrastive_att_patch_forward.1} parent=1 // pred_fallthru
      _
    // Predicated region
    $region34: #{contrastive_att_patch_forward.1} parent=1 // pred_check
      _
    $region35: #{contrastive_att_patch_forward.1} parent=1 // pred_check_branch
      %39 = sbr.rel (0) target = $region37
    $region36: #{contrastive_att_patch_forward.1} parent=1 // pred_region
      _
    $region37: #{contrastive_att_patch_forward.1} parent=1 // pred_fallthru
      _
    // Predicated region
    $region38: #{contrastive_att_patch_forward.1} parent=1 // pred_check
      _
    $region39: #{contrastive_att_patch_forward.1} parent=1 // pred_check_branch
      %41 = sbr.rel (0) target = $region41
    $region40: #{contrastive_att_patch_forward.1} parent=1 // pred_region
      _
    $region41: #{contrastive_att_patch_forward.1} parent=1 // pred_fallthru
      _
    // Predicated region
    $region42: #{contrastive_att_patch_forward.1} parent=1 // pred_check
      _
    $region43: #{contrastive_att_patch_forward.1} parent=1 // pred_check_branch
      %43 = sbr.rel (0) target = $region45
    $region44: #{contrastive_att_patch_forward.1} parent=1 // pred_region
      _
    $region45: #{contrastive_att_patch_forward.1} parent=1 // pred_fallthru
      _
    // Predicated region
    $region46: #{contrastive_att_patch_forward.1} parent=1 // pred_check
      _
    $region47: #{contrastive_att_patch_forward.1} parent=1 // pred_check_branch
      %45 = sbr.rel (0) target = $region49
    $region48: #{contrastive_att_patch_forward.1} parent=1 // pred_region
      _
    $region49: #{contrastive_att_patch_forward.1} parent=1 // pred_fallthru
      _
    // Predicated region
    $region50: #{contrastive_att_patch_forward.1} parent=1 // pred_check
      _
    $region51: #{contrastive_att_patch_forward.1} parent=1 // pred_check_branch
      %47 = sbr.rel (0) target = $region53
    $region52: #{contrastive_att_patch_forward.1} parent=1 // pred_region
      _
    $region53: #{contrastive_att_patch_forward.1} parent=1 // pred_fallthru
      _
    // Predicated region
    $region54: #{contrastive_att_patch_forward.1} parent=1 // pred_check
      _
    $region55: #{contrastive_att_patch_forward.1} parent=1 // pred_check_branch
      %49 = sbr.rel (0) target = $region57
    $region56: #{contrastive_att_patch_forward.1} parent=1 // pred_region
      _
    $region57: #{contrastive_att_patch_forward.1} parent=1 // pred_fallthru
      _
    %v50 = vld [vmem:[%s0] sm:$0x77]
    %v51 = vld [vmem:[%s0 + $0x8] sm:$0x77]
    %v52 = vld [vmem:[%s0 + $0x10] sm:$0x77]
    %v53 = vld [vmem:[%s1] sm:$0x3f]
    %57 = vst [vmem:[#allocation1] ss:$2 sm:$0xff] %v50
    %s58 = scalar_lea.vmem [#allocation1], 16
    %59 = vst [vmem:[%s58] ss:$2 sm:$0xff] %v51
    %s60 = scalar_lea.vmem [#allocation1], 32
    %61 = vst [vmem:[%s60] ss:$2 sm:$0xff] %v52
    %v62 = vld.sshfl [vmem:[#allocation1] sm:$0xff pattern:$0x75316420]
    %v63 = vld.sshfl [vmem:[#allocation1 + $0x8] sm:$0xff pattern:$0x75316420]
    %v64 = vld.sshfl [vmem:[#allocation1 + $0x10] sm:$0xff pattern:$0x75316420]
    %v65 = vld.sshfl [vmem:[#allocation1 + $0x18] sm:$0xff pattern:$0x75316420]
    %v66 = vld.sshfl [vmem:[#allocation1 + $0x20] sm:$0xff pattern:$0x75316420]
    %v67 = vld.sshfl [vmem:[#allocation1 + $0x28] sm:$0xff pattern:$0x75316420]
    %74 = vrot.lane.b32.xlu0 %v62, 19
    %v75 = vpop.permute.xlu0 %74
    %76 = vrot.lane.b32.xlu0 %v63, 19
    %v77 = vpop.permute.xlu0 %76
    %78 = vrot.lane.b32.xlu0 %v64, 19
    %v79 = vpop.permute.xlu0 %78
    %80 = vrot.lane.b32.xlu0 %v65, 19
    %v81 = vpop.permute.xlu0 %80
    %82 = vrot.lane.b32.xlu0 %v66, 19
    %v83 = vpop.permute.xlu0 %82
    %84 = vrot.lane.b32.xlu0 %v67, 19
    %v85 = vpop.permute.xlu0 %84
    %v86 = vlaneseq
    %v87 = vand.u32 %v86, 127
    %vm88 = vcmp.lt.s32.totalorder %v87, 19
    %v89 = vsel %vm88, %v83, %v85
    %v90 = vsel %vm88, %v81, %v83
    %v91 = vsel %vm88, %v79, %v81
    %v92 = vsel %vm88, %v77, %v79
    %v93 = vsel %vm88, %v75, %v77
    %v94 = vsel %vm88, %v85, %v75
    %v95 = vld [vmem:[%s2] sm:$0xff]
    %96 = vst [vmem:[#allocation1] ss:$2 sm:$0xff] %v50
    %s97 = scalar_lea.vmem [#allocation1], 16
    %98 = vst [vmem:[%s97] ss:$2 sm:$0xff] %v51
    %s99 = scalar_lea.vmem [#allocation1], 32
    %100 = vst [vmem:[%s99] ss:$2 sm:$0xff] %v52
    %v101 = vld.sshfl [vmem:[#allocation1] sm:$0xff pattern:$0x75316420]
    %v102 = vld.sshfl [vmem:[#allocation1 + $0x8] sm:$0xff pattern:$0x75316420]
    %v103 = vld.sshfl [vmem:[#allocation1 + $0x10] sm:$0xff pattern:$0x75316420]
    %v104 = vld.sshfl [vmem:[#allocation1 + $0x18] sm:$0xff pattern:$0x75316420]
    %v105 = vld.sshfl [vmem:[#allocation1 + $0x20] sm:$0xff pattern:$0x75316420]
    %v106 = vld.sshfl [vmem:[#allocation1 + $0x28] sm:$0xff pattern:$0x75316420]
    %113 = vrot.lane.b32.xlu0 %v101, 18
    %v114 = vpop.permute.xlu0 %113
    %115 = vrot.lane.b32.xlu0 %v102, 18
    %v116 = vpop.permute.xlu0 %115
    %117 = vrot.lane.b32.xlu0 %v103, 18
    %v118 = vpop.permute.xlu0 %117
    %119 = vrot.lane.b32.xlu0 %v104, 18
    %v120 = vpop.permute.xlu0 %119
    %121 = vrot.lane.b32.xlu0 %v105, 18
    %v122 = vpop.permute.xlu0 %121
    %123 = vrot.lane.b32.xlu0 %v106, 18
    %v124 = vpop.permute.xlu0 %123
    %vm125 = vcmp.lt.s32.totalorder %v87, 18
    %v126 = vsel %vm125, %v122, %v124
    %v127 = vsel %vm125, %v120, %v122
    %v128 = vsel %vm125, %v118, %v120
    %v129 = vsel %vm125, %v116, %v118
    %v130 = vsel %vm125, %v114, %v116
    %v131 = vsel %vm125, %v124, %v114
    %s132 = scalar_lea.vmem %s2, 8
    %v133 = vld [vmem:[%s132] sm:$0xff]
    %vm134 = vcmask 23552
    %v136 = vsel %vm134, %v133, 0
    %vm138 = vcmask 1042432
    %v140 = vsel %vm138, %v131, 0
    %v143 = vsel %vm138, %v130, 0
    %v146 = vsel %vm138, %v129, 0
    %v149 = vsel %vm138, %v128, 0
    %v152 = vsel %vm138, %v127, 0
    %v155 = vsel %vm138, %v126, 0
    %157 = vmatpush.msra.mxu0 0.0
    %158 = vmatpush.msra.mxu0 0.0
    %159 = vmatpush.msra.mxu0 0.0
    %160 = vmatpush.msra.mxu0 0.0
    %161 = vmatpush.msra.mxu0 0.0
    %162 = vmatpush.msra.mxu0 0.0
    %163 = vmatpush.msra.mxu0 0.0
    %164 = vmatpush.msra.mxu0 0.0
    %165 = vmatpush.msra.mxu0 0.0
    %166 = vmatpush.msra.mxu0 0.0
    %167 = vmatpush.msra.mxu0 0.0
    %168 = vmatpush.msra.mxu0 0.0
    %169 = vmatpush.msra.mxu0 0.0
    %170 = vmatpush.msra.mxu0 0.0
    %171 = vmatpush.msra.mxu0 0.0
    %172 = vmatpush.msra.mxu0 %v140
    %173 = vmatmul.f32.gmra.mxu0 %v136
    %v174 = vpop.f32.mrf.mxu0
    %v175 = vadd.f32 0.0, %v174
    %176 = vdwg.mxu0
    %177 = vmatpush.msra.mxu0 0.0
    %178 = vmatpush.msra.mxu0 0.0
    %179 = vmatpush.msra.mxu0 0.0
    %180 = vmatpush.msra.mxu0 0.0
    %181 = vmatpush.msra.mxu0 0.0
    %182 = vmatpush.msra.mxu0 0.0
    %183 = vmatpush.msra.mxu0 0.0
    %184 = vmatpush.msra.mxu0 0.0
    %185 = vmatpush.msra.mxu0 0.0
    %186 = vmatpush.msra.mxu0 0.0
    %187 = vmatpush.msra.mxu0 0.0
    %188 = vmatpush.msra.mxu0 0.0
    %189 = vmatpush.msra.mxu0 0.0
    %190 = vmatpush.msra.mxu0 0.0
    %191 = vmatpush.msra.mxu0 0.0
    %192 = vmatpush.msra.mxu0 %v143
    %193 = vmatmul.f32.gmra.mxu0 %v136
    %v194 = vpop.f32.mrf.mxu0
    %v195 = vadd.f32 0.0, %v194
    %196 = vdwg.mxu0
    %197 = vmatpush.msra.mxu0 0.0
    %198 = vmatpush.msra.mxu0 0.0
    %199 = vmatpush.msra.mxu0 0.0
    %200 = vmatpush.msra.mxu0 0.0
    %201 = vmatpush.msra.mxu0 0.0
    %202 = vmatpush.msra.mxu0 0.0
    %203 = vmatpush.msra.mxu0 0.0
    %204 = vmatpush.msra.mxu0 0.0
    %205 = vmatpush.msra.mxu0 0.0
    %206 = vmatpush.msra.mxu0 0.0
    %207 = vmatpush.msra.mxu0 0.0
    %208 = vmatpush.msra.mxu0 0.0
    %209 = vmatpush.msra.mxu0 0.0
    %210 = vmatpush.msra.mxu0 0.0
    %211 = vmatpush.msra.mxu0 0.0
    %212 = vmatpush.msra.mxu0 %v146
    %213 = vmatmul.f32.gmra.mxu0 %v136
    %v214 = vpop.f32.mrf.mxu0
    %v215 = vadd.f32 0.0, %v214
    %216 = vdwg.mxu0
    %217 = vmatpush.msra.mxu0 0.0
    %218 = vmatpush.msra.mxu0 0.0
    %219 = vmatpush.msra.mxu0 0.0
    %220 = vmatpush.msra.mxu0 0.0
    %221 = vmatpush.msra.mxu0 0.0
    %222 = vmatpush.msra.mxu0 0.0
    %223 = vmatpush.msra.mxu0 0.0
    %224 = vmatpush.msra.mxu0 0.0
    %225 = vmatpush.msra.mxu0 0.0
    %226 = vmatpush.msra.mxu0 0.0
    %227 = vmatpush.msra.mxu0 0.0
    %228 = vmatpush.msra.mxu0 0.0
    %229 = vmatpush.msra.mxu0 0.0
    %230 = vmatpush.msra.mxu0 0.0
    %231 = vmatpush.msra.mxu0 0.0
    %232 = vmatpush.msra.mxu0 %v149
    %233 = vmatmul.f32.gmra.mxu0 %v136
    %v234 = vpop.f32.mrf.mxu0
    %v235 = vadd.f32 0.0, %v234
    %236 = vdwg.mxu0
    %237 = vmatpush.msra.mxu0 0.0
    %238 = vmatpush.msra.mxu0 0.0
    %239 = vmatpush.msra.mxu0 0.0
    %240 = vmatpush.msra.mxu0 0.0
    %241 = vmatpush.msra.mxu0 0.0
    %242 = vmatpush.msra.mxu0 0.0
    %243 = vmatpush.msra.mxu0 0.0
    %244 = vmatpush.msra.mxu0 0.0
    %245 = vmatpush.msra.mxu0 0.0
    %246 = vmatpush.msra.mxu0 0.0
    %247 = vmatpush.msra.mxu0 0.0
    %248 = vmatpush.msra.mxu0 0.0
    %249 = vmatpush.msra.mxu0 0.0
    %250 = vmatpush.msra.mxu0 0.0
    %251 = vmatpush.msra.mxu0 0.0
    %252 = vmatpush.msra.mxu0 %v152
    %253 = vmatmul.f32.gmra.mxu0 %v136
    %v254 = vpop.f32.mrf.mxu0
    %v255 = vadd.f32 0.0, %v254
    %256 = vdwg.mxu0
    %257 = vmatpush.msra.mxu0 0.0
    %258 = vmatpush.msra.mxu0 0.0
    %259 = vmatpush.msra.mxu0 0.0
    %260 = vmatpush.msra.mxu0 0.0
    %261 = vmatpush.msra.mxu0 0.0
    %262 = vmatpush.msra.mxu0 0.0
    %263 = vmatpush.msra.mxu0 0.0
    %264 = vmatpush.msra.mxu0 0.0
    %265 = vmatpush.msra.mxu0 0.0
    %266 = vmatpush.msra.mxu0 0.0
    %267 = vmatpush.msra.mxu0 0.0
    %268 = vmatpush.msra.mxu0 0.0
    %269 = vmatpush.msra.mxu0 0.0
    %270 = vmatpush.msra.mxu0 0.0
    %271 = vmatpush.msra.mxu0 0.0
    %272 = vmatpush.msra.mxu0 %v155
    %273 = vmatmul.f32.gmra.mxu0 %v136
    %v274 = vpop.f32.mrf.mxu0
    %v275 = vadd.f32 0.0, %v274
    %276 = vdwg.mxu0
    %v278 = vsel %vm134, %v95, 0
    %v281 = vsel %vm138, %v94, 0
    %v284 = vsel %vm138, %v93, 0
    %v287 = vsel %vm138, %v92, 0
    %v290 = vsel %vm138, %v91, 0
    %v293 = vsel %vm138, %v90, 0
    %v296 = vsel %vm138, %v89, 0
    %298 = vmatpush.msra.mxu0 0.0
    %299 = vmatpush.msra.mxu0 0.0
    %300 = vmatpush.msra.mxu0 0.0
    %301 = vmatpush.msra.mxu0 0.0
    %302 = vmatpush.msra.mxu0 0.0
    %303 = vmatpush.msra.mxu0 0.0
    %304 = vmatpush.msra.mxu0 0.0
    %305 = vmatpush.msra.mxu0 0.0
    %306 = vmatpush.msra.mxu0 0.0
    %307 = vmatpush.msra.mxu0 0.0
    %308 = vmatpush.msra.mxu0 0.0
    %309 = vmatpush.msra.mxu0 0.0
    %310 = vmatpush.msra.mxu0 0.0
    %311 = vmatpush.msra.mxu0 0.0
    %312 = vmatpush.msra.mxu0 0.0
    %313 = vmatpush.msra.mxu0 %v281
    %314 = vmatmul.f32.gmra.mxu0 %v278
    %v315 = vpop.f32.mrf.mxu0
    %v316 = vadd.f32 %v175, %v315
    %317 = vdwg.mxu0
    %318 = vmatpush.msra.mxu0 0.0
    %319 = vmatpush.msra.mxu0 0.0
    %320 = vmatpush.msra.mxu0 0.0
    %321 = vmatpush.msra.mxu0 0.0
    %322 = vmatpush.msra.mxu0 0.0
    %323 = vmatpush.msra.mxu0 0.0
    %324 = vmatpush.msra.mxu0 0.0
    %325 = vmatpush.msra.mxu0 0.0
    %326 = vmatpush.msra.mxu0 0.0
    %327 = vmatpush.msra.mxu0 0.0
    %328 = vmatpush.msra.mxu0 0.0
    %329 = vmatpush.msra.mxu0 0.0
    %330 = vmatpush.msra.mxu0 0.0
    %331 = vmatpush.msra.mxu0 0.0
    %332 = vmatpush.msra.mxu0 0.0
    %333 = vmatpush.msra.mxu0 %v284
    %334 = vmatmul.f32.gmra.mxu0 %v278
    %v335 = vpop.f32.mrf.mxu0
    %v336 = vadd.f32 %v195, %v335
    %337 = vdwg.mxu0
    %338 = vmatpush.msra.mxu0 0.0
    %339 = vmatpush.msra.mxu0 0.0
    %340 = vmatpush.msra.mxu0 0.0
    %341 = vmatpush.msra.mxu0 0.0
    %342 = vmatpush.msra.mxu0 0.0
    %343 = vmatpush.msra.mxu0 0.0
    %344 = vmatpush.msra.mxu0 0.0
    %345 = vmatpush.msra.mxu0 0.0
    %346 = vmatpush.msra.mxu0 0.0
    %347 = vmatpush.msra.mxu0 0.0
    %348 = vmatpush.msra.mxu0 0.0
    %349 = vmatpush.msra.mxu0 0.0
    %350 = vmatpush.msra.mxu0 0.0
    %351 = vmatpush.msra.mxu0 0.0
    %352 = vmatpush.msra.mxu0 0.0
    %353 = vmatpush.msra.mxu0 %v287
    %354 = vmatmul.f32.gmra.mxu0 %v278
    %v355 = vpop.f32.mrf.mxu0
    %v356 = vadd.f32 %v215, %v355
    %357 = vdwg.mxu0
    %358 = vmatpush.msra.mxu0 0.0
    %359 = vmatpush.msra.mxu0 0.0
    %360 = vmatpush.msra.mxu0 0.0
    %361 = vmatpush.msra.mxu0 0.0
    %362 = vmatpush.msra.mxu0 0.0
    %363 = vmatpush.msra.mxu0 0.0
    %364 = vmatpush.msra.mxu0 0.0
    %365 = vmatpush.msra.mxu0 0.0
    %366 = vmatpush.msra.mxu0 0.0
    %367 = vmatpush.msra.mxu0 0.0
    %368 = vmatpush.msra.mxu0 0.0
    %369 = vmatpush.msra.mxu0 0.0
    %370 = vmatpush.msra.mxu0 0.0
    %371 = vmatpush.msra.mxu0 0.0
    %372 = vmatpush.msra.mxu0 0.0
    %373 = vmatpush.msra.mxu0 %v290
    %374 = vmatmul.f32.gmra.mxu0 %v278
    %v375 = vpop.f32.mrf.mxu0
    %v376 = vadd.f32 %v235, %v375
    %377 = vdwg.mxu0
    %378 = vmatpush.msra.mxu0 0.0
    %379 = vmatpush.msra.mxu0 0.0
    %380 = vmatpush.msra.mxu0 0.0
    %381 = vmatpush.msra.mxu0 0.0
    %382 = vmatpush.msra.mxu0 0.0
    %383 = vmatpush.msra.mxu0 0.0
    %384 = vmatpush.msra.mxu0 0.0
    %385 = vmatpush.msra.mxu0 0.0
    %386 = vmatpush.msra.mxu0 0.0
    %387 = vmatpush.msra.mxu0 0.0
    %388 = vmatpush.msra.mxu0 0.0
    %389 = vmatpush.msra.mxu0 0.0
    %390 = vmatpush.msra.mxu0 0.0
    %391 = vmatpush.msra.mxu0 0.0
    %392 = vmatpush.msra.mxu0 0.0
    %393 = vmatpush.msra.mxu0 %v293
    %394 = vmatmul.f32.gmra.mxu0 %v278
    %v395 = vpop.f32.mrf.mxu0
    %v396 = vadd.f32 %v255, %v395
    %397 = vdwg.mxu0
    %398 = vmatpush.msra.mxu0 0.0
    %399 = vmatpush.msra.mxu0 0.0
    %400 = vmatpush.msra.mxu0 0.0
    %401 = vmatpush.msra.mxu0 0.0
    %402 = vmatpush.msra.mxu0 0.0
    %403 = vmatpush.msra.mxu0 0.0
    %404 = vmatpush.msra.mxu0 0.0
    %405 = vmatpush.msra.mxu0 0.0
    %406 = vmatpush.msra.mxu0 0.0
    %407 = vmatpush.msra.mxu0 0.0
    %408 = vmatpush.msra.mxu0 0.0
    %409 = vmatpush.msra.mxu0 0.0
    %410 = vmatpush.msra.mxu0 0.0
    %411 = vmatpush.msra.mxu0 0.0
    %412 = vmatpush.msra.mxu0 0.0
    %413 = vmatpush.msra.mxu0 %v296
    %414 = vmatmul.f32.gmra.mxu0 %v278
    %v415 = vpop.f32.mrf.mxu0
    %v416 = vadd.f32 %v275, %v415
    %417 = vdwg.mxu0
    %418 = vst [vmem:[#allocation1] ss:$2 sm:$0xff] %v50
    %s419 = scalar_lea.vmem [#allocation1], 16
    %420 = vst [vmem:[%s419] ss:$2 sm:$0xff] %v51
    %s421 = scalar_lea.vmem [#allocation1], 32
    %422 = vst [vmem:[%s421] ss:$2 sm:$0xff] %v52
    %v423 = vld.sshfl [vmem:[#allocation1] sm:$0xff pattern:$0x75316420]
    %v424 = vld.sshfl [vmem:[#allocation1 + $0x8] sm:$0xff pattern:$0x75316420]
    %v425 = vld.sshfl [vmem:[#allocation1 + $0x10] sm:$0xff pattern:$0x75316420]
    %v426 = vld.sshfl [vmem:[#allocation1 + $0x18] sm:$0xff pattern:$0x75316420]
    %v427 = vld.sshfl [vmem:[#allocation1 + $0x20] sm:$0xff pattern:$0x75316420]
    %v428 = vld.sshfl [vmem:[#allocation1 + $0x28] sm:$0xff pattern:$0x75316420]
    %435 = vrot.lane.b32.xlu0 %v423, 17
    %v436 = vpop.permute.xlu0 %435
    %437 = vrot.lane.b32.xlu0 %v424, 17
    %v438 = vpop.permute.xlu0 %437
    %439 = vrot.lane.b32.xlu0 %v425, 17
    %v440 = vpop.permute.xlu0 %439
    %441 = vrot.lane.b32.xlu0 %v426, 17
    %v442 = vpop.permute.xlu0 %441
    %443 = vrot.lane.b32.xlu0 %v427, 17
    %v444 = vpop.permute.xlu0 %443
    %445 = vrot.lane.b32.xlu0 %v428, 17
    %v446 = vpop.permute.xlu0 %445
    %vm447 = vcmp.lt.s32.totalorder %v87, 17
    %v448 = vsel %vm447, %v444, %v446
    %v449 = vsel %vm447, %v442, %v444
    %v450 = vsel %vm447, %v440, %v442
    %v451 = vsel %vm447, %v438, %v440
    %v452 = vsel %vm447, %v436, %v438
    %v453 = vsel %vm447, %v446, %v436
    %s454 = scalar_lea.vmem %s2, 16
    %v455 = vld [vmem:[%s454] sm:$0xff]
    %v457 = vsel %vm134, %v455, 0
    %v460 = vsel %vm138, %v453, 0
    %v463 = vsel %vm138, %v452, 0
    %v466 = vsel %vm138, %v451, 0
    %v469 = vsel %vm138, %v450, 0
    %v472 = vsel %vm138, %v449, 0
    %v475 = vsel %vm138, %v448, 0
    %477 = vmatpush.msra.mxu0 0.0
    %478 = vmatpush.msra.mxu0 0.0
    %479 = vmatpush.msra.mxu0 0.0
    %480 = vmatpush.msra.mxu0 0.0
    %481 = vmatpush.msra.mxu0 0.0
    %482 = vmatpush.msra.mxu0 0.0
    %483 = vmatpush.msra.mxu0 0.0
    %484 = vmatpush.msra.mxu0 0.0
    %485 = vmatpush.msra.mxu0 0.0
    %486 = vmatpush.msra.mxu0 0.0
    %487 = vmatpush.msra.mxu0 0.0
    %488 = vmatpush.msra.mxu0 0.0
    %489 = vmatpush.msra.mxu0 0.0
    %490 = vmatpush.msra.mxu0 0.0
    %491 = vmatpush.msra.mxu0 0.0
    %492 = vmatpush.msra.mxu0 %v460
    %493 = vmatmul.f32.gmra.mxu0 %v457
    %v494 = vpop.f32.mrf.mxu0
    %v495 = vadd.f32 0.0, %v494
    %496 = vdwg.mxu0
    %497 = vmatpush.msra.mxu0 0.0
    %498 = vmatpush.msra.mxu0 0.0
    %499 = vmatpush.msra.mxu0 0.0
    %500 = vmatpush.msra.mxu0 0.0
    %501 = vmatpush.msra.mxu0 0.0
    %502 = vmatpush.msra.mxu0 0.0
    %503 = vmatpush.msra.mxu0 0.0
    %504 = vmatpush.msra.mxu0 0.0
    %505 = vmatpush.msra.mxu0 0.0
    %506 = vmatpush.msra.mxu0 0.0
    %507 = vmatpush.msra.mxu0 0.0
    %508 = vmatpush.msra.mxu0 0.0
    %509 = vmatpush.msra.mxu0 0.0
    %510 = vmatpush.msra.mxu0 0.0
    %511 = vmatpush.msra.mxu0 0.0
    %512 = vmatpush.msra.mxu0 %v463
    %513 = vmatmul.f32.gmra.mxu0 %v457
    %v514 = vpop.f32.mrf.mxu0
    %v515 = vadd.f32 0.0, %v514
    %516 = vdwg.mxu0
    %517 = vmatpush.msra.mxu0 0.0
    %518 = vmatpush.msra.mxu0 0.0
    %519 = vmatpush.msra.mxu0 0.0
    %520 = vmatpush.msra.mxu0 0.0
    %521 = vmatpush.msra.mxu0 0.0
    %522 = vmatpush.msra.mxu0 0.0
    %523 = vmatpush.msra.mxu0 0.0
    %524 = vmatpush.msra.mxu0 0.0
    %525 = vmatpush.msra.mxu0 0.0
    %526 = vmatpush.msra.mxu0 0.0
    %527 = vmatpush.msra.mxu0 0.0
    %528 = vmatpush.msra.mxu0 0.0
    %529 = vmatpush.msra.mxu0 0.0
    %530 = vmatpush.msra.mxu0 0.0
    %531 = vmatpush.msra.mxu0 0.0
    %532 = vmatpush.msra.mxu0 %v466
    %533 = vmatmul.f32.gmra.mxu0 %v457
    %v534 = vpop.f32.mrf.mxu0
    %v535 = vadd.f32 0.0, %v534
    %536 = vdwg.mxu0
    %537 = vmatpush.msra.mxu0 0.0
    %538 = vmatpush.msra.mxu0 0.0
    %539 = vmatpush.msra.mxu0 0.0
    %540 = vmatpush.msra.mxu0 0.0
    %541 = vmatpush.msra.mxu0 0.0
    %542 = vmatpush.msra.mxu0 0.0
    %543 = vmatpush.msra.mxu0 0.0
    %544 = vmatpush.msra.mxu0 0.0
    %545 = vmatpush.msra.mxu0 0.0
    %546 = vmatpush.msra.mxu0 0.0
    %547 = vmatpush.msra.mxu0 0.0
    %548 = vmatpush.msra.mxu0 0.0
    %549 = vmatpush.msra.mxu0 0.0
    %550 = vmatpush.msra.mxu0 0.0
    %551 = vmatpush.msra.mxu0 0.0
    %552 = vmatpush.msra.mxu0 %v469
    %553 = vmatmul.f32.gmra.mxu0 %v457
    %v554 = vpop.f32.mrf.mxu0
    %v555 = vadd.f32 0.0, %v554
    %556 = vdwg.mxu0
    %557 = vmatpush.msra.mxu0 0.0
    %558 = vmatpush.msra.mxu0 0.0
    %559 = vmatpush.msra.mxu0 0.0
    %560 = vmatpush.msra.mxu0 0.0
    %561 = vmatpush.msra.mxu0 0.0
    %562 = vmatpush.msra.mxu0 0.0
    %563 = vmatpush.msra.mxu0 0.0
    %564 = vmatpush.msra.mxu0 0.0
    %565 = vmatpush.msra.mxu0 0.0
    %566 = vmatpush.msra.mxu0 0.0
    %567 = vmatpush.msra.mxu0 0.0
    %568 = vmatpush.msra.mxu0 0.0
    %569 = vmatpush.msra.mxu0 0.0
    %570 = vmatpush.msra.mxu0 0.0
    %571 = vmatpush.msra.mxu0 0.0
    %572 = vmatpush.msra.mxu0 %v472
    %573 = vmatmul.f32.gmra.mxu0 %v457
    %v574 = vpop.f32.mrf.mxu0
    %v575 = vadd.f32 0.0, %v574
    %576 = vdwg.mxu0
    %577 = vmatpush.msra.mxu0 0.0
    %578 = vmatpush.msra.mxu0 0.0
    %579 = vmatpush.msra.mxu0 0.0
    %580 = vmatpush.msra.mxu0 0.0
    %581 = vmatpush.msra.mxu0 0.0
    %582 = vmatpush.msra.mxu0 0.0
    %583 = vmatpush.msra.mxu0 0.0
    %584 = vmatpush.msra.mxu0 0.0
    %585 = vmatpush.msra.mxu0 0.0
    %586 = vmatpush.msra.mxu0 0.0
    %587 = vmatpush.msra.mxu0 0.0
    %588 = vmatpush.msra.mxu0 0.0
    %589 = vmatpush.msra.mxu0 0.0
    %590 = vmatpush.msra.mxu0 0.0
    %591 = vmatpush.msra.mxu0 0.0
    %592 = vmatpush.msra.mxu0 %v475
    %593 = vmatmul.f32.gmra.mxu0 %v457
    %v594 = vpop.f32.mrf.mxu0
    %v595 = vadd.f32 0.0, %v594
    %596 = vdwg.mxu0
    %v597 = vadd.f32 %v316, %v495
    %v598 = vadd.f32 %v336, %v515
    %v599 = vadd.f32 %v356, %v535
    %v600 = vadd.f32 %v376, %v555
    %v601 = vadd.f32 %v396, %v575
    %v602 = vadd.f32 %v416, %v595
    %603 = vst [vmem:[#allocation1] ss:$2 sm:$0xff] %v50
    %s604 = scalar_lea.vmem [#allocation1], 16
    %605 = vst [vmem:[%s604] ss:$2 sm:$0xff] %v51
    %s606 = scalar_lea.vmem [#allocation1], 32
    %607 = vst [vmem:[%s606] ss:$2 sm:$0xff] %v52
    %v608 = vld.sshfl [vmem:[#allocation1] sm:$0xff pattern:$0x75316420]
    %v609 = vld.sshfl [vmem:[#allocation1 + $0x8] sm:$0xff pattern:$0x75316420]
    %v610 = vld.sshfl [vmem:[#allocation1 + $0x10] sm:$0xff pattern:$0x75316420]
    %v611 = vld.sshfl [vmem:[#allocation1 + $0x18] sm:$0xff pattern:$0x75316420]
    %v612 = vld.sshfl [vmem:[#allocation1 + $0x20] sm:$0xff pattern:$0x75316420]
    %v613 = vld.sshfl [vmem:[#allocation1 + $0x28] sm:$0xff pattern:$0x75316420]
    %620 = vrot.lane.b32.xlu0 %v608, 1
    %v621 = vpop.permute.xlu0 %620
    %622 = vrot.lane.b32.xlu0 %v609, 1
    %v623 = vpop.permute.xlu0 %622
    %624 = vrot.lane.b32.xlu0 %v610, 1
    %v625 = vpop.permute.xlu0 %624
    %626 = vrot.lane.b32.xlu0 %v611, 1
    %v627 = vpop.permute.xlu0 %626
    %628 = vrot.lane.b32.xlu0 %v612, 1
    %v629 = vpop.permute.xlu0 %628
    %630 = vrot.lane.b32.xlu0 %v613, 1
    %v631 = vpop.permute.xlu0 %630
    %vm632 = vcmp.lt.s32.totalorder %v87, 1
    %v633 = vsel %vm632, %v629, %v631
    %v634 = vsel %vm632, %v627, %v629
    %v635 = vsel %vm632, %v625, %v627
    %v636 = vsel %vm632, %v623, %v625
    %v637 = vsel %vm632, %v621, %v623
    %v638 = vsel %vm632, %v631, %v621
    %s639 = scalar_lea.vmem %s2, 24
    %v640 = vld [vmem:[%s639] sm:$0xff]
    %v642 = vsel %vm134, %v640, 0
    %v645 = vsel %vm138, %v638, 0
    %v648 = vsel %vm138, %v637, 0
    %v651 = vsel %vm138, %v636, 0
    %v654 = vsel %vm138, %v635, 0
    %v657 = vsel %vm138, %v634, 0
    %v660 = vsel %vm138, %v633, 0
    %662 = vmatpush.msra.mxu0 0.0
    %663 = vmatpush.msra.mxu0 0.0
    %664 = vmatpush.msra.mxu0 0.0
    %665 = vmatpush.msra.mxu0 0.0
    %666 = vmatpush.msra.mxu0 0.0
    %667 = vmatpush.msra.mxu0 0.0
    %668 = vmatpush.msra.mxu0 0.0
    %669 = vmatpush.msra.mxu0 0.0
    %670 = vmatpush.msra.mxu0 0.0
    %671 = vmatpush.msra.mxu0 0.0
    %672 = vmatpush.msra.mxu0 0.0
    %673 = vmatpush.msra.mxu0 0.0
    %674 = vmatpush.msra.mxu0 0.0
    %675 = vmatpush.msra.mxu0 0.0
    %676 = vmatpush.msra.mxu0 0.0
    %677 = vmatpush.msra.mxu0 %v645
    %678 = vmatmul.f32.gmra.mxu0 %v642
    %v679 = vpop.f32.mrf.mxu0
    %v680 = vadd.f32 0.0, %v679
    %681 = vdwg.mxu0
    %682 = vmatpush.msra.mxu0 0.0
    %683 = vmatpush.msra.mxu0 0.0
    %684 = vmatpush.msra.mxu0 0.0
    %685 = vmatpush.msra.mxu0 0.0
    %686 = vmatpush.msra.mxu0 0.0
    %687 = vmatpush.msra.mxu0 0.0
    %688 = vmatpush.msra.mxu0 0.0
    %689 = vmatpush.msra.mxu0 0.0
    %690 = vmatpush.msra.mxu0 0.0
    %691 = vmatpush.msra.mxu0 0.0
    %692 = vmatpush.msra.mxu0 0.0
    %693 = vmatpush.msra.mxu0 0.0
    %694 = vmatpush.msra.mxu0 0.0
    %695 = vmatpush.msra.mxu0 0.0
    %696 = vmatpush.msra.mxu0 0.0
    %697 = vmatpush.msra.mxu0 %v648
    %698 = vmatmul.f32.gmra.mxu0 %v642
    %v699 = vpop.f32.mrf.mxu0
    %v700 = vadd.f32 0.0, %v699
    %701 = vdwg.mxu0
    %702 = vmatpush.msra.mxu0 0.0
    %703 = vmatpush.msra.mxu0 0.0
    %704 = vmatpush.msra.mxu0 0.0
    %705 = vmatpush.msra.mxu0 0.0
    %706 = vmatpush.msra.mxu0 0.0
    %707 = vmatpush.msra.mxu0 0.0
    %708 = vmatpush.msra.mxu0 0.0
    %709 = vmatpush.msra.mxu0 0.0
    %710 = vmatpush.msra.mxu0 0.0
    %711 = vmatpush.msra.mxu0 0.0
    %712 = vmatpush.msra.mxu0 0.0
    %713 = vmatpush.msra.mxu0 0.0
    %714 = vmatpush.msra.mxu0 0.0
    %715 = vmatpush.msra.mxu0 0.0
    %716 = vmatpush.msra.mxu0 0.0
    %717 = vmatpush.msra.mxu0 %v651
    %718 = vmatmul.f32.gmra.mxu0 %v642
    %v719 = vpop.f32.mrf.mxu0
    %v720 = vadd.f32 0.0, %v719
    %721 = vdwg.mxu0
    %722 = vmatpush.msra.mxu0 0.0
    %723 = vmatpush.msra.mxu0 0.0
    %724 = vmatpush.msra.mxu0 0.0
    %725 = vmatpush.msra.mxu0 0.0
    %726 = vmatpush.msra.mxu0 0.0
    %727 = vmatpush.msra.mxu0 0.0
    %728 = vmatpush.msra.mxu0 0.0
    %729 = vmatpush.msra.mxu0 0.0
    %730 = vmatpush.msra.mxu0 0.0
    %731 = vmatpush.msra.mxu0 0.0
    %732 = vmatpush.msra.mxu0 0.0
    %733 = vmatpush.msra.mxu0 0.0
    %734 = vmatpush.msra.mxu0 0.0
    %735 = vmatpush.msra.mxu0 0.0
    %736 = vmatpush.msra.mxu0 0.0
    %737 = vmatpush.msra.mxu0 %v654
    %738 = vmatmul.f32.gmra.mxu0 %v642
    %v739 = vpop.f32.mrf.mxu0
    %v740 = vadd.f32 0.0, %v739
    %741 = vdwg.mxu0
    %742 = vmatpush.msra.mxu0 0.0
    %743 = vmatpush.msra.mxu0 0.0
    %744 = vmatpush.msra.mxu0 0.0
    %745 = vmatpush.msra.mxu0 0.0
    %746 = vmatpush.msra.mxu0 0.0
    %747 = vmatpush.msra.mxu0 0.0
    %748 = vmatpush.msra.mxu0 0.0
    %749 = vmatpush.msra.mxu0 0.0
    %750 = vmatpush.msra.mxu0 0.0
    %751 = vmatpush.msra.mxu0 0.0
    %752 = vmatpush.msra.mxu0 0.0
    %753 = vmatpush.msra.mxu0 0.0
    %754 = vmatpush.msra.mxu0 0.0
    %755 = vmatpush.msra.mxu0 0.0
    %756 = vmatpush.msra.mxu0 0.0
    %757 = vmatpush.msra.mxu0 %v657
    %758 = vmatmul.f32.gmra.mxu0 %v642
    %v759 = vpop.f32.mrf.mxu0
    %v760 = vadd.f32 0.0, %v759
    %761 = vdwg.mxu0
    %762 = vmatpush.msra.mxu0 0.0
    %763 = vmatpush.msra.mxu0 0.0
    %764 = vmatpush.msra.mxu0 0.0
    %765 = vmatpush.msra.mxu0 0.0
    %766 = vmatpush.msra.mxu0 0.0
    %767 = vmatpush.msra.mxu0 0.0
    %768 = vmatpush.msra.mxu0 0.0
    %769 = vmatpush.msra.mxu0 0.0
    %770 = vmatpush.msra.mxu0 0.0
    %771 = vmatpush.msra.mxu0 0.0
    %772 = vmatpush.msra.mxu0 0.0
    %773 = vmatpush.msra.mxu0 0.0
    %774 = vmatpush.msra.mxu0 0.0
    %775 = vmatpush.msra.mxu0 0.0
    %776 = vmatpush.msra.mxu0 0.0
    %777 = vmatpush.msra.mxu0 %v660
    %778 = vmatmul.f32.gmra.mxu0 %v642
    %v779 = vpop.f32.mrf.mxu0
    %v780 = vadd.f32 0.0, %v779
    %781 = vdwg.mxu0
    %v782 = vadd.f32 %v597, %v680
    %v783 = vadd.f32 %v598, %v700
    %v784 = vadd.f32 %v599, %v720
    %v785 = vadd.f32 %v600, %v740
    %v786 = vadd.f32 %v601, %v760
    %v787 = vadd.f32 %v602, %v780
    %s788 = scalar_lea.vmem %s2, 32
    %v789 = vld [vmem:[%s788] sm:$0xff]
    %790 = vst [vmem:[#allocation1] ss:$2 sm:$0xff] %v50
    %s791 = scalar_lea.vmem [#allocation1], 16
    %792 = vst [vmem:[%s791] ss:$2 sm:$0xff] %v51
    %s793 = scalar_lea.vmem [#allocation1], 32
    %794 = vst [vmem:[%s793] ss:$2 sm:$0xff] %v52
    %v795 = vld.sshfl [vmem:[#allocation1] sm:$0xff pattern:$0x75316420]
    %v796 = vld.sshfl [vmem:[#allocation1 + $0x8] sm:$0xff pattern:$0x75316420]
    %v797 = vld.sshfl [vmem:[#allocation1 + $0x10] sm:$0xff pattern:$0x75316420]
    %v798 = vld.sshfl [vmem:[#allocation1 + $0x18] sm:$0xff pattern:$0x75316420]
    %v799 = vld.sshfl [vmem:[#allocation1 + $0x20] sm:$0xff pattern:$0x75316420]
    %v800 = vld.sshfl [vmem:[#allocation1 + $0x28] sm:$0xff pattern:$0x75316420]
    %v802 = vsel %vm134, %v789, 0
    %v804 = vsel %vm138, %v795, 0
    %v806 = vsel %vm138, %v796, 0
    %v808 = vsel %vm138, %v797, 0
    %v810 = vsel %vm138, %v798, 0
    %v812 = vsel %vm138, %v799, 0
    %v814 = vsel %vm138, %v800, 0
    %816 = vmatpush.msra.mxu0 0.0
    %817 = vmatpush.msra.mxu0 0.0
    %818 = vmatpush.msra.mxu0 0.0
    %819 = vmatpush.msra.mxu0 0.0
    %820 = vmatpush.msra.mxu0 0.0
    %821 = vmatpush.msra.mxu0 0.0
    %822 = vmatpush.msra.mxu0 0.0
    %823 = vmatpush.msra.mxu0 0.0
    %824 = vmatpush.msra.mxu0 0.0
    %825 = vmatpush.msra.mxu0 0.0
    %826 = vmatpush.msra.mxu0 0.0
    %827 = vmatpush.msra.mxu0 0.0
    %828 = vmatpush.msra.mxu0 0.0
    %829 = vmatpush.msra.mxu0 0.0
    %830 = vmatpush.msra.mxu0 0.0
    %831 = vmatpush.msra.mxu0 %v804
    %832 = vmatmul.f32.gmra.mxu0 %v802
    %v833 = vpop.f32.mrf.mxu0
    %v834 = vadd.f32 0.0, %v833
    %835 = vdwg.mxu0
    %836 = vmatpush.msra.mxu0 0.0
    %837 = vmatpush.msra.mxu0 0.0
    %838 = vmatpush.msra.mxu0 0.0
    %839 = vmatpush.msra.mxu0 0.0
    %840 = vmatpush.msra.mxu0 0.0
    %841 = vmatpush.msra.mxu0 0.0
    %842 = vmatpush.msra.mxu0 0.0
    %843 = vmatpush.msra.mxu0 0.0
    %844 = vmatpush.msra.mxu0 0.0
    %845 = vmatpush.msra.mxu0 0.0
    %846 = vmatpush.msra.mxu0 0.0
    %847 = vmatpush.msra.mxu0 0.0
    %848 = vmatpush.msra.mxu0 0.0
    %849 = vmatpush.msra.mxu0 0.0
    %850 = vmatpush.msra.mxu0 0.0
    %851 = vmatpush.msra.mxu0 %v806
    %852 = vmatmul.f32.gmra.mxu0 %v802
    %v853 = vpop.f32.mrf.mxu0
    %v854 = vadd.f32 0.0, %v853
    %855 = vdwg.mxu0
    %856 = vmatpush.msra.mxu0 0.0
    %857 = vmatpush.msra.mxu0 0.0
    %858 = vmatpush.msra.mxu0 0.0
    %859 = vmatpush.msra.mxu0 0.0
    %860 = vmatpush.msra.mxu0 0.0
    %861 = vmatpush.msra.mxu0 0.0
    %862 = vmatpush.msra.mxu0 0.0
    %863 = vmatpush.msra.mxu0 0.0
    %864 = vmatpush.msra.mxu0 0.0
    %865 = vmatpush.msra.mxu0 0.0
    %866 = vmatpush.msra.mxu0 0.0
    %867 = vmatpush.msra.mxu0 0.0
    %868 = vmatpush.msra.mxu0 0.0
    %869 = vmatpush.msra.mxu0 0.0
    %870 = vmatpush.msra.mxu0 0.0
    %871 = vmatpush.msra.mxu0 %v808
    %872 = vmatmul.f32.gmra.mxu0 %v802
    %v873 = vpop.f32.mrf.mxu0
    %v874 = vadd.f32 0.0, %v873
    %875 = vdwg.mxu0
    %876 = vmatpush.msra.mxu0 0.0
    %877 = vmatpush.msra.mxu0 0.0
    %878 = vmatpush.msra.mxu0 0.0
    %879 = vmatpush.msra.mxu0 0.0
    %880 = vmatpush.msra.mxu0 0.0
    %881 = vmatpush.msra.mxu0 0.0
    %882 = vmatpush.msra.mxu0 0.0
    %883 = vmatpush.msra.mxu0 0.0
    %884 = vmatpush.msra.mxu0 0.0
    %885 = vmatpush.msra.mxu0 0.0
    %886 = vmatpush.msra.mxu0 0.0
    %887 = vmatpush.msra.mxu0 0.0
    %888 = vmatpush.msra.mxu0 0.0
    %889 = vmatpush.msra.mxu0 0.0
    %890 = vmatpush.msra.mxu0 0.0
    %891 = vmatpush.msra.mxu0 %v810
    %892 = vmatmul.f32.gmra.mxu0 %v802
    %v893 = vpop.f32.mrf.mxu0
    %v894 = vadd.f32 0.0, %v893
    %895 = vdwg.mxu0
    %896 = vmatpush.msra.mxu0 0.0
    %897 = vmatpush.msra.mxu0 0.0
    %898 = vmatpush.msra.mxu0 0.0
    %899 = vmatpush.msra.mxu0 0.0
    %900 = vmatpush.msra.mxu0 0.0
    %901 = vmatpush.msra.mxu0 0.0
    %902 = vmatpush.msra.mxu0 0.0
    %903 = vmatpush.msra.mxu0 0.0
    %904 = vmatpush.msra.mxu0 0.0
    %905 = vmatpush.msra.mxu0 0.0
    %906 = vmatpush.msra.mxu0 0.0
    %907 = vmatpush.msra.mxu0 0.0
    %908 = vmatpush.msra.mxu0 0.0
    %909 = vmatpush.msra.mxu0 0.0
    %910 = vmatpush.msra.mxu0 0.0
    %911 = vmatpush.msra.mxu0 %v812
    %912 = vmatmul.f32.gmra.mxu0 %v802
    %v913 = vpop.f32.mrf.mxu0
    %v914 = vadd.f32 0.0, %v913
    %915 = vdwg.mxu0
    %916 = vmatpush.msra.mxu0 0.0
    %917 = vmatpush.msra.mxu0 0.0
    %918 = vmatpush.msra.mxu0 0.0
    %919 = vmatpush.msra.mxu0 0.0
    %920 = vmatpush.msra.mxu0 0.0
    %921 = vmatpush.msra.mxu0 0.0
    %922 = vmatpush.msra.mxu0 0.0
    %923 = vmatpush.msra.mxu0 0.0
    %924 = vmatpush.msra.mxu0 0.0
    %925 = vmatpush.msra.mxu0 0.0
    %926 = vmatpush.msra.mxu0 0.0
    %927 = vmatpush.msra.mxu0 0.0
    %928 = vmatpush.msra.mxu0 0.0
    %929 = vmatpush.msra.mxu0 0.0
    %930 = vmatpush.msra.mxu0 0.0
    %931 = vmatpush.msra.mxu0 %v814
    %932 = vmatmul.f32.gmra.mxu0 %v802
    %v933 = vpop.f32.mrf.mxu0
    %v934 = vadd.f32 0.0, %v933
    %935 = vdwg.mxu0
    %v936 = vadd.f32 %v782, %v834
    %v937 = vadd.f32 %v783, %v854
    %v938 = vadd.f32 %v784, %v874
    %v939 = vadd.f32 %v785, %v894
    %v940 = vadd.f32 %v786, %v914
    %v941 = vadd.f32 %v787, %v934
    %942 = vst [vmem:[#allocation1] ss:$2 sm:$0xff] %v50
    %s943 = scalar_lea.vmem [#allocation1], 16
    %944 = vst [vmem:[%s943] ss:$2 sm:$0xff] %v51
    %s945 = scalar_lea.vmem [#allocation1], 32
    %946 = vst [vmem:[%s945] ss:$2 sm:$0xff] %v52
    %v947 = vld.sshfl [vmem:[#allocation1] sm:$0xff pattern:$0x75316420]
    %v948 = vld.sshfl [vmem:[#allocation1 + $0x8] sm:$0xff pattern:$0x75316420]
    %v949 = vld.sshfl [vmem:[#allocation1 + $0x10] sm:$0xff pattern:$0x75316420]
    %v950 = vld.sshfl [vmem:[#allocation1 + $0x18] sm:$0xff pattern:$0x75316420]
    %v951 = vld.sshfl [vmem:[#allocation1 + $0x20] sm:$0xff pattern:$0x75316420]
    %v952 = vld.sshfl [vmem:[#allocation1 + $0x28] sm:$0xff pattern:$0x75316420]
    %959 = vrot.lane.b32.xlu0 %v947, 127
    %v960 = vpop.permute.xlu0 %959
    %961 = vrot.lane.b32.xlu0 %v948, 127
    %v962 = vpop.permute.xlu0 %961
    %963 = vrot.lane.b32.xlu0 %v949, 127
    %v964 = vpop.permute.xlu0 %963
    %965 = vrot.lane.b32.xlu0 %v950, 127
    %v966 = vpop.permute.xlu0 %965
    %967 = vrot.lane.b32.xlu0 %v951, 127
    %v968 = vpop.permute.xlu0 %967
    %969 = vrot.lane.b32.xlu0 %v952, 127
    %v970 = vpop.permute.xlu0 %969
    %vm971 = vcmp.lt.s32.totalorder %v87, 127
    %v972 = vsel %vm971, %v968, %v970
    %v973 = vsel %vm971, %v966, %v968
    %v974 = vsel %vm971, %v964, %v966
    %v975 = vsel %vm971, %v962, %v964
    %v976 = vsel %vm971, %v960, %v962
    %v977 = vsel %vm971, %v970, %v960
    %s978 = scalar_lea.vmem %s2, 40
    %v979 = vld [vmem:[%s978] sm:$0xff]
    %v981 = vsel %vm134, %v979, 0
    %v984 = vsel %vm138, %v976, 0
    %v987 = vsel %vm138, %v975, 0
    %v990 = vsel %vm138, %v974, 0
    %v993 = vsel %vm138, %v973, 0
    %v996 = vsel %vm138, %v972, 0
    %v999 = vsel %vm138, %v977, 0
    %1001 = vmatpush.msra.mxu0 0.0
    %1002 = vmatpush.msra.mxu0 0.0
    %1003 = vmatpush.msra.mxu0 0.0
    %1004 = vmatpush.msra.mxu0 0.0
    %1005 = vmatpush.msra.mxu0 0.0
    %1006 = vmatpush.msra.mxu0 0.0
    %1007 = vmatpush.msra.mxu0 0.0
    %1008 = vmatpush.msra.mxu0 0.0
    %1009 = vmatpush.msra.mxu0 0.0
    %1010 = vmatpush.msra.mxu0 0.0
    %1011 = vmatpush.msra.mxu0 0.0
    %1012 = vmatpush.msra.mxu0 0.0
    %1013 = vmatpush.msra.mxu0 0.0
    %1014 = vmatpush.msra.mxu0 0.0
    %1015 = vmatpush.msra.mxu0 0.0
    %1016 = vmatpush.msra.mxu0 %v984
    %1017 = vmatmul.f32.gmra.mxu0 %v981
    %v1018 = vpop.f32.mrf.mxu0
    %v1019 = vadd.f32 0.0, %v1018
    %1020 = vdwg.mxu0
    %1021 = vmatpush.msra.mxu0 0.0
    %1022 = vmatpush.msra.mxu0 0.0
    %1023 = vmatpush.msra.mxu0 0.0
    %1024 = vmatpush.msra.mxu0 0.0
    %1025 = vmatpush.msra.mxu0 0.0
    %1026 = vmatpush.msra.mxu0 0.0
    %1027 = vmatpush.msra.mxu0 0.0
    %1028 = vmatpush.msra.mxu0 0.0
    %1029 = vmatpush.msra.mxu0 0.0
    %1030 = vmatpush.msra.mxu0 0.0
    %1031 = vmatpush.msra.mxu0 0.0
    %1032 = vmatpush.msra.mxu0 0.0
    %1033 = vmatpush.msra.mxu0 0.0
    %1034 = vmatpush.msra.mxu0 0.0
    %1035 = vmatpush.msra.mxu0 0.0
    %1036 = vmatpush.msra.mxu0 %v987
    %1037 = vmatmul.f32.gmra.mxu0 %v981
    %v1038 = vpop.f32.mrf.mxu0
    %v1039 = vadd.f32 0.0, %v1038
    %1040 = vdwg.mxu0
    %1041 = vmatpush.msra.mxu0 0.0
    %1042 = vmatpush.msra.mxu0 0.0
    %1043 = vmatpush.msra.mxu0 0.0
    %1044 = vmatpush.msra.mxu0 0.0
    %1045 = vmatpush.msra.mxu0 0.0
    %1046 = vmatpush.msra.mxu0 0.0
    %1047 = vmatpush.msra.mxu0 0.0
    %1048 = vmatpush.msra.mxu0 0.0
    %1049 = vmatpush.msra.mxu0 0.0
    %1050 = vmatpush.msra.mxu0 0.0
    %1051 = vmatpush.msra.mxu0 0.0
    %1052 = vmatpush.msra.mxu0 0.0
    %1053 = vmatpush.msra.mxu0 0.0
    %1054 = vmatpush.msra.mxu0 0.0
    %1055 = vmatpush.msra.mxu0 0.0
    %1056 = vmatpush.msra.mxu0 %v990
    %1057 = vmatmul.f32.gmra.mxu0 %v981
    %v1058 = vpop.f32.mrf.mxu0
    %v1059 = vadd.f32 0.0, %v1058
    %1060 = vdwg.mxu0
    %1061 = vmatpush.msra.mxu0 0.0
    %1062 = vmatpush.msra.mxu0 0.0
    %1063 = vmatpush.msra.mxu0 0.0
    %1064 = vmatpush.msra.mxu0 0.0
    %1065 = vmatpush.msra.mxu0 0.0
    %1066 = vmatpush.msra.mxu0 0.0
    %1067 = vmatpush.msra.mxu0 0.0
    %1068 = vmatpush.msra.mxu0 0.0
    %1069 = vmatpush.msra.mxu0 0.0
    %1070 = vmatpush.msra.mxu0 0.0
    %1071 = vmatpush.msra.mxu0 0.0
    %1072 = vmatpush.msra.mxu0 0.0
    %1073 = vmatpush.msra.mxu0 0.0
    %1074 = vmatpush.msra.mxu0 0.0
    %1075 = vmatpush.msra.mxu0 0.0
    %1076 = vmatpush.msra.mxu0 %v993
    %1077 = vmatmul.f32.gmra.mxu0 %v981
    %v1078 = vpop.f32.mrf.mxu0
    %v1079 = vadd.f32 0.0, %v1078
    %1080 = vdwg.mxu0
    %1081 = vmatpush.msra.mxu0 0.0
    %1082 = vmatpush.msra.mxu0 0.0
    %1083 = vmatpush.msra.mxu0 0.0
    %1084 = vmatpush.msra.mxu0 0.0
    %1085 = vmatpush.msra.mxu0 0.0
    %1086 = vmatpush.msra.mxu0 0.0
    %1087 = vmatpush.msra.mxu0 0.0
    %1088 = vmatpush.msra.mxu0 0.0
    %1089 = vmatpush.msra.mxu0 0.0
    %1090 = vmatpush.msra.mxu0 0.0
    %1091 = vmatpush.msra.mxu0 0.0
    %1092 = vmatpush.msra.mxu0 0.0
    %1093 = vmatpush.msra.mxu0 0.0
    %1094 = vmatpush.msra.mxu0 0.0
    %1095 = vmatpush.msra.mxu0 0.0
    %1096 = vmatpush.msra.mxu0 %v996
    %1097 = vmatmul.f32.gmra.mxu0 %v981
    %v1098 = vpop.f32.mrf.mxu0
    %v1099 = vadd.f32 0.0, %v1098
    %1100 = vdwg.mxu0
    %1101 = vmatpush.msra.mxu0 0.0
    %1102 = vmatpush.msra.mxu0 0.0
    %1103 = vmatpush.msra.mxu0 0.0
    %1104 = vmatpush.msra.mxu0 0.0
    %1105 = vmatpush.msra.mxu0 0.0
    %1106 = vmatpush.msra.mxu0 0.0
    %1107 = vmatpush.msra.mxu0 0.0
    %1108 = vmatpush.msra.mxu0 0.0
    %1109 = vmatpush.msra.mxu0 0.0
    %1110 = vmatpush.msra.mxu0 0.0
    %1111 = vmatpush.msra.mxu0 0.0
    %1112 = vmatpush.msra.mxu0 0.0
    %1113 = vmatpush.msra.mxu0 0.0
    %1114 = vmatpush.msra.mxu0 0.0
    %1115 = vmatpush.msra.mxu0 0.0
    %1116 = vmatpush.msra.mxu0 %v999
    %1117 = vmatmul.f32.gmra.mxu0 %v981
    %v1118 = vpop.f32.mrf.mxu0
    %v1119 = vadd.f32 0.0, %v1118
    %1120 = vdwg.mxu0
    %v1121 = vadd.f32 %v936, %v1019
    %v1122 = vadd.f32 %v937, %v1039
    %v1123 = vadd.f32 %v938, %v1059
    %v1124 = vadd.f32 %v939, %v1079
    %v1125 = vadd.f32 %v940, %v1099
    %v1126 = vadd.f32 %v941, %v1119
    %1127 = vst [vmem:[#allocation1] ss:$2 sm:$0xff] %v50
    %s1128 = scalar_lea.vmem [#allocation1], 16
    %1129 = vst [vmem:[%s1128] ss:$2 sm:$0xff] %v51
    %s1130 = scalar_lea.vmem [#allocation1], 32
    %1131 = vst [vmem:[%s1130] ss:$2 sm:$0xff] %v52
    %v1132 = vld.sshfl [vmem:[#allocation1] sm:$0xff pattern:$0x75316420]
    %v1133 = vld.sshfl [vmem:[#allocation1 + $0x8] sm:$0xff pattern:$0x75316420]
    %v1134 = vld.sshfl [vmem:[#allocation1 + $0x10] sm:$0xff pattern:$0x75316420]
    %v1135 = vld.sshfl [vmem:[#allocation1 + $0x18] sm:$0xff pattern:$0x75316420]
    %v1136 = vld.sshfl [vmem:[#allocation1 + $0x20] sm:$0xff pattern:$0x75316420]
    %v1137 = vld.sshfl [vmem:[#allocation1 + $0x28] sm:$0xff pattern:$0x75316420]
    %1144 = vrot.lane.b32.xlu0 %v1132, 111
    %v1145 = vpop.permute.xlu0 %1144
    %1146 = vrot.lane.b32.xlu0 %v1133, 111
    %v1147 = vpop.permute.xlu0 %1146
    %1148 = vrot.lane.b32.xlu0 %v1134, 111
    %v1149 = vpop.permute.xlu0 %1148
    %1150 = vrot.lane.b32.xlu0 %v1135, 111
    %v1151 = vpop.permute.xlu0 %1150
    %1152 = vrot.lane.b32.xlu0 %v1136, 111
    %v1153 = vpop.permute.xlu0 %1152
    %1154 = vrot.lane.b32.xlu0 %v1137, 111
    %v1155 = vpop.permute.xlu0 %1154
    %vm1156 = vcmp.lt.s32.totalorder %v87, 111
    %v1157 = vsel %vm1156, %v1153, %v1155
    %v1158 = vsel %vm1156, %v1151, %v1153
    %v1159 = vsel %vm1156, %v1149, %v1151
    %v1160 = vsel %vm1156, %v1147, %v1149
    %v1161 = vsel %vm1156, %v1145, %v1147
    %v1162 = vsel %vm1156, %v1155, %v1145
    %s1163 = scalar_lea.vmem %s2, 48
    %v1164 = vld [vmem:[%s1163] sm:$0xff]
    %v1166 = vsel %vm134, %v1164, 0
    %v1169 = vsel %vm138, %v1161, 0
    %v1172 = vsel %vm138, %v1160, 0
    %v1175 = vsel %vm138, %v1159, 0
    %v1178 = vsel %vm138, %v1158, 0
    %v1181 = vsel %vm138, %v1157, 0
    %v1184 = vsel %vm138, %v1162, 0
    %1186 = vmatpush.msra.mxu0 0.0
    %1187 = vmatpush.msra.mxu0 0.0
    %1188 = vmatpush.msra.mxu0 0.0
    %1189 = vmatpush.msra.mxu0 0.0
    %1190 = vmatpush.msra.mxu0 0.0
    %1191 = vmatpush.msra.mxu0 0.0
    %1192 = vmatpush.msra.mxu0 0.0
    %1193 = vmatpush.msra.mxu0 0.0
    %1194 = vmatpush.msra.mxu0 0.0
    %1195 = vmatpush.msra.mxu0 0.0
    %1196 = vmatpush.msra.mxu0 0.0
    %1197 = vmatpush.msra.mxu0 0.0
    %1198 = vmatpush.msra.mxu0 0.0
    %1199 = vmatpush.msra.mxu0 0.0
    %1200 = vmatpush.msra.mxu0 0.0
    %1201 = vmatpush.msra.mxu0 %v1169
    %1202 = vmatmul.f32.gmra.mxu0 %v1166
    %v1203 = vpop.f32.mrf.mxu0
    %v1204 = vadd.f32 0.0, %v1203
    %1205 = vdwg.mxu0
    %1206 = vmatpush.msra.mxu0 0.0
    %1207 = vmatpush.msra.mxu0 0.0
    %1208 = vmatpush.msra.mxu0 0.0
    %1209 = vmatpush.msra.mxu0 0.0
    %1210 = vmatpush.msra.mxu0 0.0
    %1211 = vmatpush.msra.mxu0 0.0
    %1212 = vmatpush.msra.mxu0 0.0
    %1213 = vmatpush.msra.mxu0 0.0
    %1214 = vmatpush.msra.mxu0 0.0
    %1215 = vmatpush.msra.mxu0 0.0
    %1216 = vmatpush.msra.mxu0 0.0
    %1217 = vmatpush.msra.mxu0 0.0
    %1218 = vmatpush.msra.mxu0 0.0
    %1219 = vmatpush.msra.mxu0 0.0
    %1220 = vmatpush.msra.mxu0 0.0
    %1221 = vmatpush.msra.mxu0 %v1172
    %1222 = vmatmul.f32.gmra.mxu0 %v1166
    %v1223 = vpop.f32.mrf.mxu0
    %v1224 = vadd.f32 0.0, %v1223
    %1225 = vdwg.mxu0
    %1226 = vmatpush.msra.mxu0 0.0
    %1227 = vmatpush.msra.mxu0 0.0
    %1228 = vmatpush.msra.mxu0 0.0
    %1229 = vmatpush.msra.mxu0 0.0
    %1230 = vmatpush.msra.mxu0 0.0
    %1231 = vmatpush.msra.mxu0 0.0
    %1232 = vmatpush.msra.mxu0 0.0
    %1233 = vmatpush.msra.mxu0 0.0
    %1234 = vmatpush.msra.mxu0 0.0
    %1235 = vmatpush.msra.mxu0 0.0
    %1236 = vmatpush.msra.mxu0 0.0
    %1237 = vmatpush.msra.mxu0 0.0
    %1238 = vmatpush.msra.mxu0 0.0
    %1239 = vmatpush.msra.mxu0 0.0
    %1240 = vmatpush.msra.mxu0 0.0
    %1241 = vmatpush.msra.mxu0 %v1175
    %1242 = vmatmul.f32.gmra.mxu0 %v1166
    %v1243 = vpop.f32.mrf.mxu0
    %v1244 = vadd.f32 0.0, %v1243
    %1245 = vdwg.mxu0
    %1246 = vmatpush.msra.mxu0 0.0
    %1247 = vmatpush.msra.mxu0 0.0
    %1248 = vmatpush.msra.mxu0 0.0
    %1249 = vmatpush.msra.mxu0 0.0
    %1250 = vmatpush.msra.mxu0 0.0
    %1251 = vmatpush.msra.mxu0 0.0
    %1252 = vmatpush.msra.mxu0 0.0
    %1253 = vmatpush.msra.mxu0 0.0
    %1254 = vmatpush.msra.mxu0 0.0
    %1255 = vmatpush.msra.mxu0 0.0
    %1256 = vmatpush.msra.mxu0 0.0
    %1257 = vmatpush.msra.mxu0 0.0
    %1258 = vmatpush.msra.mxu0 0.0
    %1259 = vmatpush.msra.mxu0 0.0
    %1260 = vmatpush.msra.mxu0 0.0
    %1261 = vmatpush.msra.mxu0 %v1178
    %1262 = vmatmul.f32.gmra.mxu0 %v1166
    %v1263 = vpop.f32.mrf.mxu0
    %v1264 = vadd.f32 0.0, %v1263
    %1265 = vdwg.mxu0
    %1266 = vmatpush.msra.mxu0 0.0
    %1267 = vmatpush.msra.mxu0 0.0
    %1268 = vmatpush.msra.mxu0 0.0
    %1269 = vmatpush.msra.mxu0 0.0
    %1270 = vmatpush.msra.mxu0 0.0
    %1271 = vmatpush.msra.mxu0 0.0
    %1272 = vmatpush.msra.mxu0 0.0
    %1273 = vmatpush.msra.mxu0 0.0
    %1274 = vmatpush.msra.mxu0 0.0
    %1275 = vmatpush.msra.mxu0 0.0
    %1276 = vmatpush.msra.mxu0 0.0
    %1277 = vmatpush.msra.mxu0 0.0
    %1278 = vmatpush.msra.mxu0 0.0
    %1279 = vmatpush.msra.mxu0 0.0
    %1280 = vmatpush.msra.mxu0 0.0
    %1281 = vmatpush.msra.mxu0 %v1181
    %1282 = vmatmul.f32.gmra.mxu0 %v1166
    %v1283 = vpop.f32.mrf.mxu0
    %v1284 = vadd.f32 0.0, %v1283
    %1285 = vdwg.mxu0
    %1286 = vmatpush.msra.mxu0 0.0
    %1287 = vmatpush.msra.mxu0 0.0
    %1288 = vmatpush.msra.mxu0 0.0
    %1289 = vmatpush.msra.mxu0 0.0
    %1290 = vmatpush.msra.mxu0 0.0
    %1291 = vmatpush.msra.mxu0 0.0
    %1292 = vmatpush.msra.mxu0 0.0
    %1293 = vmatpush.msra.mxu0 0.0
    %1294 = vmatpush.msra.mxu0 0.0
    %1295 = vmatpush.msra.mxu0 0.0
    %1296 = vmatpush.msra.mxu0 0.0
    %1297 = vmatpush.msra.mxu0 0.0
    %1298 = vmatpush.msra.mxu0 0.0
    %1299 = vmatpush.msra.mxu0 0.0
    %1300 = vmatpush.msra.mxu0 0.0
    %1301 = vmatpush.msra.mxu0 %v1184
    %1302 = vmatmul.f32.gmra.mxu0 %v1166
    %v1303 = vpop.f32.mrf.mxu0
    %v1304 = vadd.f32 0.0, %v1303
    %1305 = vdwg.mxu0
    %v1306 = vadd.f32 %v1121, %v1204
    %v1307 = vadd.f32 %v1122, %v1224
    %v1308 = vadd.f32 %v1123, %v1244
    %v1309 = vadd.f32 %v1124, %v1264
    %v1310 = vadd.f32 %v1125, %v1284
    %v1311 = vadd.f32 %v1126, %v1304
    %1312 = vst [vmem:[#allocation1] ss:$2 sm:$0xff] %v50
    %s1313 = scalar_lea.vmem [#allocation1], 16
    %1314 = vst [vmem:[%s1313] ss:$2 sm:$0xff] %v51
    %s1315 = scalar_lea.vmem [#allocation1], 32
    %1316 = vst [vmem:[%s1315] ss:$2 sm:$0xff] %v52
    %v1317 = vld.sshfl [vmem:[#allocation1] sm:$0xff pattern:$0x75316420]
    %v1318 = vld.sshfl [vmem:[#allocation1 + $0x8] sm:$0xff pattern:$0x75316420]
    %v1319 = vld.sshfl [vmem:[#allocation1 + $0x10] sm:$0xff pattern:$0x75316420]
    %v1320 = vld.sshfl [vmem:[#allocation1 + $0x18] sm:$0xff pattern:$0x75316420]
    %v1321 = vld.sshfl [vmem:[#allocation1 + $0x20] sm:$0xff pattern:$0x75316420]
    %v1322 = vld.sshfl [vmem:[#allocation1 + $0x28] sm:$0xff pattern:$0x75316420]
    %1329 = vrot.lane.b32.xlu0 %v1317, 110
    %v1330 = vpop.permute.xlu0 %1329
    %1331 = vrot.lane.b32.xlu0 %v1318, 110
    %v1332 = vpop.permute.xlu0 %1331
    %1333 = vrot.lane.b32.xlu0 %v1319, 110
    %v1334 = vpop.permute.xlu0 %1333
    %1335 = vrot.lane.b32.xlu0 %v1320, 110
    %v1336 = vpop.permute.xlu0 %1335
    %1337 = vrot.lane.b32.xlu0 %v1321, 110
    %v1338 = vpop.permute.xlu0 %1337
    %1339 = vrot.lane.b32.xlu0 %v1322, 110
    %v1340 = vpop.permute.xlu0 %1339
    %vm1341 = vcmp.lt.s32.totalorder %v87, 110
    %v1342 = vsel %vm1341, %v1338, %v1340
    %v1343 = vsel %vm1341, %v1336, %v1338
    %v1344 = vsel %vm1341, %v1334, %v1336
    %v1345 = vsel %vm1341, %v1332, %v1334
    %v1346 = vsel %vm1341, %v1330, %v1332
    %v1347 = vsel %vm1341, %v1340, %v1330
    %s1348 = scalar_lea.vmem %s2, 56
    %v1349 = vld [vmem:[%s1348] sm:$0xff]
    %v1351 = vsel %vm134, %v1349, 0
    %v1354 = vsel %vm138, %v1346, 0
    %v1357 = vsel %vm138, %v1345, 0
    %v1360 = vsel %vm138, %v1344, 0
    %v1363 = vsel %vm138, %v1343, 0
    %v1366 = vsel %vm138, %v1342, 0
    %v1369 = vsel %vm138, %v1347, 0
    %1371 = vmatpush.msra.mxu0 0.0
    %1372 = vmatpush.msra.mxu0 0.0
    %1373 = vmatpush.msra.mxu0 0.0
    %1374 = vmatpush.msra.mxu0 0.0
    %1375 = vmatpush.msra.mxu0 0.0
    %1376 = vmatpush.msra.mxu0 0.0
    %1377 = vmatpush.msra.mxu0 0.0
    %1378 = vmatpush.msra.mxu0 0.0
    %1379 = vmatpush.msra.mxu0 0.0
    %1380 = vmatpush.msra.mxu0 0.0
    %1381 = vmatpush.msra.mxu0 0.0
    %1382 = vmatpush.msra.mxu0 0.0
    %1383 = vmatpush.msra.mxu0 0.0
    %1384 = vmatpush.msra.mxu0 0.0
    %1385 = vmatpush.msra.mxu0 0.0
    %1386 = vmatpush.msra.mxu0 %v1354
    %1387 = vmatmul.f32.gmra.mxu0 %v1351
    %v1388 = vpop.f32.mrf.mxu0
    %v1389 = vadd.f32 0.0, %v1388
    %1390 = vdwg.mxu0
    %1391 = vmatpush.msra.mxu0 0.0
    %1392 = vmatpush.msra.mxu0 0.0
    %1393 = vmatpush.msra.mxu0 0.0
    %1394 = vmatpush.msra.mxu0 0.0
    %1395 = vmatpush.msra.mxu0 0.0
    %1396 = vmatpush.msra.mxu0 0.0
    %1397 = vmatpush.msra.mxu0 0.0
    %1398 = vmatpush.msra.mxu0 0.0
    %1399 = vmatpush.msra.mxu0 0.0
    %1400 = vmatpush.msra.mxu0 0.0
    %1401 = vmatpush.msra.mxu0 0.0
    %1402 = vmatpush.msra.mxu0 0.0
    %1403 = vmatpush.msra.mxu0 0.0
    %1404 = vmatpush.msra.mxu0 0.0
    %1405 = vmatpush.msra.mxu0 0.0
    %1406 = vmatpush.msra.mxu0 %v1357
    %1407 = vmatmul.f32.gmra.mxu0 %v1351
    %v1408 = vpop.f32.mrf.mxu0
    %v1409 = vadd.f32 0.0, %v1408
    %1410 = vdwg.mxu0
    %1411 = vmatpush.msra.mxu0 0.0
    %1412 = vmatpush.msra.mxu0 0.0
    %1413 = vmatpush.msra.mxu0 0.0
    %1414 = vmatpush.msra.mxu0 0.0
    %1415 = vmatpush.msra.mxu0 0.0
    %1416 = vmatpush.msra.mxu0 0.0
    %1417 = vmatpush.msra.mxu0 0.0
    %1418 = vmatpush.msra.mxu0 0.0
    %1419 = vmatpush.msra.mxu0 0.0
    %1420 = vmatpush.msra.mxu0 0.0
    %1421 = vmatpush.msra.mxu0 0.0
    %1422 = vmatpush.msra.mxu0 0.0
    %1423 = vmatpush.msra.mxu0 0.0
    %1424 = vmatpush.msra.mxu0 0.0
    %1425 = vmatpush.msra.mxu0 0.0
    %1426 = vmatpush.msra.mxu0 %v1360
    %1427 = vmatmul.f32.gmra.mxu0 %v1351
    %v1428 = vpop.f32.mrf.mxu0
    %v1429 = vadd.f32 0.0, %v1428
    %1430 = vdwg.mxu0
    %1431 = vmatpush.msra.mxu0 0.0
    %1432 = vmatpush.msra.mxu0 0.0
    %1433 = vmatpush.msra.mxu0 0.0
    %1434 = vmatpush.msra.mxu0 0.0
    %1435 = vmatpush.msra.mxu0 0.0
    %1436 = vmatpush.msra.mxu0 0.0
    %1437 = vmatpush.msra.mxu0 0.0
    %1438 = vmatpush.msra.mxu0 0.0
    %1439 = vmatpush.msra.mxu0 0.0
    %1440 = vmatpush.msra.mxu0 0.0
    %1441 = vmatpush.msra.mxu0 0.0
    %1442 = vmatpush.msra.mxu0 0.0
    %1443 = vmatpush.msra.mxu0 0.0
    %1444 = vmatpush.msra.mxu0 0.0
    %1445 = vmatpush.msra.mxu0 0.0
    %1446 = vmatpush.msra.mxu0 %v1363
    %1447 = vmatmul.f32.gmra.mxu0 %v1351
    %v1448 = vpop.f32.mrf.mxu0
    %v1449 = vadd.f32 0.0, %v1448
    %1450 = vdwg.mxu0
    %1451 = vmatpush.msra.mxu0 0.0
    %1452 = vmatpush.msra.mxu0 0.0
    %1453 = vmatpush.msra.mxu0 0.0
    %1454 = vmatpush.msra.mxu0 0.0
    %1455 = vmatpush.msra.mxu0 0.0
    %1456 = vmatpush.msra.mxu0 0.0
    %1457 = vmatpush.msra.mxu0 0.0
    %1458 = vmatpush.msra.mxu0 0.0
    %1459 = vmatpush.msra.mxu0 0.0
    %1460 = vmatpush.msra.mxu0 0.0
    %1461 = vmatpush.msra.mxu0 0.0
    %1462 = vmatpush.msra.mxu0 0.0
    %1463 = vmatpush.msra.mxu0 0.0
    %1464 = vmatpush.msra.mxu0 0.0
    %1465 = vmatpush.msra.mxu0 0.0
    %1466 = vmatpush.msra.mxu0 %v1366
    %1467 = vmatmul.f32.gmra.mxu0 %v1351
    %v1468 = vpop.f32.mrf.mxu0
    %v1469 = vadd.f32 0.0, %v1468
    %1470 = vdwg.mxu0
    %1471 = vmatpush.msra.mxu0 0.0
    %1472 = vmatpush.msra.mxu0 0.0
    %1473 = vmatpush.msra.mxu0 0.0
    %1474 = vmatpush.msra.mxu0 0.0
    %1475 = vmatpush.msra.mxu0 0.0
    %1476 = vmatpush.msra.mxu0 0.0
    %1477 = vmatpush.msra.mxu0 0.0
    %1478 = vmatpush.msra.mxu0 0.0
    %1479 = vmatpush.msra.mxu0 0.0
    %1480 = vmatpush.msra.mxu0 0.0
    %1481 = vmatpush.msra.mxu0 0.0
    %1482 = vmatpush.msra.mxu0 0.0
    %1483 = vmatpush.msra.mxu0 0.0
    %1484 = vmatpush.msra.mxu0 0.0
    %1485 = vmatpush.msra.mxu0 0.0
    %1486 = vmatpush.msra.mxu0 %v1369
    %1487 = vmatmul.f32.gmra.mxu0 %v1351
    %v1488 = vpop.f32.mrf.mxu0
    %v1489 = vadd.f32 0.0, %v1488
    %1490 = vdwg.mxu0
    %v1491 = vadd.f32 %v1306, %v1389
    %v1492 = vadd.f32 %v1307, %v1409
    %v1493 = vadd.f32 %v1308, %v1429
    %v1494 = vadd.f32 %v1309, %v1449
    %v1495 = vadd.f32 %v1310, %v1469
    %v1496 = vadd.f32 %v1311, %v1489
    %1497 = vst [vmem:[#allocation1] ss:$2 sm:$0xff] %v50
    %s1498 = scalar_lea.vmem [#allocation1], 16
    %1499 = vst [vmem:[%s1498] ss:$2 sm:$0xff] %v51
    %s1500 = scalar_lea.vmem [#allocation1], 32
    %1501 = vst [vmem:[%s1500] ss:$2 sm:$0xff] %v52
    %v1502 = vld.sshfl [vmem:[#allocation1] sm:$0xff pattern:$0x75316420]
    %v1503 = vld.sshfl [vmem:[#allocation1 + $0x8] sm:$0xff pattern:$0x75316420]
    %v1504 = vld.sshfl [vmem:[#allocation1 + $0x10] sm:$0xff pattern:$0x75316420]
    %v1505 = vld.sshfl [vmem:[#allocation1 + $0x18] sm:$0xff pattern:$0x75316420]
    %v1506 = vld.sshfl [vmem:[#allocation1 + $0x20] sm:$0xff pattern:$0x75316420]
    %v1507 = vld.sshfl [vmem:[#allocation1 + $0x28] sm:$0xff pattern:$0x75316420]
    %1514 = vrot.lane.b32.xlu0 %v1502, 109
    %v1515 = vpop.permute.xlu0 %1514
    %1516 = vrot.lane.b32.xlu0 %v1503, 109
    %v1517 = vpop.permute.xlu0 %1516
    %1518 = vrot.lane.b32.xlu0 %v1504, 109
    %v1519 = vpop.permute.xlu0 %1518
    %1520 = vrot.lane.b32.xlu0 %v1505, 109
    %v1521 = vpop.permute.xlu0 %1520
    %1522 = vrot.lane.b32.xlu0 %v1506, 109
    %v1523 = vpop.permute.xlu0 %1522
    %1524 = vrot.lane.b32.xlu0 %v1507, 109
    %v1525 = vpop.permute.xlu0 %1524
    %vm1526 = vcmp.lt.s32.totalorder %v87, 109
    %v1527 = vsel %vm1526, %v1523, %v1525
    %v1528 = vsel %vm1526, %v1521, %v1523
    %v1529 = vsel %vm1526, %v1519, %v1521
    %v1530 = vsel %vm1526, %v1517, %v1519
    %v1531 = vsel %vm1526, %v1515, %v1517
    %v1532 = vsel %vm1526, %v1525, %v1515
    %s1533 = scalar_lea.vmem %s2, 64
    %v1534 = vld [vmem:[%s1533] sm:$0xff]
    %v1536 = vsel %vm134, %v1534, 0
    %v1539 = vsel %vm138, %v1531, 0
    %v1542 = vsel %vm138, %v1530, 0
    %v1545 = vsel %vm138, %v1529, 0
    %v1548 = vsel %vm138, %v1528, 0
    %v1551 = vsel %vm138, %v1527, 0
    %v1554 = vsel %vm138, %v1532, 0
    %1556 = vmatpush.msra.mxu0 0.0
    %1557 = vmatpush.msra.mxu0 0.0
    %1558 = vmatpush.msra.mxu0 0.0
    %1559 = vmatpush.msra.mxu0 0.0
    %1560 = vmatpush.msra.mxu0 0.0
    %1561 = vmatpush.msra.mxu0 0.0
    %1562 = vmatpush.msra.mxu0 0.0
    %1563 = vmatpush.msra.mxu0 0.0
    %1564 = vmatpush.msra.mxu0 0.0
    %1565 = vmatpush.msra.mxu0 0.0
    %1566 = vmatpush.msra.mxu0 0.0
    %1567 = vmatpush.msra.mxu0 0.0
    %1568 = vmatpush.msra.mxu0 0.0
    %1569 = vmatpush.msra.mxu0 0.0
    %1570 = vmatpush.msra.mxu0 0.0
    %1571 = vmatpush.msra.mxu0 %v1539
    %1572 = vmatmul.f32.gmra.mxu0 %v1536
    %v1573 = vpop.f32.mrf.mxu0
    %v1574 = vadd.f32 0.0, %v1573
    %1575 = vdwg.mxu0
    %1576 = vmatpush.msra.mxu0 0.0
    %1577 = vmatpush.msra.mxu0 0.0
    %1578 = vmatpush.msra.mxu0 0.0
    %1579 = vmatpush.msra.mxu0 0.0
    %1580 = vmatpush.msra.mxu0 0.0
    %1581 = vmatpush.msra.mxu0 0.0
    %1582 = vmatpush.msra.mxu0 0.0
    %1583 = vmatpush.msra.mxu0 0.0
    %1584 = vmatpush.msra.mxu0 0.0
    %1585 = vmatpush.msra.mxu0 0.0
    %1586 = vmatpush.msra.mxu0 0.0
    %1587 = vmatpush.msra.mxu0 0.0
    %1588 = vmatpush.msra.mxu0 0.0
    %1589 = vmatpush.msra.mxu0 0.0
    %1590 = vmatpush.msra.mxu0 0.0
    %1591 = vmatpush.msra.mxu0 %v1542
    %1592 = vmatmul.f32.gmra.mxu0 %v1536
    %v1593 = vpop.f32.mrf.mxu0
    %v1594 = vadd.f32 0.0, %v1593
    %1595 = vdwg.mxu0
    %1596 = vmatpush.msra.mxu0 0.0
    %1597 = vmatpush.msra.mxu0 0.0
    %1598 = vmatpush.msra.mxu0 0.0
    %1599 = vmatpush.msra.mxu0 0.0
    %1600 = vmatpush.msra.mxu0 0.0
    %1601 = vmatpush.msra.mxu0 0.0
    %1602 = vmatpush.msra.mxu0 0.0
    %1603 = vmatpush.msra.mxu0 0.0
    %1604 = vmatpush.msra.mxu0 0.0
    %1605 = vmatpush.msra.mxu0 0.0
    %1606 = vmatpush.msra.mxu0 0.0
    %1607 = vmatpush.msra.mxu0 0.0
    %1608 = vmatpush.msra.mxu0 0.0
    %1609 = vmatpush.msra.mxu0 0.0
    %1610 = vmatpush.msra.mxu0 0.0
    %1611 = vmatpush.msra.mxu0 %v1545
    %1612 = vmatmul.f32.gmra.mxu0 %v1536
    %v1613 = vpop.f32.mrf.mxu0
    %v1614 = vadd.f32 0.0, %v1613
    %1615 = vdwg.mxu0
    %1616 = vmatpush.msra.mxu0 0.0
    %1617 = vmatpush.msra.mxu0 0.0
    %1618 = vmatpush.msra.mxu0 0.0
    %1619 = vmatpush.msra.mxu0 0.0
    %1620 = vmatpush.msra.mxu0 0.0
    %1621 = vmatpush.msra.mxu0 0.0
    %1622 = vmatpush.msra.mxu0 0.0
    %1623 = vmatpush.msra.mxu0 0.0
    %1624 = vmatpush.msra.mxu0 0.0
    %1625 = vmatpush.msra.mxu0 0.0
    %1626 = vmatpush.msra.mxu0 0.0
    %1627 = vmatpush.msra.mxu0 0.0
    %1628 = vmatpush.msra.mxu0 0.0
    %1629 = vmatpush.msra.mxu0 0.0
    %1630 = vmatpush.msra.mxu0 0.0
    %1631 = vmatpush.msra.mxu0 %v1548
    %1632 = vmatmul.f32.gmra.mxu0 %v1536
    %v1633 = vpop.f32.mrf.mxu0
    %v1634 = vadd.f32 0.0, %v1633
    %1635 = vdwg.mxu0
    %1636 = vmatpush.msra.mxu0 0.0
    %1637 = vmatpush.msra.mxu0 0.0
    %1638 = vmatpush.msra.mxu0 0.0
    %1639 = vmatpush.msra.mxu0 0.0
    %1640 = vmatpush.msra.mxu0 0.0
    %1641 = vmatpush.msra.mxu0 0.0
    %1642 = vmatpush.msra.mxu0 0.0
    %1643 = vmatpush.msra.mxu0 0.0
    %1644 = vmatpush.msra.mxu0 0.0
    %1645 = vmatpush.msra.mxu0 0.0
    %1646 = vmatpush.msra.mxu0 0.0
    %1647 = vmatpush.msra.mxu0 0.0
    %1648 = vmatpush.msra.mxu0 0.0
    %1649 = vmatpush.msra.mxu0 0.0
    %1650 = vmatpush.msra.mxu0 0.0
    %1651 = vmatpush.msra.mxu0 %v1551
    %1652 = vmatmul.f32.gmra.mxu0 %v1536
    %v1653 = vpop.f32.mrf.mxu0
    %v1654 = vadd.f32 0.0, %v1653
    %1655 = vdwg.mxu0
    %1656 = vmatpush.msra.mxu0 0.0
    %1657 = vmatpush.msra.mxu0 0.0
    %1658 = vmatpush.msra.mxu0 0.0
    %1659 = vmatpush.msra.mxu0 0.0
    %1660 = vmatpush.msra.mxu0 0.0
    %1661 = vmatpush.msra.mxu0 0.0
    %1662 = vmatpush.msra.mxu0 0.0
    %1663 = vmatpush.msra.mxu0 0.0
    %1664 = vmatpush.msra.mxu0 0.0
    %1665 = vmatpush.msra.mxu0 0.0
    %1666 = vmatpush.msra.mxu0 0.0
    %1667 = vmatpush.msra.mxu0 0.0
    %1668 = vmatpush.msra.mxu0 0.0
    %1669 = vmatpush.msra.mxu0 0.0
    %1670 = vmatpush.msra.mxu0 0.0
    %1671 = vmatpush.msra.mxu0 %v1554
    %1672 = vmatmul.f32.gmra.mxu0 %v1536
    %v1673 = vpop.f32.mrf.mxu0
    %v1674 = vadd.f32 0.0, %v1673
    %1675 = vdwg.mxu0
    %v1676 = vadd.f32 %v1491, %v1574
    %v1677 = vadd.f32 %v1492, %v1594
    %v1678 = vadd.f32 %v1493, %v1614
    %v1679 = vadd.f32 %v1494, %v1634
    %v1680 = vadd.f32 %v1495, %v1654
    %v1681 = vadd.f32 %v1496, %v1674
    %v1682 = vld [vmem:[%s3] sm:$0xff]
    %1684 = vset.pattern.permute.xlu0 0
    %1685 = vperm.xlu0 %1684, %v1682
    %v1686 = vpop.permute.xlu0 %1685
    %v1688 = vadd.f32 %v1676, %v1686
    %v1689 = vadd.f32 %v1677, %v1686
    %v1690 = vadd.f32 %v1678, %v1686
    %v1691 = vadd.f32 %v1679, %v1686
    %v1692 = vadd.f32 %v1680, %v1686
    %v1693 = vadd.f32 %v1681, %v1686
    %v1694 = vmax.f32 %v1688, 0.0
    %v1695 = vmax.f32 %v1689, 0.0
    %v1696 = vmax.f32 %v1690, 0.0
    %v1697 = vmax.f32 %v1691, 0.0
    %v1698 = vmax.f32 %v1692, 0.0
    %v1699 = vmax.f32 %v1693, 0.0
    %v1701 = vperm.slane %v53, 0
    %v1702 = vperm.slane %v53, 1
    %v1703 = vperm.slane %v53, 2
    %v1704 = vperm.slane %v53, 3
    %v1705 = vperm.slane %v53, 4
    %v1706 = vperm.slane %v53, 5
    %v1713 = vmul.f32 %v1694, %v1701
    %v1714 = vmul.f32 %v1695, %v1702
    %v1715 = vmul.f32 %v1696, %v1703
    %v1716 = vmul.f32 %v1697, %v1704
    %v1717 = vmul.f32 %v1698, %v1705
    %v1718 = vmul.f32 %v1699, %v1706
    %1719 = vrot.lane.b32.xlu0 %v1713, 19
    %v1720 = vpop.permute.xlu0 %1719
    %1721 = vrot.lane.b32.xlu0 %v1714, 19
    %v1722 = vpop.permute.xlu0 %1721
    %1723 = vrot.lane.b32.xlu0 %v1715, 19
    %v1724 = vpop.permute.xlu0 %1723
    %1725 = vrot.lane.b32.xlu0 %v1716, 19
    %v1726 = vpop.permute.xlu0 %1725
    %1727 = vrot.lane.b32.xlu0 %v1717, 19
    %v1728 = vpop.permute.xlu0 %1727
    %1729 = vrot.lane.b32.xlu0 %v1718, 19
    %v1730 = vpop.permute.xlu0 %1729
    %v1731 = vsel %vm88, %v1728, %v1730
    %v1732 = vsel %vm88, %v1726, %v1728
    %v1733 = vsel %vm88, %v1724, %v1726
    %v1734 = vsel %vm88, %v1722, %v1724
    %v1735 = vsel %vm88, %v1720, %v1722
    %v1736 = vsel %vm88, %v1730, %v1720
    %v1737 = vld [vmem:[%s4] sm:$0xff]
    %1738 = vrot.lane.b32.xlu0 %v1713, 18
    %v1739 = vpop.permute.xlu0 %1738
    %1740 = vrot.lane.b32.xlu0 %v1714, 18
    %v1741 = vpop.permute.xlu0 %1740
    %1742 = vrot.lane.b32.xlu0 %v1715, 18
    %v1743 = vpop.permute.xlu0 %1742
    %1744 = vrot.lane.b32.xlu0 %v1716, 18
    %v1745 = vpop.permute.xlu0 %1744
    %1746 = vrot.lane.b32.xlu0 %v1717, 18
    %v1747 = vpop.permute.xlu0 %1746
    %1748 = vrot.lane.b32.xlu0 %v1718, 18
    %v1749 = vpop.permute.xlu0 %1748
    %v1750 = vsel %vm125, %v1747, %v1749
    %v1751 = vsel %vm125, %v1745, %v1747
    %v1752 = vsel %vm125, %v1743, %v1745
    %v1753 = vsel %vm125, %v1741, %v1743
    %v1754 = vsel %vm125, %v1739, %v1741
    %v1755 = vsel %vm125, %v1749, %v1739
    %s1756 = scalar_lea.vmem %s4, 8
    %v1757 = vld [vmem:[%s1756] sm:$0xff]
    %vm1758 = vcmask 64512
    %v1760 = vsel %vm1758, %v1757, 0
    %1762 = vmatpush.msra.mxu0 0.0
    %1763 = vmatpush.msra.mxu0 0.0
    %1764 = vmatpush.msra.mxu0 0.0
    %1765 = vmatpush.msra.mxu0 0.0
    %1766 = vmatpush.msra.mxu0 0.0
    %1767 = vmatpush.msra.mxu0 0.0
    %1768 = vmatpush.msra.mxu0 0.0
    %1769 = vmatpush.msra.mxu0 0.0
    %1770 = vmatpush.msra.mxu0 0.0
    %1771 = vmatpush.msra.mxu0 0.0
    %1772 = vmatpush.msra.mxu0 0.0
    %1773 = vmatpush.msra.mxu0 0.0
    %1774 = vmatpush.msra.mxu0 0.0
    %1775 = vmatpush.msra.mxu0 0.0
    %1776 = vmatpush.msra.mxu0 0.0
    %1777 = vmatpush.msra.mxu0 %v1755
    %1778 = vmatmul.f32.gmra.mxu0 %v1760
    %v1779 = vpop.f32.mrf.mxu0
    %v1780 = vadd.f32 0.0, %v1779
    %1781 = vdwg.mxu0
    %1782 = vmatpush.msra.mxu0 0.0
    %1783 = vmatpush.msra.mxu0 0.0
    %1784 = vmatpush.msra.mxu0 0.0
    %1785 = vmatpush.msra.mxu0 0.0
    %1786 = vmatpush.msra.mxu0 0.0
    %1787 = vmatpush.msra.mxu0 0.0
    %1788 = vmatpush.msra.mxu0 0.0
    %1789 = vmatpush.msra.mxu0 0.0
    %1790 = vmatpush.msra.mxu0 0.0
    %1791 = vmatpush.msra.mxu0 0.0
    %1792 = vmatpush.msra.mxu0 0.0
    %1793 = vmatpush.msra.mxu0 0.0
    %1794 = vmatpush.msra.mxu0 0.0
    %1795 = vmatpush.msra.mxu0 0.0
    %1796 = vmatpush.msra.mxu0 0.0
    %1797 = vmatpush.msra.mxu0 %v1754
    %1798 = vmatmul.f32.gmra.mxu0 %v1760
    %v1799 = vpop.f32.mrf.mxu0
    %v1800 = vadd.f32 0.0, %v1799
    %1801 = vdwg.mxu0
    %1802 = vmatpush.msra.mxu0 0.0
    %1803 = vmatpush.msra.mxu0 0.0
    %1804 = vmatpush.msra.mxu0 0.0
    %1805 = vmatpush.msra.mxu0 0.0
    %1806 = vmatpush.msra.mxu0 0.0
    %1807 = vmatpush.msra.mxu0 0.0
    %1808 = vmatpush.msra.mxu0 0.0
    %1809 = vmatpush.msra.mxu0 0.0
    %1810 = vmatpush.msra.mxu0 0.0
    %1811 = vmatpush.msra.mxu0 0.0
    %1812 = vmatpush.msra.mxu0 0.0
    %1813 = vmatpush.msra.mxu0 0.0
    %1814 = vmatpush.msra.mxu0 0.0
    %1815 = vmatpush.msra.mxu0 0.0
    %1816 = vmatpush.msra.mxu0 0.0
    %1817 = vmatpush.msra.mxu0 %v1753
    %1818 = vmatmul.f32.gmra.mxu0 %v1760
    %v1819 = vpop.f32.mrf.mxu0
    %v1820 = vadd.f32 0.0, %v1819
    %1821 = vdwg.mxu0
    %1822 = vmatpush.msra.mxu0 0.0
    %1823 = vmatpush.msra.mxu0 0.0
    %1824 = vmatpush.msra.mxu0 0.0
    %1825 = vmatpush.msra.mxu0 0.0
    %1826 = vmatpush.msra.mxu0 0.0
    %1827 = vmatpush.msra.mxu0 0.0
    %1828 = vmatpush.msra.mxu0 0.0
    %1829 = vmatpush.msra.mxu0 0.0
    %1830 = vmatpush.msra.mxu0 0.0
    %1831 = vmatpush.msra.mxu0 0.0
    %1832 = vmatpush.msra.mxu0 0.0
    %1833 = vmatpush.msra.mxu0 0.0
    %1834 = vmatpush.msra.mxu0 0.0
    %1835 = vmatpush.msra.mxu0 0.0
    %1836 = vmatpush.msra.mxu0 0.0
    %1837 = vmatpush.msra.mxu0 %v1752
    %1838 = vmatmul.f32.gmra.mxu0 %v1760
    %v1839 = vpop.f32.mrf.mxu0
    %v1840 = vadd.f32 0.0, %v1839
    %1841 = vdwg.mxu0
    %1842 = vmatpush.msra.mxu0 0.0
    %1843 = vmatpush.msra.mxu0 0.0
    %1844 = vmatpush.msra.mxu0 0.0
    %1845 = vmatpush.msra.mxu0 0.0
    %1846 = vmatpush.msra.mxu0 0.0
    %1847 = vmatpush.msra.mxu0 0.0
    %1848 = vmatpush.msra.mxu0 0.0
    %1849 = vmatpush.msra.mxu0 0.0
    %1850 = vmatpush.msra.mxu0 0.0
    %1851 = vmatpush.msra.mxu0 0.0
    %1852 = vmatpush.msra.mxu0 0.0
    %1853 = vmatpush.msra.mxu0 0.0
    %1854 = vmatpush.msra.mxu0 0.0
    %1855 = vmatpush.msra.mxu0 0.0
    %1856 = vmatpush.msra.mxu0 0.0
    %1857 = vmatpush.msra.mxu0 %v1751
    %1858 = vmatmul.f32.gmra.mxu0 %v1760
    %v1859 = vpop.f32.mrf.mxu0
    %v1860 = vadd.f32 0.0, %v1859
    %1861 = vdwg.mxu0
    %1862 = vmatpush.msra.mxu0 0.0
    %1863 = vmatpush.msra.mxu0 0.0
    %1864 = vmatpush.msra.mxu0 0.0
    %1865 = vmatpush.msra.mxu0 0.0
    %1866 = vmatpush.msra.mxu0 0.0
    %1867 = vmatpush.msra.mxu0 0.0
    %1868 = vmatpush.msra.mxu0 0.0
    %1869 = vmatpush.msra.mxu0 0.0
    %1870 = vmatpush.msra.mxu0 0.0
    %1871 = vmatpush.msra.mxu0 0.0
    %1872 = vmatpush.msra.mxu0 0.0
    %1873 = vmatpush.msra.mxu0 0.0
    %1874 = vmatpush.msra.mxu0 0.0
    %1875 = vmatpush.msra.mxu0 0.0
    %1876 = vmatpush.msra.mxu0 0.0
    %1877 = vmatpush.msra.mxu0 %v1750
    %1878 = vmatmul.f32.gmra.mxu0 %v1760
    %v1879 = vpop.f32.mrf.mxu0
    %v1880 = vadd.f32 0.0, %v1879
    %1881 = vdwg.mxu0
    %v1883 = vsel %vm1758, %v1737, 0
    %1885 = vmatpush.msra.mxu0 0.0
    %1886 = vmatpush.msra.mxu0 0.0
    %1887 = vmatpush.msra.mxu0 0.0
    %1888 = vmatpush.msra.mxu0 0.0
    %1889 = vmatpush.msra.mxu0 0.0
    %1890 = vmatpush.msra.mxu0 0.0
    %1891 = vmatpush.msra.mxu0 0.0
    %1892 = vmatpush.msra.mxu0 0.0
    %1893 = vmatpush.msra.mxu0 0.0
    %1894 = vmatpush.msra.mxu0 0.0
    %1895 = vmatpush.msra.mxu0 0.0
    %1896 = vmatpush.msra.mxu0 0.0
    %1897 = vmatpush.msra.mxu0 0.0
    %1898 = vmatpush.msra.mxu0 0.0
    %1899 = vmatpush.msra.mxu0 0.0
    %1900 = vmatpush.msra.mxu0 %v1736
    %1901 = vmatmul.f32.gmra.mxu0 %v1883
    %v1902 = vpop.f32.mrf.mxu0
    %v1903 = vadd.f32 %v1780, %v1902
    %1904 = vdwg.mxu0
    %1905 = vmatpush.msra.mxu0 0.0
    %1906 = vmatpush.msra.mxu0 0.0
    %1907 = vmatpush.msra.mxu0 0.0
    %1908 = vmatpush.msra.mxu0 0.0
    %1909 = vmatpush.msra.mxu0 0.0
    %1910 = vmatpush.msra.mxu0 0.0
    %1911 = vmatpush.msra.mxu0 0.0
    %1912 = vmatpush.msra.mxu0 0.0
    %1913 = vmatpush.msra.mxu0 0.0
    %1914 = vmatpush.msra.mxu0 0.0
    %1915 = vmatpush.msra.mxu0 0.0
    %1916 = vmatpush.msra.mxu0 0.0
    %1917 = vmatpush.msra.mxu0 0.0
    %1918 = vmatpush.msra.mxu0 0.0
    %1919 = vmatpush.msra.mxu0 0.0
    %1920 = vmatpush.msra.mxu0 %v1735
    %1921 = vmatmul.f32.gmra.mxu0 %v1883
    %v1922 = vpop.f32.mrf.mxu0
    %v1923 = vadd.f32 %v1800, %v1922
    %1924 = vdwg.mxu0
    %1925 = vmatpush.msra.mxu0 0.0
    %1926 = vmatpush.msra.mxu0 0.0
    %1927 = vmatpush.msra.mxu0 0.0
    %1928 = vmatpush.msra.mxu0 0.0
    %1929 = vmatpush.msra.mxu0 0.0
    %1930 = vmatpush.msra.mxu0 0.0
    %1931 = vmatpush.msra.mxu0 0.0
    %1932 = vmatpush.msra.mxu0 0.0
    %1933 = vmatpush.msra.mxu0 0.0
    %1934 = vmatpush.msra.mxu0 0.0
    %1935 = vmatpush.msra.mxu0 0.0
    %1936 = vmatpush.msra.mxu0 0.0
    %1937 = vmatpush.msra.mxu0 0.0
    %1938 = vmatpush.msra.mxu0 0.0
    %1939 = vmatpush.msra.mxu0 0.0
    %1940 = vmatpush.msra.mxu0 %v1734
    %1941 = vmatmul.f32.gmra.mxu0 %v1883
    %v1942 = vpop.f32.mrf.mxu0
    %v1943 = vadd.f32 %v1820, %v1942
    %1944 = vdwg.mxu0
    %1945 = vmatpush.msra.mxu0 0.0
    %1946 = vmatpush.msra.mxu0 0.0
    %1947 = vmatpush.msra.mxu0 0.0
    %1948 = vmatpush.msra.mxu0 0.0
    %1949 = vmatpush.msra.mxu0 0.0
    %1950 = vmatpush.msra.mxu0 0.0
    %1951 = vmatpush.msra.mxu0 0.0
    %1952 = vmatpush.msra.mxu0 0.0
    %1953 = vmatpush.msra.mxu0 0.0
    %1954 = vmatpush.msra.mxu0 0.0
    %1955 = vmatpush.msra.mxu0 0.0
    %1956 = vmatpush.msra.mxu0 0.0
    %1957 = vmatpush.msra.mxu0 0.0
    %1958 = vmatpush.msra.mxu0 0.0
    %1959 = vmatpush.msra.mxu0 0.0
    %1960 = vmatpush.msra.mxu0 %v1733
    %1961 = vmatmul.f32.gmra.mxu0 %v1883
    %v1962 = vpop.f32.mrf.mxu0
    %v1963 = vadd.f32 %v1840, %v1962
    %1964 = vdwg.mxu0
    %1965 = vmatpush.msra.mxu0 0.0
    %1966 = vmatpush.msra.mxu0 0.0
    %1967 = vmatpush.msra.mxu0 0.0
    %1968 = vmatpush.msra.mxu0 0.0
    %1969 = vmatpush.msra.mxu0 0.0
    %1970 = vmatpush.msra.mxu0 0.0
    %1971 = vmatpush.msra.mxu0 0.0
    %1972 = vmatpush.msra.mxu0 0.0
    %1973 = vmatpush.msra.mxu0 0.0
    %1974 = vmatpush.msra.mxu0 0.0
    %1975 = vmatpush.msra.mxu0 0.0
    %1976 = vmatpush.msra.mxu0 0.0
    %1977 = vmatpush.msra.mxu0 0.0
    %1978 = vmatpush.msra.mxu0 0.0
    %1979 = vmatpush.msra.mxu0 0.0
    %1980 = vmatpush.msra.mxu0 %v1732
    %1981 = vmatmul.f32.gmra.mxu0 %v1883
    %v1982 = vpop.f32.mrf.mxu0
    %v1983 = vadd.f32 %v1860, %v1982
    %1984 = vdwg.mxu0
    %1985 = vmatpush.msra.mxu0 0.0
    %1986 = vmatpush.msra.mxu0 0.0
    %1987 = vmatpush.msra.mxu0 0.0
    %1988 = vmatpush.msra.mxu0 0.0
    %1989 = vmatpush.msra.mxu0 0.0
    %1990 = vmatpush.msra.mxu0 0.0
    %1991 = vmatpush.msra.mxu0 0.0
    %1992 = vmatpush.msra.mxu0 0.0
    %1993 = vmatpush.msra.mxu0 0.0
    %1994 = vmatpush.msra.mxu0 0.0
    %1995 = vmatpush.msra.mxu0 0.0
    %1996 = vmatpush.msra.mxu0 0.0
    %1997 = vmatpush.msra.mxu0 0.0
    %1998 = vmatpush.msra.mxu0 0.0
    %1999 = vmatpush.msra.mxu0 0.0
    %2000 = vmatpush.msra.mxu0 %v1731
    %2001 = vmatmul.f32.gmra.mxu0 %v1883
    %v2002 = vpop.f32.mrf.mxu0
    %v2003 = vadd.f32 %v1880, %v2002
    %2004 = vdwg.mxu0
    %2005 = vrot.lane.b32.xlu0 %v1713, 17
    %v2006 = vpop.permute.xlu0 %2005
    %2007 = vrot.lane.b32.xlu0 %v1714, 17
    %v2008 = vpop.permute.xlu0 %2007
    %2009 = vrot.lane.b32.xlu0 %v1715, 17
    %v2010 = vpop.permute.xlu0 %2009
    %2011 = vrot.lane.b32.xlu0 %v1716, 17
    %v2012 = vpop.permute.xlu0 %2011
    %2013 = vrot.lane.b32.xlu0 %v1717, 17
    %v2014 = vpop.permute.xlu0 %2013
    %2015 = vrot.lane.b32.xlu0 %v1718, 17
    %v2016 = vpop.permute.xlu0 %2015
    %v2017 = vsel %vm447, %v2014, %v2016
    %v2018 = vsel %vm447, %v2012, %v2014
    %v2019 = vsel %vm447, %v2010, %v2012
    %v2020 = vsel %vm447, %v2008, %v2010
    %v2021 = vsel %vm447, %v2006, %v2008
    %v2022 = vsel %vm447, %v2016, %v2006
    %s2023 = scalar_lea.vmem %s4, 16
    %v2024 = vld [vmem:[%s2023] sm:$0xff]
    %v2026 = vsel %vm1758, %v2024, 0
    %2028 = vmatpush.msra.mxu0 0.0
    %2029 = vmatpush.msra.mxu0 0.0
    %2030 = vmatpush.msra.mxu0 0.0
    %2031 = vmatpush.msra.mxu0 0.0
    %2032 = vmatpush.msra.mxu0 0.0
    %2033 = vmatpush.msra.mxu0 0.0
    %2034 = vmatpush.msra.mxu0 0.0
    %2035 = vmatpush.msra.mxu0 0.0
    %2036 = vmatpush.msra.mxu0 0.0
    %2037 = vmatpush.msra.mxu0 0.0
    %2038 = vmatpush.msra.mxu0 0.0
    %2039 = vmatpush.msra.mxu0 0.0
    %2040 = vmatpush.msra.mxu0 0.0
    %2041 = vmatpush.msra.mxu0 0.0
    %2042 = vmatpush.msra.mxu0 0.0
    %2043 = vmatpush.msra.mxu0 %v2022
    %2044 = vmatmul.f32.gmra.mxu0 %v2026
    %v2045 = vpop.f32.mrf.mxu0
    %v2046 = vadd.f32 0.0, %v2045
    %2047 = vdwg.mxu0
    %2048 = vmatpush.msra.mxu0 0.0
    %2049 = vmatpush.msra.mxu0 0.0
    %2050 = vmatpush.msra.mxu0 0.0
    %2051 = vmatpush.msra.mxu0 0.0
    %2052 = vmatpush.msra.mxu0 0.0
    %2053 = vmatpush.msra.mxu0 0.0
    %2054 = vmatpush.msra.mxu0 0.0
    %2055 = vmatpush.msra.mxu0 0.0
    %2056 = vmatpush.msra.mxu0 0.0
    %2057 = vmatpush.msra.mxu0 0.0
    %2058 = vmatpush.msra.mxu0 0.0
    %2059 = vmatpush.msra.mxu0 0.0
    %2060 = vmatpush.msra.mxu0 0.0
    %2061 = vmatpush.msra.mxu0 0.0
    %2062 = vmatpush.msra.mxu0 0.0
    %2063 = vmatpush.msra.mxu0 %v2021
    %2064 = vmatmul.f32.gmra.mxu0 %v2026
    %v2065 = vpop.f32.mrf.mxu0
    %v2066 = vadd.f32 0.0, %v2065
    %2067 = vdwg.mxu0
    %2068 = vmatpush.msra.mxu0 0.0
    %2069 = vmatpush.msra.mxu0 0.0
    %2070 = vmatpush.msra.mxu0 0.0
    %2071 = vmatpush.msra.mxu0 0.0
    %2072 = vmatpush.msra.mxu0 0.0
    %2073 = vmatpush.msra.mxu0 0.0
    %2074 = vmatpush.msra.mxu0 0.0
    %2075 = vmatpush.msra.mxu0 0.0
    %2076 = vmatpush.msra.mxu0 0.0
    %2077 = vmatpush.msra.mxu0 0.0
    %2078 = vmatpush.msra.mxu0 0.0
    %2079 = vmatpush.msra.mxu0 0.0
    %2080 = vmatpush.msra.mxu0 0.0
    %2081 = vmatpush.msra.mxu0 0.0
    %2082 = vmatpush.msra.mxu0 0.0
    %2083 = vmatpush.msra.mxu0 %v2020
    %2084 = vmatmul.f32.gmra.mxu0 %v2026
    %v2085 = vpop.f32.mrf.mxu0
    %v2086 = vadd.f32 0.0, %v2085
    %2087 = vdwg.mxu0
    %2088 = vmatpush.msra.mxu0 0.0
    %2089 = vmatpush.msra.mxu0 0.0
    %2090 = vmatpush.msra.mxu0 0.0
    %2091 = vmatpush.msra.mxu0 0.0
    %2092 = vmatpush.msra.mxu0 0.0
    %2093 = vmatpush.msra.mxu0 0.0
    %2094 = vmatpush.msra.mxu0 0.0
    %2095 = vmatpush.msra.mxu0 0.0
    %2096 = vmatpush.msra.mxu0 0.0
    %2097 = vmatpush.msra.mxu0 0.0
    %2098 = vmatpush.msra.mxu0 0.0
    %2099 = vmatpush.msra.mxu0 0.0
    %2100 = vmatpush.msra.mxu0 0.0
    %2101 = vmatpush.msra.mxu0 0.0
    %2102 = vmatpush.msra.mxu0 0.0
    %2103 = vmatpush.msra.mxu0 %v2019
    %2104 = vmatmul.f32.gmra.mxu0 %v2026
    %v2105 = vpop.f32.mrf.mxu0
    %v2106 = vadd.f32 0.0, %v2105
    %2107 = vdwg.mxu0
    %2108 = vmatpush.msra.mxu0 0.0
    %2109 = vmatpush.msra.mxu0 0.0
    %2110 = vmatpush.msra.mxu0 0.0
    %2111 = vmatpush.msra.mxu0 0.0
    %2112 = vmatpush.msra.mxu0 0.0
    %2113 = vmatpush.msra.mxu0 0.0
    %2114 = vmatpush.msra.mxu0 0.0
    %2115 = vmatpush.msra.mxu0 0.0
    %2116 = vmatpush.msra.mxu0 0.0
    %2117 = vmatpush.msra.mxu0 0.0
    %2118 = vmatpush.msra.mxu0 0.0
    %2119 = vmatpush.msra.mxu0 0.0
    %2120 = vmatpush.msra.mxu0 0.0
    %2121 = vmatpush.msra.mxu0 0.0
    %2122 = vmatpush.msra.mxu0 0.0
    %2123 = vmatpush.msra.mxu0 %v2018
    %2124 = vmatmul.f32.gmra.mxu0 %v2026
    %v2125 = vpop.f32.mrf.mxu0
    %v2126 = vadd.f32 0.0, %v2125
    %2127 = vdwg.mxu0
    %2128 = vmatpush.msra.mxu0 0.0
    %2129 = vmatpush.msra.mxu0 0.0
    %2130 = vmatpush.msra.mxu0 0.0
    %2131 = vmatpush.msra.mxu0 0.0
    %2132 = vmatpush.msra.mxu0 0.0
    %2133 = vmatpush.msra.mxu0 0.0
    %2134 = vmatpush.msra.mxu0 0.0
    %2135 = vmatpush.msra.mxu0 0.0
    %2136 = vmatpush.msra.mxu0 0.0
    %2137 = vmatpush.msra.mxu0 0.0
    %2138 = vmatpush.msra.mxu0 0.0
    %2139 = vmatpush.msra.mxu0 0.0
    %2140 = vmatpush.msra.mxu0 0.0
    %2141 = vmatpush.msra.mxu0 0.0
    %2142 = vmatpush.msra.mxu0 0.0
    %2143 = vmatpush.msra.mxu0 %v2017
    %2144 = vmatmul.f32.gmra.mxu0 %v2026
    %v2145 = vpop.f32.mrf.mxu0
    %v2146 = vadd.f32 0.0, %v2145
    %2147 = vdwg.mxu0
    %v2148 = vadd.f32 %v1903, %v2046
    %v2149 = vadd.f32 %v1923, %v2066
    %v2150 = vadd.f32 %v1943, %v2086
    %v2151 = vadd.f32 %v1963, %v2106
    %v2152 = vadd.f32 %v1983, %v2126
    %v2153 = vadd.f32 %v2003, %v2146
    %2154 = vrot.lane.b32.xlu0 %v1713, 1
    %v2155 = vpop.permute.xlu0 %2154
    %2156 = vrot.lane.b32.xlu0 %v1714, 1
    %v2157 = vpop.permute.xlu0 %2156
    %2158 = vrot.lane.b32.xlu0 %v1715, 1
    %v2159 = vpop.permute.xlu0 %2158
    %2160 = vrot.lane.b32.xlu0 %v1716, 1
    %v2161 = vpop.permute.xlu0 %2160
    %2162 = vrot.lane.b32.xlu0 %v1717, 1
    %v2163 = vpop.permute.xlu0 %2162
    %2164 = vrot.lane.b32.xlu0 %v1718, 1
    %v2165 = vpop.permute.xlu0 %2164
    %v2166 = vsel %vm632, %v2163, %v2165
    %v2167 = vsel %vm632, %v2161, %v2163
    %v2168 = vsel %vm632, %v2159, %v2161
    %v2169 = vsel %vm632, %v2157, %v2159
    %v2170 = vsel %vm632, %v2155, %v2157
    %v2171 = vsel %vm632, %v2165, %v2155
    %s2172 = scalar_lea.vmem %s4, 24
    %v2173 = vld [vmem:[%s2172] sm:$0xff]
    %v2175 = vsel %vm1758, %v2173, 0
    %2177 = vmatpush.msra.mxu0 0.0
    %2178 = vmatpush.msra.mxu0 0.0
    %2179 = vmatpush.msra.mxu0 0.0
    %2180 = vmatpush.msra.mxu0 0.0
    %2181 = vmatpush.msra.mxu0 0.0
    %2182 = vmatpush.msra.mxu0 0.0
    %2183 = vmatpush.msra.mxu0 0.0
    %2184 = vmatpush.msra.mxu0 0.0
    %2185 = vmatpush.msra.mxu0 0.0
    %2186 = vmatpush.msra.mxu0 0.0
    %2187 = vmatpush.msra.mxu0 0.0
    %2188 = vmatpush.msra.mxu0 0.0
    %2189 = vmatpush.msra.mxu0 0.0
    %2190 = vmatpush.msra.mxu0 0.0
    %2191 = vmatpush.msra.mxu0 0.0
    %2192 = vmatpush.msra.mxu0 %v2171
    %2193 = vmatmul.f32.gmra.mxu0 %v2175
    %v2194 = vpop.f32.mrf.mxu0
    %v2195 = vadd.f32 0.0, %v2194
    %2196 = vdwg.mxu0
    %2197 = vmatpush.msra.mxu0 0.0
    %2198 = vmatpush.msra.mxu0 0.0
    %2199 = vmatpush.msra.mxu0 0.0
    %2200 = vmatpush.msra.mxu0 0.0
    %2201 = vmatpush.msra.mxu0 0.0
    %2202 = vmatpush.msra.mxu0 0.0
    %2203 = vmatpush.msra.mxu0 0.0
    %2204 = vmatpush.msra.mxu0 0.0
    %2205 = vmatpush.msra.mxu0 0.0
    %2206 = vmatpush.msra.mxu0 0.0
    %2207 = vmatpush.msra.mxu0 0.0
    %2208 = vmatpush.msra.mxu0 0.0
    %2209 = vmatpush.msra.mxu0 0.0
    %2210 = vmatpush.msra.mxu0 0.0
    %2211 = vmatpush.msra.mxu0 0.0
    %2212 = vmatpush.msra.mxu0 %v2170
    %2213 = vmatmul.f32.gmra.mxu0 %v2175
    %v2214 = vpop.f32.mrf.mxu0
    %v2215 = vadd.f32 0.0, %v2214
    %2216 = vdwg.mxu0
    %2217 = vmatpush.msra.mxu0 0.0
    %2218 = vmatpush.msra.mxu0 0.0
    %2219 = vmatpush.msra.mxu0 0.0
    %2220 = vmatpush.msra.mxu0 0.0
    %2221 = vmatpush.msra.mxu0 0.0
    %2222 = vmatpush.msra.mxu0 0.0
    %2223 = vmatpush.msra.mxu0 0.0
    %2224 = vmatpush.msra.mxu0 0.0
    %2225 = vmatpush.msra.mxu0 0.0
    %2226 = vmatpush.msra.mxu0 0.0
    %2227 = vmatpush.msra.mxu0 0.0
    %2228 = vmatpush.msra.mxu0 0.0
    %2229 = vmatpush.msra.mxu0 0.0
    %2230 = vmatpush.msra.mxu0 0.0
    %2231 = vmatpush.msra.mxu0 0.0
    %2232 = vmatpush.msra.mxu0 %v2169
    %2233 = vmatmul.f32.gmra.mxu0 %v2175
    %v2234 = vpop.f32.mrf.mxu0
    %v2235 = vadd.f32 0.0, %v2234
    %2236 = vdwg.mxu0
    %2237 = vmatpush.msra.mxu0 0.0
    %2238 = vmatpush.msra.mxu0 0.0
    %2239 = vmatpush.msra.mxu0 0.0
    %2240 = vmatpush.msra.mxu0 0.0
    %2241 = vmatpush.msra.mxu0 0.0
    %2242 = vmatpush.msra.mxu0 0.0
    %2243 = vmatpush.msra.mxu0 0.0
    %2244 = vmatpush.msra.mxu0 0.0
    %2245 = vmatpush.msra.mxu0 0.0
    %2246 = vmatpush.msra.mxu0 0.0
    %2247 = vmatpush.msra.mxu0 0.0
    %2248 = vmatpush.msra.mxu0 0.0
    %2249 = vmatpush.msra.mxu0 0.0
    %2250 = vmatpush.msra.mxu0 0.0
    %2251 = vmatpush.msra.mxu0 0.0
    %2252 = vmatpush.msra.mxu0 %v2168
    %2253 = vmatmul.f32.gmra.mxu0 %v2175
    %v2254 = vpop.f32.mrf.mxu0
    %v2255 = vadd.f32 0.0, %v2254
    %2256 = vdwg.mxu0
    %2257 = vmatpush.msra.mxu0 0.0
    %2258 = vmatpush.msra.mxu0 0.0
    %2259 = vmatpush.msra.mxu0 0.0
    %2260 = vmatpush.msra.mxu0 0.0
    %2261 = vmatpush.msra.mxu0 0.0
    %2262 = vmatpush.msra.mxu0 0.0
    %2263 = vmatpush.msra.mxu0 0.0
    %2264 = vmatpush.msra.mxu0 0.0
    %2265 = vmatpush.msra.mxu0 0.0
    %2266 = vmatpush.msra.mxu0 0.0
    %2267 = vmatpush.msra.mxu0 0.0
    %2268 = vmatpush.msra.mxu0 0.0
    %2269 = vmatpush.msra.mxu0 0.0
    %2270 = vmatpush.msra.mxu0 0.0
    %2271 = vmatpush.msra.mxu0 0.0
    %2272 = vmatpush.msra.mxu0 %v2167
    %2273 = vmatmul.f32.gmra.mxu0 %v2175
    %v2274 = vpop.f32.mrf.mxu0
    %v2275 = vadd.f32 0.0, %v2274
    %2276 = vdwg.mxu0
    %2277 = vmatpush.msra.mxu0 0.0
    %2278 = vmatpush.msra.mxu0 0.0
    %2279 = vmatpush.msra.mxu0 0.0
    %2280 = vmatpush.msra.mxu0 0.0
    %2281 = vmatpush.msra.mxu0 0.0
    %2282 = vmatpush.msra.mxu0 0.0
    %2283 = vmatpush.msra.mxu0 0.0
    %2284 = vmatpush.msra.mxu0 0.0
    %2285 = vmatpush.msra.mxu0 0.0
    %2286 = vmatpush.msra.mxu0 0.0
    %2287 = vmatpush.msra.mxu0 0.0
    %2288 = vmatpush.msra.mxu0 0.0
    %2289 = vmatpush.msra.mxu0 0.0
    %2290 = vmatpush.msra.mxu0 0.0
    %2291 = vmatpush.msra.mxu0 0.0
    %2292 = vmatpush.msra.mxu0 %v2166
    %2293 = vmatmul.f32.gmra.mxu0 %v2175
    %v2294 = vpop.f32.mrf.mxu0
    %v2295 = vadd.f32 0.0, %v2294
    %2296 = vdwg.mxu0
    %v2297 = vadd.f32 %v2148, %v2195
    %v2298 = vadd.f32 %v2149, %v2215
    %v2299 = vadd.f32 %v2150, %v2235
    %v2300 = vadd.f32 %v2151, %v2255
    %v2301 = vadd.f32 %v2152, %v2275
    %v2302 = vadd.f32 %v2153, %v2295
    %s2303 = scalar_lea.vmem %s4, 32
    %v2304 = vld [vmem:[%s2303] sm:$0xff]
    %v2306 = vsel %vm1758, %v2304, 0
    %2308 = vmatpush.msra.mxu0 0.0
    %2309 = vmatpush.msra.mxu0 0.0
    %2310 = vmatpush.msra.mxu0 0.0
    %2311 = vmatpush.msra.mxu0 0.0
    %2312 = vmatpush.msra.mxu0 0.0
    %2313 = vmatpush.msra.mxu0 0.0
    %2314 = vmatpush.msra.mxu0 0.0
    %2315 = vmatpush.msra.mxu0 0.0
    %2316 = vmatpush.msra.mxu0 0.0
    %2317 = vmatpush.msra.mxu0 0.0
    %2318 = vmatpush.msra.mxu0 0.0
    %2319 = vmatpush.msra.mxu0 0.0
    %2320 = vmatpush.msra.mxu0 0.0
    %2321 = vmatpush.msra.mxu0 0.0
    %2322 = vmatpush.msra.mxu0 0.0
    %2323 = vmatpush.msra.mxu0 %v1713
    %2324 = vmatmul.f32.gmra.mxu0 %v2306
    %v2325 = vpop.f32.mrf.mxu0
    %v2326 = vadd.f32 0.0, %v2325
    %2327 = vdwg.mxu0
    %2328 = vmatpush.msra.mxu0 0.0
    %2329 = vmatpush.msra.mxu0 0.0
    %2330 = vmatpush.msra.mxu0 0.0
    %2331 = vmatpush.msra.mxu0 0.0
    %2332 = vmatpush.msra.mxu0 0.0
    %2333 = vmatpush.msra.mxu0 0.0
    %2334 = vmatpush.msra.mxu0 0.0
    %2335 = vmatpush.msra.mxu0 0.0
    %2336 = vmatpush.msra.mxu0 0.0
    %2337 = vmatpush.msra.mxu0 0.0
    %2338 = vmatpush.msra.mxu0 0.0
    %2339 = vmatpush.msra.mxu0 0.0
    %2340 = vmatpush.msra.mxu0 0.0
    %2341 = vmatpush.msra.mxu0 0.0
    %2342 = vmatpush.msra.mxu0 0.0
    %2343 = vmatpush.msra.mxu0 %v1714
    %2344 = vmatmul.f32.gmra.mxu0 %v2306
    %v2345 = vpop.f32.mrf.mxu0
    %v2346 = vadd.f32 0.0, %v2345
    %2347 = vdwg.mxu0
    %2348 = vmatpush.msra.mxu0 0.0
    %2349 = vmatpush.msra.mxu0 0.0
    %2350 = vmatpush.msra.mxu0 0.0
    %2351 = vmatpush.msra.mxu0 0.0
    %2352 = vmatpush.msra.mxu0 0.0
    %2353 = vmatpush.msra.mxu0 0.0
    %2354 = vmatpush.msra.mxu0 0.0
    %2355 = vmatpush.msra.mxu0 0.0
    %2356 = vmatpush.msra.mxu0 0.0
    %2357 = vmatpush.msra.mxu0 0.0
    %2358 = vmatpush.msra.mxu0 0.0
    %2359 = vmatpush.msra.mxu0 0.0
    %2360 = vmatpush.msra.mxu0 0.0
    %2361 = vmatpush.msra.mxu0 0.0
    %2362 = vmatpush.msra.mxu0 0.0
    %2363 = vmatpush.msra.mxu0 %v1715
    %2364 = vmatmul.f32.gmra.mxu0 %v2306
    %v2365 = vpop.f32.mrf.mxu0
    %v2366 = vadd.f32 0.0, %v2365
    %2367 = vdwg.mxu0
    %2368 = vmatpush.msra.mxu0 0.0
    %2369 = vmatpush.msra.mxu0 0.0
    %2370 = vmatpush.msra.mxu0 0.0
    %2371 = vmatpush.msra.mxu0 0.0
    %2372 = vmatpush.msra.mxu0 0.0
    %2373 = vmatpush.msra.mxu0 0.0
    %2374 = vmatpush.msra.mxu0 0.0
    %2375 = vmatpush.msra.mxu0 0.0
    %2376 = vmatpush.msra.mxu0 0.0
    %2377 = vmatpush.msra.mxu0 0.0
    %2378 = vmatpush.msra.mxu0 0.0
    %2379 = vmatpush.msra.mxu0 0.0
    %2380 = vmatpush.msra.mxu0 0.0
    %2381 = vmatpush.msra.mxu0 0.0
    %2382 = vmatpush.msra.mxu0 0.0
    %2383 = vmatpush.msra.mxu0 %v1716
    %2384 = vmatmul.f32.gmra.mxu0 %v2306
    %v2385 = vpop.f32.mrf.mxu0
    %v2386 = vadd.f32 0.0, %v2385
    %2387 = vdwg.mxu0
    %2388 = vmatpush.msra.mxu0 0.0
    %2389 = vmatpush.msra.mxu0 0.0
    %2390 = vmatpush.msra.mxu0 0.0
    %2391 = vmatpush.msra.mxu0 0.0
    %2392 = vmatpush.msra.mxu0 0.0
    %2393 = vmatpush.msra.mxu0 0.0
    %2394 = vmatpush.msra.mxu0 0.0
    %2395 = vmatpush.msra.mxu0 0.0
    %2396 = vmatpush.msra.mxu0 0.0
    %2397 = vmatpush.msra.mxu0 0.0
    %2398 = vmatpush.msra.mxu0 0.0
    %2399 = vmatpush.msra.mxu0 0.0
    %2400 = vmatpush.msra.mxu0 0.0
    %2401 = vmatpush.msra.mxu0 0.0
    %2402 = vmatpush.msra.mxu0 0.0
    %2403 = vmatpush.msra.mxu0 %v1717
    %2404 = vmatmul.f32.gmra.mxu0 %v2306
    %v2405 = vpop.f32.mrf.mxu0
    %v2406 = vadd.f32 0.0, %v2405
    %2407 = vdwg.mxu0
    %2408 = vmatpush.msra.mxu0 0.0
    %2409 = vmatpush.msra.mxu0 0.0
    %2410 = vmatpush.msra.mxu0 0.0
    %2411 = vmatpush.msra.mxu0 0.0
    %2412 = vmatpush.msra.mxu0 0.0
    %2413 = vmatpush.msra.mxu0 0.0
    %2414 = vmatpush.msra.mxu0 0.0
    %2415 = vmatpush.msra.mxu0 0.0
    %2416 = vmatpush.msra.mxu0 0.0
    %2417 = vmatpush.msra.mxu0 0.0
    %2418 = vmatpush.msra.mxu0 0.0
    %2419 = vmatpush.msra.mxu0 0.0
    %2420 = vmatpush.msra.mxu0 0.0
    %2421 = vmatpush.msra.mxu0 0.0
    %2422 = vmatpush.msra.mxu0 0.0
    %2423 = vmatpush.msra.mxu0 %v1718
    %2424 = vmatmul.f32.gmra.mxu0 %v2306
    %v2425 = vpop.f32.mrf.mxu0
    %v2426 = vadd.f32 0.0, %v2425
    %2427 = vdwg.mxu0
    %v2428 = vadd.f32 %v2297, %v2326
    %v2429 = vadd.f32 %v2298, %v2346
    %v2430 = vadd.f32 %v2299, %v2366
    %v2431 = vadd.f32 %v2300, %v2386
    %v2432 = vadd.f32 %v2301, %v2406
    %v2433 = vadd.f32 %v2302, %v2426
    %2434 = vrot.lane.b32.xlu0 %v1713, 127
    %v2435 = vpop.permute.xlu0 %2434
    %2436 = vrot.lane.b32.xlu0 %v1714, 127
    %v2437 = vpop.permute.xlu0 %2436
    %2438 = vrot.lane.b32.xlu0 %v1715, 127
    %v2439 = vpop.permute.xlu0 %2438
    %2440 = vrot.lane.b32.xlu0 %v1716, 127
    %v2441 = vpop.permute.xlu0 %2440
    %2442 = vrot.lane.b32.xlu0 %v1717, 127
    %v2443 = vpop.permute.xlu0 %2442
    %2444 = vrot.lane.b32.xlu0 %v1718, 127
    %v2445 = vpop.permute.xlu0 %2444
    %v2446 = vsel %vm971, %v2443, %v2445
    %v2447 = vsel %vm971, %v2441, %v2443
    %v2448 = vsel %vm971, %v2439, %v2441
    %v2449 = vsel %vm971, %v2437, %v2439
    %v2450 = vsel %vm971, %v2435, %v2437
    %v2451 = vsel %vm971, %v2445, %v2435
    %s2452 = scalar_lea.vmem %s4, 40
    %v2453 = vld [vmem:[%s2452] sm:$0xff]
    %v2455 = vsel %vm1758, %v2453, 0
    %2457 = vmatpush.msra.mxu0 0.0
    %2458 = vmatpush.msra.mxu0 0.0
    %2459 = vmatpush.msra.mxu0 0.0
    %2460 = vmatpush.msra.mxu0 0.0
    %2461 = vmatpush.msra.mxu0 0.0
    %2462 = vmatpush.msra.mxu0 0.0
    %2463 = vmatpush.msra.mxu0 0.0
    %2464 = vmatpush.msra.mxu0 0.0
    %2465 = vmatpush.msra.mxu0 0.0
    %2466 = vmatpush.msra.mxu0 0.0
    %2467 = vmatpush.msra.mxu0 0.0
    %2468 = vmatpush.msra.mxu0 0.0
    %2469 = vmatpush.msra.mxu0 0.0
    %2470 = vmatpush.msra.mxu0 0.0
    %2471 = vmatpush.msra.mxu0 0.0
    %2472 = vmatpush.msra.mxu0 %v2450
    %2473 = vmatmul.f32.gmra.mxu0 %v2455
    %v2474 = vpop.f32.mrf.mxu0
    %v2475 = vadd.f32 0.0, %v2474
    %2476 = vdwg.mxu0
    %2477 = vmatpush.msra.mxu0 0.0
    %2478 = vmatpush.msra.mxu0 0.0
    %2479 = vmatpush.msra.mxu0 0.0
    %2480 = vmatpush.msra.mxu0 0.0
    %2481 = vmatpush.msra.mxu0 0.0
    %2482 = vmatpush.msra.mxu0 0.0
    %2483 = vmatpush.msra.mxu0 0.0
    %2484 = vmatpush.msra.mxu0 0.0
    %2485 = vmatpush.msra.mxu0 0.0
    %2486 = vmatpush.msra.mxu0 0.0
    %2487 = vmatpush.msra.mxu0 0.0
    %2488 = vmatpush.msra.mxu0 0.0
    %2489 = vmatpush.msra.mxu0 0.0
    %2490 = vmatpush.msra.mxu0 0.0
    %2491 = vmatpush.msra.mxu0 0.0
    %2492 = vmatpush.msra.mxu0 %v2449
    %2493 = vmatmul.f32.gmra.mxu0 %v2455
    %v2494 = vpop.f32.mrf.mxu0
    %v2495 = vadd.f32 0.0, %v2494
    %2496 = vdwg.mxu0
    %2497 = vmatpush.msra.mxu0 0.0
    %2498 = vmatpush.msra.mxu0 0.0
    %2499 = vmatpush.msra.mxu0 0.0
    %2500 = vmatpush.msra.mxu0 0.0
    %2501 = vmatpush.msra.mxu0 0.0
    %2502 = vmatpush.msra.mxu0 0.0
    %2503 = vmatpush.msra.mxu0 0.0
    %2504 = vmatpush.msra.mxu0 0.0
    %2505 = vmatpush.msra.mxu0 0.0
    %2506 = vmatpush.msra.mxu0 0.0
    %2507 = vmatpush.msra.mxu0 0.0
    %2508 = vmatpush.msra.mxu0 0.0
    %2509 = vmatpush.msra.mxu0 0.0
    %2510 = vmatpush.msra.mxu0 0.0
    %2511 = vmatpush.msra.mxu0 0.0
    %2512 = vmatpush.msra.mxu0 %v2448
    %2513 = vmatmul.f32.gmra.mxu0 %v2455
    %v2514 = vpop.f32.mrf.mxu0
    %v2515 = vadd.f32 0.0, %v2514
    %2516 = vdwg.mxu0
    %2517 = vmatpush.msra.mxu0 0.0
    %2518 = vmatpush.msra.mxu0 0.0
    %2519 = vmatpush.msra.mxu0 0.0
    %2520 = vmatpush.msra.mxu0 0.0
    %2521 = vmatpush.msra.mxu0 0.0
    %2522 = vmatpush.msra.mxu0 0.0
    %2523 = vmatpush.msra.mxu0 0.0
    %2524 = vmatpush.msra.mxu0 0.0
    %2525 = vmatpush.msra.mxu0 0.0
    %2526 = vmatpush.msra.mxu0 0.0
    %2527 = vmatpush.msra.mxu0 0.0
    %2528 = vmatpush.msra.mxu0 0.0
    %2529 = vmatpush.msra.mxu0 0.0
    %2530 = vmatpush.msra.mxu0 0.0
    %2531 = vmatpush.msra.mxu0 0.0
    %2532 = vmatpush.msra.mxu0 %v2447
    %2533 = vmatmul.f32.gmra.mxu0 %v2455
    %v2534 = vpop.f32.mrf.mxu0
    %v2535 = vadd.f32 0.0, %v2534
    %2536 = vdwg.mxu0
    %2537 = vmatpush.msra.mxu0 0.0
    %2538 = vmatpush.msra.mxu0 0.0
    %2539 = vmatpush.msra.mxu0 0.0
    %2540 = vmatpush.msra.mxu0 0.0
    %2541 = vmatpush.msra.mxu0 0.0
    %2542 = vmatpush.msra.mxu0 0.0
    %2543 = vmatpush.msra.mxu0 0.0
    %2544 = vmatpush.msra.mxu0 0.0
    %2545 = vmatpush.msra.mxu0 0.0
    %2546 = vmatpush.msra.mxu0 0.0
    %2547 = vmatpush.msra.mxu0 0.0
    %2548 = vmatpush.msra.mxu0 0.0
    %2549 = vmatpush.msra.mxu0 0.0
    %2550 = vmatpush.msra.mxu0 0.0
    %2551 = vmatpush.msra.mxu0 0.0
    %2552 = vmatpush.msra.mxu0 %v2446
    %2553 = vmatmul.f32.gmra.mxu0 %v2455
    %v2554 = vpop.f32.mrf.mxu0
    %v2555 = vadd.f32 0.0, %v2554
    %2556 = vdwg.mxu0
    %2557 = vmatpush.msra.mxu0 0.0
    %2558 = vmatpush.msra.mxu0 0.0
    %2559 = vmatpush.msra.mxu0 0.0
    %2560 = vmatpush.msra.mxu0 0.0
    %2561 = vmatpush.msra.mxu0 0.0
    %2562 = vmatpush.msra.mxu0 0.0
    %2563 = vmatpush.msra.mxu0 0.0
    %2564 = vmatpush.msra.mxu0 0.0
    %2565 = vmatpush.msra.mxu0 0.0
    %2566 = vmatpush.msra.mxu0 0.0
    %2567 = vmatpush.msra.mxu0 0.0
    %2568 = vmatpush.msra.mxu0 0.0
    %2569 = vmatpush.msra.mxu0 0.0
    %2570 = vmatpush.msra.mxu0 0.0
    %2571 = vmatpush.msra.mxu0 0.0
    %2572 = vmatpush.msra.mxu0 %v2451
    %2573 = vmatmul.f32.gmra.mxu0 %v2455
    %v2574 = vpop.f32.mrf.mxu0
    %v2575 = vadd.f32 0.0, %v2574
    %2576 = vdwg.mxu0
    %v2577 = vadd.f32 %v2428, %v2475
    %v2578 = vadd.f32 %v2429, %v2495
    %v2579 = vadd.f32 %v2430, %v2515
    %v2580 = vadd.f32 %v2431, %v2535
    %v2581 = vadd.f32 %v2432, %v2555
    %v2582 = vadd.f32 %v2433, %v2575
    %2583 = vrot.lane.b32.xlu0 %v1713, 111
    %v2584 = vpop.permute.xlu0 %2583
    %2585 = vrot.lane.b32.xlu0 %v1714, 111
    %v2586 = vpop.permute.xlu0 %2585
    %2587 = vrot.lane.b32.xlu0 %v1715, 111
    %v2588 = vpop.permute.xlu0 %2587
    %2589 = vrot.lane.b32.xlu0 %v1716, 111
    %v2590 = vpop.permute.xlu0 %2589
    %2591 = vrot.lane.b32.xlu0 %v1717, 111
    %v2592 = vpop.permute.xlu0 %2591
    %2593 = vrot.lane.b32.xlu0 %v1718, 111
    %v2594 = vpop.permute.xlu0 %2593
    %v2595 = vsel %vm1156, %v2592, %v2594
    %v2596 = vsel %vm1156, %v2590, %v2592
    %v2597 = vsel %vm1156, %v2588, %v2590
    %v2598 = vsel %vm1156, %v2586, %v2588
    %v2599 = vsel %vm1156, %v2584, %v2586
    %v2600 = vsel %vm1156, %v2594, %v2584
    %s2601 = scalar_lea.vmem %s4, 48
    %v2602 = vld [vmem:[%s2601] sm:$0xff]
    %v2604 = vsel %vm1758, %v2602, 0
    %2606 = vmatpush.msra.mxu0 0.0
    %2607 = vmatpush.msra.mxu0 0.0
    %2608 = vmatpush.msra.mxu0 0.0
    %2609 = vmatpush.msra.mxu0 0.0
    %2610 = vmatpush.msra.mxu0 0.0
    %2611 = vmatpush.msra.mxu0 0.0
    %2612 = vmatpush.msra.mxu0 0.0
    %2613 = vmatpush.msra.mxu0 0.0
    %2614 = vmatpush.msra.mxu0 0.0
    %2615 = vmatpush.msra.mxu0 0.0
    %2616 = vmatpush.msra.mxu0 0.0
    %2617 = vmatpush.msra.mxu0 0.0
    %2618 = vmatpush.msra.mxu0 0.0
    %2619 = vmatpush.msra.mxu0 0.0
    %2620 = vmatpush.msra.mxu0 0.0
    %2621 = vmatpush.msra.mxu0 %v2599
    %2622 = vmatmul.f32.gmra.mxu0 %v2604
    %v2623 = vpop.f32.mrf.mxu0
    %v2624 = vadd.f32 0.0, %v2623
    %2625 = vdwg.mxu0
    %2626 = vmatpush.msra.mxu0 0.0
    %2627 = vmatpush.msra.mxu0 0.0
    %2628 = vmatpush.msra.mxu0 0.0
    %2629 = vmatpush.msra.mxu0 0.0
    %2630 = vmatpush.msra.mxu0 0.0
    %2631 = vmatpush.msra.mxu0 0.0
    %2632 = vmatpush.msra.mxu0 0.0
    %2633 = vmatpush.msra.mxu0 0.0
    %2634 = vmatpush.msra.mxu0 0.0
    %2635 = vmatpush.msra.mxu0 0.0
    %2636 = vmatpush.msra.mxu0 0.0
    %2637 = vmatpush.msra.mxu0 0.0
    %2638 = vmatpush.msra.mxu0 0.0
    %2639 = vmatpush.msra.mxu0 0.0
    %2640 = vmatpush.msra.mxu0 0.0
    %2641 = vmatpush.msra.mxu0 %v2598
    %2642 = vmatmul.f32.gmra.mxu0 %v2604
    %v2643 = vpop.f32.mrf.mxu0
    %v2644 = vadd.f32 0.0, %v2643
    %2645 = vdwg.mxu0
    %2646 = vmatpush.msra.mxu0 0.0
    %2647 = vmatpush.msra.mxu0 0.0
    %2648 = vmatpush.msra.mxu0 0.0
    %2649 = vmatpush.msra.mxu0 0.0
    %2650 = vmatpush.msra.mxu0 0.0
    %2651 = vmatpush.msra.mxu0 0.0
    %2652 = vmatpush.msra.mxu0 0.0
    %2653 = vmatpush.msra.mxu0 0.0
    %2654 = vmatpush.msra.mxu0 0.0
    %2655 = vmatpush.msra.mxu0 0.0
    %2656 = vmatpush.msra.mxu0 0.0
    %2657 = vmatpush.msra.mxu0 0.0
    %2658 = vmatpush.msra.mxu0 0.0
    %2659 = vmatpush.msra.mxu0 0.0
    %2660 = vmatpush.msra.mxu0 0.0
    %2661 = vmatpush.msra.mxu0 %v2597
    %2662 = vmatmul.f32.gmra.mxu0 %v2604
    %v2663 = vpop.f32.mrf.mxu0
    %v2664 = vadd.f32 0.0, %v2663
    %2665 = vdwg.mxu0
    %2666 = vmatpush.msra.mxu0 0.0
    %2667 = vmatpush.msra.mxu0 0.0
    %2668 = vmatpush.msra.mxu0 0.0
    %2669 = vmatpush.msra.mxu0 0.0
    %2670 = vmatpush.msra.mxu0 0.0
    %2671 = vmatpush.msra.mxu0 0.0
    %2672 = vmatpush.msra.mxu0 0.0
    %2673 = vmatpush.msra.mxu0 0.0
    %2674 = vmatpush.msra.mxu0 0.0
    %2675 = vmatpush.msra.mxu0 0.0
    %2676 = vmatpush.msra.mxu0 0.0
    %2677 = vmatpush.msra.mxu0 0.0
    %2678 = vmatpush.msra.mxu0 0.0
    %2679 = vmatpush.msra.mxu0 0.0
    %2680 = vmatpush.msra.mxu0 0.0
    %2681 = vmatpush.msra.mxu0 %v2596
    %2682 = vmatmul.f32.gmra.mxu0 %v2604
    %v2683 = vpop.f32.mrf.mxu0
    %v2684 = vadd.f32 0.0, %v2683
    %2685 = vdwg.mxu0
    %2686 = vmatpush.msra.mxu0 0.0
    %2687 = vmatpush.msra.mxu0 0.0
    %2688 = vmatpush.msra.mxu0 0.0
    %2689 = vmatpush.msra.mxu0 0.0
    %2690 = vmatpush.msra.mxu0 0.0
    %2691 = vmatpush.msra.mxu0 0.0
    %2692 = vmatpush.msra.mxu0 0.0
    %2693 = vmatpush.msra.mxu0 0.0
    %2694 = vmatpush.msra.mxu0 0.0
    %2695 = vmatpush.msra.mxu0 0.0
    %2696 = vmatpush.msra.mxu0 0.0
    %2697 = vmatpush.msra.mxu0 0.0
    %2698 = vmatpush.msra.mxu0 0.0
    %2699 = vmatpush.msra.mxu0 0.0
    %2700 = vmatpush.msra.mxu0 0.0
    %2701 = vmatpush.msra.mxu0 %v2595
    %2702 = vmatmul.f32.gmra.mxu0 %v2604
    %v2703 = vpop.f32.mrf.mxu0
    %v2704 = vadd.f32 0.0, %v2703
    %2705 = vdwg.mxu0
    %2706 = vmatpush.msra.mxu0 0.0
    %2707 = vmatpush.msra.mxu0 0.0
    %2708 = vmatpush.msra.mxu0 0.0
    %2709 = vmatpush.msra.mxu0 0.0
    %2710 = vmatpush.msra.mxu0 0.0
    %2711 = vmatpush.msra.mxu0 0.0
    %2712 = vmatpush.msra.mxu0 0.0
    %2713 = vmatpush.msra.mxu0 0.0
    %2714 = vmatpush.msra.mxu0 0.0
    %2715 = vmatpush.msra.mxu0 0.0
    %2716 = vmatpush.msra.mxu0 0.0
    %2717 = vmatpush.msra.mxu0 0.0
    %2718 = vmatpush.msra.mxu0 0.0
    %2719 = vmatpush.msra.mxu0 0.0
    %2720 = vmatpush.msra.mxu0 0.0
    %2721 = vmatpush.msra.mxu0 %v2600
    %2722 = vmatmul.f32.gmra.mxu0 %v2604
    %v2723 = vpop.f32.mrf.mxu0
    %v2724 = vadd.f32 0.0, %v2723
    %2725 = vdwg.mxu0
    %v2726 = vadd.f32 %v2577, %v2624
    %v2727 = vadd.f32 %v2578, %v2644
    %v2728 = vadd.f32 %v2579, %v2664
    %v2729 = vadd.f32 %v2580, %v2684
    %v2730 = vadd.f32 %v2581, %v2704
    %v2731 = vadd.f32 %v2582, %v2724
    %2732 = vrot.lane.b32.xlu0 %v1713, 110
    %v2733 = vpop.permute.xlu0 %2732
    %2734 = vrot.lane.b32.xlu0 %v1714, 110
    %v2735 = vpop.permute.xlu0 %2734
    %2736 = vrot.lane.b32.xlu0 %v1715, 110
    %v2737 = vpop.permute.xlu0 %2736
    %2738 = vrot.lane.b32.xlu0 %v1716, 110
    %v2739 = vpop.permute.xlu0 %2738
    %2740 = vrot.lane.b32.xlu0 %v1717, 110
    %v2741 = vpop.permute.xlu0 %2740
    %2742 = vrot.lane.b32.xlu0 %v1718, 110
    %v2743 = vpop.permute.xlu0 %2742
    %v2744 = vsel %vm1341, %v2741, %v2743
    %v2745 = vsel %vm1341, %v2739, %v2741
    %v2746 = vsel %vm1341, %v2737, %v2739
    %v2747 = vsel %vm1341, %v2735, %v2737
    %v2748 = vsel %vm1341, %v2733, %v2735
    %v2749 = vsel %vm1341, %v2743, %v2733
    %s2750 = scalar_lea.vmem %s4, 56
    %v2751 = vld [vmem:[%s2750] sm:$0xff]
    %v2753 = vsel %vm1758, %v2751, 0
    %2755 = vmatpush.msra.mxu0 0.0
    %2756 = vmatpush.msra.mxu0 0.0
    %2757 = vmatpush.msra.mxu0 0.0
    %2758 = vmatpush.msra.mxu0 0.0
    %2759 = vmatpush.msra.mxu0 0.0
    %2760 = vmatpush.msra.mxu0 0.0
    %2761 = vmatpush.msra.mxu0 0.0
    %2762 = vmatpush.msra.mxu0 0.0
    %2763 = vmatpush.msra.mxu0 0.0
    %2764 = vmatpush.msra.mxu0 0.0
    %2765 = vmatpush.msra.mxu0 0.0
    %2766 = vmatpush.msra.mxu0 0.0
    %2767 = vmatpush.msra.mxu0 0.0
    %2768 = vmatpush.msra.mxu0 0.0
    %2769 = vmatpush.msra.mxu0 0.0
    %2770 = vmatpush.msra.mxu0 %v2748
    %2771 = vmatmul.f32.gmra.mxu0 %v2753
    %v2772 = vpop.f32.mrf.mxu0
    %v2773 = vadd.f32 0.0, %v2772
    %2774 = vdwg.mxu0
    %2775 = vmatpush.msra.mxu0 0.0
    %2776 = vmatpush.msra.mxu0 0.0
    %2777 = vmatpush.msra.mxu0 0.0
    %2778 = vmatpush.msra.mxu0 0.0
    %2779 = vmatpush.msra.mxu0 0.0
    %2780 = vmatpush.msra.mxu0 0.0
    %2781 = vmatpush.msra.mxu0 0.0
    %2782 = vmatpush.msra.mxu0 0.0
    %2783 = vmatpush.msra.mxu0 0.0
    %2784 = vmatpush.msra.mxu0 0.0
    %2785 = vmatpush.msra.mxu0 0.0
    %2786 = vmatpush.msra.mxu0 0.0
    %2787 = vmatpush.msra.mxu0 0.0
    %2788 = vmatpush.msra.mxu0 0.0
    %2789 = vmatpush.msra.mxu0 0.0
    %2790 = vmatpush.msra.mxu0 %v2747
    %2791 = vmatmul.f32.gmra.mxu0 %v2753
    %v2792 = vpop.f32.mrf.mxu0
    %v2793 = vadd.f32 0.0, %v2792
    %2794 = vdwg.mxu0
    %2795 = vmatpush.msra.mxu0 0.0
    %2796 = vmatpush.msra.mxu0 0.0
    %2797 = vmatpush.msra.mxu0 0.0
    %2798 = vmatpush.msra.mxu0 0.0
    %2799 = vmatpush.msra.mxu0 0.0
    %2800 = vmatpush.msra.mxu0 0.0
    %2801 = vmatpush.msra.mxu0 0.0
    %2802 = vmatpush.msra.mxu0 0.0
    %2803 = vmatpush.msra.mxu0 0.0
    %2804 = vmatpush.msra.mxu0 0.0
    %2805 = vmatpush.msra.mxu0 0.0
    %2806 = vmatpush.msra.mxu0 0.0
    %2807 = vmatpush.msra.mxu0 0.0
    %2808 = vmatpush.msra.mxu0 0.0
    %2809 = vmatpush.msra.mxu0 0.0
    %2810 = vmatpush.msra.mxu0 %v2746
    %2811 = vmatmul.f32.gmra.mxu0 %v2753
    %v2812 = vpop.f32.mrf.mxu0
    %v2813 = vadd.f32 0.0, %v2812
    %2814 = vdwg.mxu0
    %2815 = vmatpush.msra.mxu0 0.0
    %2816 = vmatpush.msra.mxu0 0.0
    %2817 = vmatpush.msra.mxu0 0.0
    %2818 = vmatpush.msra.mxu0 0.0
    %2819 = vmatpush.msra.mxu0 0.0
    %2820 = vmatpush.msra.mxu0 0.0
    %2821 = vmatpush.msra.mxu0 0.0
    %2822 = vmatpush.msra.mxu0 0.0
    %2823 = vmatpush.msra.mxu0 0.0
    %2824 = vmatpush.msra.mxu0 0.0
    %2825 = vmatpush.msra.mxu0 0.0
    %2826 = vmatpush.msra.mxu0 0.0
    %2827 = vmatpush.msra.mxu0 0.0
    %2828 = vmatpush.msra.mxu0 0.0
    %2829 = vmatpush.msra.mxu0 0.0
    %2830 = vmatpush.msra.mxu0 %v2745
    %2831 = vmatmul.f32.gmra.mxu0 %v2753
    %v2832 = vpop.f32.mrf.mxu0
    %v2833 = vadd.f32 0.0, %v2832
    %2834 = vdwg.mxu0
    %2835 = vmatpush.msra.mxu0 0.0
    %2836 = vmatpush.msra.mxu0 0.0
    %2837 = vmatpush.msra.mxu0 0.0
    %2838 = vmatpush.msra.mxu0 0.0
    %2839 = vmatpush.msra.mxu0 0.0
    %2840 = vmatpush.msra.mxu0 0.0
    %2841 = vmatpush.msra.mxu0 0.0
    %2842 = vmatpush.msra.mxu0 0.0
    %2843 = vmatpush.msra.mxu0 0.0
    %2844 = vmatpush.msra.mxu0 0.0
    %2845 = vmatpush.msra.mxu0 0.0
    %2846 = vmatpush.msra.mxu0 0.0
    %2847 = vmatpush.msra.mxu0 0.0
    %2848 = vmatpush.msra.mxu0 0.0
    %2849 = vmatpush.msra.mxu0 0.0
    %2850 = vmatpush.msra.mxu0 %v2744
    %2851 = vmatmul.f32.gmra.mxu0 %v2753
    %v2852 = vpop.f32.mrf.mxu0
    %v2853 = vadd.f32 0.0, %v2852
    %2854 = vdwg.mxu0
    %2855 = vmatpush.msra.mxu0 0.0
    %2856 = vmatpush.msra.mxu0 0.0
    %2857 = vmatpush.msra.mxu0 0.0
    %2858 = vmatpush.msra.mxu0 0.0
    %2859 = vmatpush.msra.mxu0 0.0
    %2860 = vmatpush.msra.mxu0 0.0
    %2861 = vmatpush.msra.mxu0 0.0
    %2862 = vmatpush.msra.mxu0 0.0
    %2863 = vmatpush.msra.mxu0 0.0
    %2864 = vmatpush.msra.mxu0 0.0
    %2865 = vmatpush.msra.mxu0 0.0
    %2866 = vmatpush.msra.mxu0 0.0
    %2867 = vmatpush.msra.mxu0 0.0
    %2868 = vmatpush.msra.mxu0 0.0
    %2869 = vmatpush.msra.mxu0 0.0
    %2870 = vmatpush.msra.mxu0 %v2749
    %2871 = vmatmul.f32.gmra.mxu0 %v2753
    %v2872 = vpop.f32.mrf.mxu0
    %v2873 = vadd.f32 0.0, %v2872
    %2874 = vdwg.mxu0
    %v2875 = vadd.f32 %v2726, %v2773
    %v2876 = vadd.f32 %v2727, %v2793
    %v2877 = vadd.f32 %v2728, %v2813
    %v2878 = vadd.f32 %v2729, %v2833
    %v2879 = vadd.f32 %v2730, %v2853
    %v2880 = vadd.f32 %v2731, %v2873
    %2881 = vrot.lane.b32.xlu0 %v1713, 109
    %v2882 = vpop.permute.xlu0 %2881
    %2883 = vrot.lane.b32.xlu0 %v1714, 109
    %v2884 = vpop.permute.xlu0 %2883
    %2885 = vrot.lane.b32.xlu0 %v1715, 109
    %v2886 = vpop.permute.xlu0 %2885
    %2887 = vrot.lane.b32.xlu0 %v1716, 109
    %v2888 = vpop.permute.xlu0 %2887
    %2889 = vrot.lane.b32.xlu0 %v1717, 109
    %v2890 = vpop.permute.xlu0 %2889
    %2891 = vrot.lane.b32.xlu0 %v1718, 109
    %v2892 = vpop.permute.xlu0 %2891
    %v2893 = vsel %vm1526, %v2890, %v2892
    %v2894 = vsel %vm1526, %v2888, %v2890
    %v2895 = vsel %vm1526, %v2886, %v2888
    %v2896 = vsel %vm1526, %v2884, %v2886
    %v2897 = vsel %vm1526, %v2882, %v2884
    %v2898 = vsel %vm1526, %v2892, %v2882
    %s2899 = scalar_lea.vmem %s4, 64
    %v2900 = vld [vmem:[%s2899] sm:$0xff]
    %v2902 = vsel %vm1758, %v2900, 0
    %2904 = vmatpush.msra.mxu0 0.0
    %2905 = vmatpush.msra.mxu0 0.0
    %2906 = vmatpush.msra.mxu0 0.0
    %2907 = vmatpush.msra.mxu0 0.0
    %2908 = vmatpush.msra.mxu0 0.0
    %2909 = vmatpush.msra.mxu0 0.0
    %2910 = vmatpush.msra.mxu0 0.0
    %2911 = vmatpush.msra.mxu0 0.0
    %2912 = vmatpush.msra.mxu0 0.0
    %2913 = vmatpush.msra.mxu0 0.0
    %2914 = vmatpush.msra.mxu0 0.0
    %2915 = vmatpush.msra.mxu0 0.0
    %2916 = vmatpush.msra.mxu0 0.0
    %2917 = vmatpush.msra.mxu0 0.0
    %2918 = vmatpush.msra.mxu0 0.0
    %2919 = vmatpush.msra.mxu0 %v2897
    %2920 = vmatmul.f32.gmra.mxu0 %v2902
    %v2921 = vpop.f32.mrf.mxu0
    %v2922 = vadd.f32 0.0, %v2921
    %2923 = vdwg.mxu0
    %2924 = vmatpush.msra.mxu0 0.0
    %2925 = vmatpush.msra.mxu0 0.0
    %2926 = vmatpush.msra.mxu0 0.0
    %2927 = vmatpush.msra.mxu0 0.0
    %2928 = vmatpush.msra.mxu0 0.0
    %2929 = vmatpush.msra.mxu0 0.0
    %2930 = vmatpush.msra.mxu0 0.0
    %2931 = vmatpush.msra.mxu0 0.0
    %2932 = vmatpush.msra.mxu0 0.0
    %2933 = vmatpush.msra.mxu0 0.0
    %2934 = vmatpush.msra.mxu0 0.0
    %2935 = vmatpush.msra.mxu0 0.0
    %2936 = vmatpush.msra.mxu0 0.0
    %2937 = vmatpush.msra.mxu0 0.0
    %2938 = vmatpush.msra.mxu0 0.0
    %2939 = vmatpush.msra.mxu0 %v2896
    %2940 = vmatmul.f32.gmra.mxu0 %v2902
    %v2941 = vpop.f32.mrf.mxu0
    %v2942 = vadd.f32 0.0, %v2941
    %2943 = vdwg.mxu0
    %2944 = vmatpush.msra.mxu0 0.0
    %2945 = vmatpush.msra.mxu0 0.0
    %2946 = vmatpush.msra.mxu0 0.0
    %2947 = vmatpush.msra.mxu0 0.0
    %2948 = vmatpush.msra.mxu0 0.0
    %2949 = vmatpush.msra.mxu0 0.0
    %2950 = vmatpush.msra.mxu0 0.0
    %2951 = vmatpush.msra.mxu0 0.0
    %2952 = vmatpush.msra.mxu0 0.0
    %2953 = vmatpush.msra.mxu0 0.0
    %2954 = vmatpush.msra.mxu0 0.0
    %2955 = vmatpush.msra.mxu0 0.0
    %2956 = vmatpush.msra.mxu0 0.0
    %2957 = vmatpush.msra.mxu0 0.0
    %2958 = vmatpush.msra.mxu0 0.0
    %2959 = vmatpush.msra.mxu0 %v2895
    %2960 = vmatmul.f32.gmra.mxu0 %v2902
    %v2961 = vpop.f32.mrf.mxu0
    %v2962 = vadd.f32 0.0, %v2961
    %2963 = vdwg.mxu0
    %2964 = vmatpush.msra.mxu0 0.0
    %2965 = vmatpush.msra.mxu0 0.0
    %2966 = vmatpush.msra.mxu0 0.0
    %2967 = vmatpush.msra.mxu0 0.0
    %2968 = vmatpush.msra.mxu0 0.0
    %2969 = vmatpush.msra.mxu0 0.0
    %2970 = vmatpush.msra.mxu0 0.0
    %2971 = vmatpush.msra.mxu0 0.0
    %2972 = vmatpush.msra.mxu0 0.0
    %2973 = vmatpush.msra.mxu0 0.0
    %2974 = vmatpush.msra.mxu0 0.0
    %2975 = vmatpush.msra.mxu0 0.0
    %2976 = vmatpush.msra.mxu0 0.0
    %2977 = vmatpush.msra.mxu0 0.0
    %2978 = vmatpush.msra.mxu0 0.0
    %2979 = vmatpush.msra.mxu0 %v2894
    %2980 = vmatmul.f32.gmra.mxu0 %v2902
    %v2981 = vpop.f32.mrf.mxu0
    %v2982 = vadd.f32 0.0, %v2981
    %2983 = vdwg.mxu0
    %2984 = vmatpush.msra.mxu0 0.0
    %2985 = vmatpush.msra.mxu0 0.0
    %2986 = vmatpush.msra.mxu0 0.0
    %2987 = vmatpush.msra.mxu0 0.0
    %2988 = vmatpush.msra.mxu0 0.0
    %2989 = vmatpush.msra.mxu0 0.0
    %2990 = vmatpush.msra.mxu0 0.0
    %2991 = vmatpush.msra.mxu0 0.0
    %2992 = vmatpush.msra.mxu0 0.0
    %2993 = vmatpush.msra.mxu0 0.0
    %2994 = vmatpush.msra.mxu0 0.0
    %2995 = vmatpush.msra.mxu0 0.0
    %2996 = vmatpush.msra.mxu0 0.0
    %2997 = vmatpush.msra.mxu0 0.0
    %2998 = vmatpush.msra.mxu0 0.0
    %2999 = vmatpush.msra.mxu0 %v2893
    %3000 = vmatmul.f32.gmra.mxu0 %v2902
    %v3001 = vpop.f32.mrf.mxu0
    %v3002 = vadd.f32 0.0, %v3001
    %3003 = vdwg.mxu0
    %3004 = vmatpush.msra.mxu0 0.0
    %3005 = vmatpush.msra.mxu0 0.0
    %3006 = vmatpush.msra.mxu0 0.0
    %3007 = vmatpush.msra.mxu0 0.0
    %3008 = vmatpush.msra.mxu0 0.0
    %3009 = vmatpush.msra.mxu0 0.0
    %3010 = vmatpush.msra.mxu0 0.0
    %3011 = vmatpush.msra.mxu0 0.0
    %3012 = vmatpush.msra.mxu0 0.0
    %3013 = vmatpush.msra.mxu0 0.0
    %3014 = vmatpush.msra.mxu0 0.0
    %3015 = vmatpush.msra.mxu0 0.0
    %3016 = vmatpush.msra.mxu0 0.0
    %3017 = vmatpush.msra.mxu0 0.0
    %3018 = vmatpush.msra.mxu0 0.0
    %3019 = vmatpush.msra.mxu0 %v2898
    %3020 = vmatmul.f32.gmra.mxu0 %v2902
    %v3021 = vpop.f32.mrf.mxu0
    %v3022 = vadd.f32 0.0, %v3021
    %3023 = vdwg.mxu0
    %v3024 = vadd.f32 %v2875, %v2922
    %v3025 = vadd.f32 %v2876, %v2942
    %v3026 = vadd.f32 %v2877, %v2962
    %v3027 = vadd.f32 %v2878, %v2982
    %v3028 = vadd.f32 %v2879, %v3002
    %v3029 = vadd.f32 %v2880, %v3022
    %v3030 = vld [vmem:[%s5] sm:$0xff]
    %3032 = vset.pattern.permute.xlu0 0
    %3033 = vperm.xlu0 %3032, %v3030
    %v3034 = vpop.permute.xlu0 %3033
    %v3036 = vadd.f32 %v3024, %v3034
    %v3037 = vadd.f32 %v3025, %v3034
    %v3038 = vadd.f32 %v3026, %v3034
    %v3039 = vadd.f32 %v3027, %v3034
    %v3040 = vadd.f32 %v3028, %v3034
    %v3041 = vadd.f32 %v3029, %v3034
    %v3042 = vmax.f32 %v3036, 0.0
    %v3043 = vmax.f32 %v3037, 0.0
    %v3044 = vmax.f32 %v3038, 0.0
    %v3045 = vmax.f32 %v3039, 0.0
    %v3046 = vmax.f32 %v3040, 0.0
    %v3047 = vmax.f32 %v3041, 0.0
    %v3048 = vmul.f32 %v3042, %v1701
    %v3049 = vmul.f32 %v3043, %v1702
    %v3050 = vmul.f32 %v3044, %v1703
    %v3051 = vmul.f32 %v3045, %v1704
    %v3052 = vmul.f32 %v3046, %v1705
    %v3053 = vmul.f32 %v3047, %v1706
    %3054 = vrot.lane.b32.xlu0 %v3048, 19
    %v3055 = vpop.permute.xlu0 %3054
    %3056 = vrot.lane.b32.xlu0 %v3049, 19
    %v3057 = vpop.permute.xlu0 %3056
    %3058 = vrot.lane.b32.xlu0 %v3050, 19
    %v3059 = vpop.permute.xlu0 %3058
    %3060 = vrot.lane.b32.xlu0 %v3051, 19
    %v3061 = vpop.permute.xlu0 %3060
    %3062 = vrot.lane.b32.xlu0 %v3052, 19
    %v3063 = vpop.permute.xlu0 %3062
    %3064 = vrot.lane.b32.xlu0 %v3053, 19
    %v3065 = vpop.permute.xlu0 %3064
    %v3066 = vsel %vm88, %v3063, %v3065
    %v3067 = vsel %vm88, %v3061, %v3063
    %v3068 = vsel %vm88, %v3059, %v3061
    %v3069 = vsel %vm88, %v3057, %v3059
    %v3070 = vsel %vm88, %v3055, %v3057
    %v3071 = vsel %vm88, %v3065, %v3055
    %v3072 = vld [vmem:[%s6] sm:$0x1]
    %3073 = vrot.lane.b32.xlu0 %v3048, 18
    %v3074 = vpop.permute.xlu0 %3073
    %3075 = vrot.lane.b32.xlu0 %v3049, 18
    %v3076 = vpop.permute.xlu0 %3075
    %3077 = vrot.lane.b32.xlu0 %v3050, 18
    %v3078 = vpop.permute.xlu0 %3077
    %3079 = vrot.lane.b32.xlu0 %v3051, 18
    %v3080 = vpop.permute.xlu0 %3079
    %3081 = vrot.lane.b32.xlu0 %v3052, 18
    %v3082 = vpop.permute.xlu0 %3081
    %3083 = vrot.lane.b32.xlu0 %v3053, 18
    %v3084 = vpop.permute.xlu0 %3083
    %v3085 = vsel %vm125, %v3082, %v3084
    %v3086 = vsel %vm125, %v3080, %v3082
    %v3087 = vsel %vm125, %v3078, %v3080
    %v3088 = vsel %vm125, %v3076, %v3078
    %v3089 = vsel %vm125, %v3074, %v3076
    %v3090 = vsel %vm125, %v3084, %v3074
    %s3091 = scalar_lea.vmem %s6, 1
    %v3092 = vld [vmem:[%s3091] sm:$0x1]
    %v3094 = vsel %vm1758, %v3092, 0
    %3096 = vmatpush.msra.mxu0 0.0
    %3097 = vmatpush.msra.mxu0 0.0
    %3098 = vmatpush.msra.mxu0 0.0
    %3099 = vmatpush.msra.mxu0 0.0
    %3100 = vmatpush.msra.mxu0 0.0
    %3101 = vmatpush.msra.mxu0 0.0
    %3102 = vmatpush.msra.mxu0 0.0
    %3103 = vmatpush.msra.mxu0 0.0
    %3104 = vmatpush.msra.mxu0 0.0
    %3105 = vmatpush.msra.mxu0 0.0
    %3106 = vmatpush.msra.mxu0 0.0
    %3107 = vmatpush.msra.mxu0 0.0
    %3108 = vmatpush.msra.mxu0 0.0
    %3109 = vmatpush.msra.mxu0 0.0
    %3110 = vmatpush.msra.mxu0 0.0
    %3111 = vmatpush.msra.mxu0 %v3090
    %3112 = vmatmul.f32.gmra.mxu0 %v3094
    %v3113 = vpop.f32.mrf.mxu0
    %v3114 = vadd.f32 0.0, %v3113
    %3115 = vdwg.mxu0
    %3116 = vmatpush.msra.mxu0 0.0
    %3117 = vmatpush.msra.mxu0 0.0
    %3118 = vmatpush.msra.mxu0 0.0
    %3119 = vmatpush.msra.mxu0 0.0
    %3120 = vmatpush.msra.mxu0 0.0
    %3121 = vmatpush.msra.mxu0 0.0
    %3122 = vmatpush.msra.mxu0 0.0
    %3123 = vmatpush.msra.mxu0 0.0
    %3124 = vmatpush.msra.mxu0 0.0
    %3125 = vmatpush.msra.mxu0 0.0
    %3126 = vmatpush.msra.mxu0 0.0
    %3127 = vmatpush.msra.mxu0 0.0
    %3128 = vmatpush.msra.mxu0 0.0
    %3129 = vmatpush.msra.mxu0 0.0
    %3130 = vmatpush.msra.mxu0 0.0
    %3131 = vmatpush.msra.mxu0 %v3089
    %3132 = vmatmul.f32.gmra.mxu0 %v3094
    %v3133 = vpop.f32.mrf.mxu0
    %v3134 = vadd.f32 0.0, %v3133
    %3135 = vdwg.mxu0
    %3136 = vmatpush.msra.mxu0 0.0
    %3137 = vmatpush.msra.mxu0 0.0
    %3138 = vmatpush.msra.mxu0 0.0
    %3139 = vmatpush.msra.mxu0 0.0
    %3140 = vmatpush.msra.mxu0 0.0
    %3141 = vmatpush.msra.mxu0 0.0
    %3142 = vmatpush.msra.mxu0 0.0
    %3143 = vmatpush.msra.mxu0 0.0
    %3144 = vmatpush.msra.mxu0 0.0
    %3145 = vmatpush.msra.mxu0 0.0
    %3146 = vmatpush.msra.mxu0 0.0
    %3147 = vmatpush.msra.mxu0 0.0
    %3148 = vmatpush.msra.mxu0 0.0
    %3149 = vmatpush.msra.mxu0 0.0
    %3150 = vmatpush.msra.mxu0 0.0
    %3151 = vmatpush.msra.mxu0 %v3088
    %3152 = vmatmul.f32.gmra.mxu0 %v3094
    %v3153 = vpop.f32.mrf.mxu0
    %v3154 = vadd.f32 0.0, %v3153
    %3155 = vdwg.mxu0
    %3156 = vmatpush.msra.mxu0 0.0
    %3157 = vmatpush.msra.mxu0 0.0
    %3158 = vmatpush.msra.mxu0 0.0
    %3159 = vmatpush.msra.mxu0 0.0
    %3160 = vmatpush.msra.mxu0 0.0
    %3161 = vmatpush.msra.mxu0 0.0
    %3162 = vmatpush.msra.mxu0 0.0
    %3163 = vmatpush.msra.mxu0 0.0
    %3164 = vmatpush.msra.mxu0 0.0
    %3165 = vmatpush.msra.mxu0 0.0
    %3166 = vmatpush.msra.mxu0 0.0
    %3167 = vmatpush.msra.mxu0 0.0
    %3168 = vmatpush.msra.mxu0 0.0
    %3169 = vmatpush.msra.mxu0 0.0
    %3170 = vmatpush.msra.mxu0 0.0
    %3171 = vmatpush.msra.mxu0 %v3087
    %3172 = vmatmul.f32.gmra.mxu0 %v3094
    %v3173 = vpop.f32.mrf.mxu0
    %v3174 = vadd.f32 0.0, %v3173
    %3175 = vdwg.mxu0
    %3176 = vmatpush.msra.mxu0 0.0
    %3177 = vmatpush.msra.mxu0 0.0
    %3178 = vmatpush.msra.mxu0 0.0
    %3179 = vmatpush.msra.mxu0 0.0
    %3180 = vmatpush.msra.mxu0 0.0
    %3181 = vmatpush.msra.mxu0 0.0
    %3182 = vmatpush.msra.mxu0 0.0
    %3183 = vmatpush.msra.mxu0 0.0
    %3184 = vmatpush.msra.mxu0 0.0
    %3185 = vmatpush.msra.mxu0 0.0
    %3186 = vmatpush.msra.mxu0 0.0
    %3187 = vmatpush.msra.mxu0 0.0
    %3188 = vmatpush.msra.mxu0 0.0
    %3189 = vmatpush.msra.mxu0 0.0
    %3190 = vmatpush.msra.mxu0 0.0
    %3191 = vmatpush.msra.mxu0 %v3086
    %3192 = vmatmul.f32.gmra.mxu0 %v3094
    %v3193 = vpop.f32.mrf.mxu0
    %v3194 = vadd.f32 0.0, %v3193
    %3195 = vdwg.mxu0
    %3196 = vmatpush.msra.mxu0 0.0
    %3197 = vmatpush.msra.mxu0 0.0
    %3198 = vmatpush.msra.mxu0 0.0
    %3199 = vmatpush.msra.mxu0 0.0
    %3200 = vmatpush.msra.mxu0 0.0
    %3201 = vmatpush.msra.mxu0 0.0
    %3202 = vmatpush.msra.mxu0 0.0
    %3203 = vmatpush.msra.mxu0 0.0
    %3204 = vmatpush.msra.mxu0 0.0
    %3205 = vmatpush.msra.mxu0 0.0
    %3206 = vmatpush.msra.mxu0 0.0
    %3207 = vmatpush.msra.mxu0 0.0
    %3208 = vmatpush.msra.mxu0 0.0
    %3209 = vmatpush.msra.mxu0 0.0
    %3210 = vmatpush.msra.mxu0 0.0
    %3211 = vmatpush.msra.mxu0 %v3085
    %3212 = vmatmul.f32.gmra.mxu0 %v3094
    %v3213 = vpop.f32.mrf.mxu0
    %v3214 = vadd.f32 0.0, %v3213
    %3215 = vdwg.mxu0
    %v3217 = vsel %vm1758, %v3072, 0
    %3219 = vmatpush.msra.mxu0 0.0
    %3220 = vmatpush.msra.mxu0 0.0
    %3221 = vmatpush.msra.mxu0 0.0
    %3222 = vmatpush.msra.mxu0 0.0
    %3223 = vmatpush.msra.mxu0 0.0
    %3224 = vmatpush.msra.mxu0 0.0
    %3225 = vmatpush.msra.mxu0 0.0
    %3226 = vmatpush.msra.mxu0 0.0
    %3227 = vmatpush.msra.mxu0 0.0
    %3228 = vmatpush.msra.mxu0 0.0
    %3229 = vmatpush.msra.mxu0 0.0
    %3230 = vmatpush.msra.mxu0 0.0
    %3231 = vmatpush.msra.mxu0 0.0
    %3232 = vmatpush.msra.mxu0 0.0
    %3233 = vmatpush.msra.mxu0 0.0
    %3234 = vmatpush.msra.mxu0 %v3071
    %3235 = vmatmul.f32.gmra.mxu0 %v3217
    %v3236 = vpop.f32.mrf.mxu0
    %v3237 = vadd.f32 %v3114, %v3236
    %3238 = vdwg.mxu0
    %3239 = vmatpush.msra.mxu0 0.0
    %3240 = vmatpush.msra.mxu0 0.0
    %3241 = vmatpush.msra.mxu0 0.0
    %3242 = vmatpush.msra.mxu0 0.0
    %3243 = vmatpush.msra.mxu0 0.0
    %3244 = vmatpush.msra.mxu0 0.0
    %3245 = vmatpush.msra.mxu0 0.0
    %3246 = vmatpush.msra.mxu0 0.0
    %3247 = vmatpush.msra.mxu0 0.0
    %3248 = vmatpush.msra.mxu0 0.0
    %3249 = vmatpush.msra.mxu0 0.0
    %3250 = vmatpush.msra.mxu0 0.0
    %3251 = vmatpush.msra.mxu0 0.0
    %3252 = vmatpush.msra.mxu0 0.0
    %3253 = vmatpush.msra.mxu0 0.0
    %3254 = vmatpush.msra.mxu0 %v3070
    %3255 = vmatmul.f32.gmra.mxu0 %v3217
    %v3256 = vpop.f32.mrf.mxu0
    %v3257 = vadd.f32 %v3134, %v3256
    %3258 = vdwg.mxu0
    %3259 = vmatpush.msra.mxu0 0.0
    %3260 = vmatpush.msra.mxu0 0.0
    %3261 = vmatpush.msra.mxu0 0.0
    %3262 = vmatpush.msra.mxu0 0.0
    %3263 = vmatpush.msra.mxu0 0.0
    %3264 = vmatpush.msra.mxu0 0.0
    %3265 = vmatpush.msra.mxu0 0.0
    %3266 = vmatpush.msra.mxu0 0.0
    %3267 = vmatpush.msra.mxu0 0.0
    %3268 = vmatpush.msra.mxu0 0.0
    %3269 = vmatpush.msra.mxu0 0.0
    %3270 = vmatpush.msra.mxu0 0.0
    %3271 = vmatpush.msra.mxu0 0.0
    %3272 = vmatpush.msra.mxu0 0.0
    %3273 = vmatpush.msra.mxu0 0.0
    %3274 = vmatpush.msra.mxu0 %v3069
    %3275 = vmatmul.f32.gmra.mxu0 %v3217
    %v3276 = vpop.f32.mrf.mxu0
    %v3277 = vadd.f32 %v3154, %v3276
    %3278 = vdwg.mxu0
    %3279 = vmatpush.msra.mxu0 0.0
    %3280 = vmatpush.msra.mxu0 0.0
    %3281 = vmatpush.msra.mxu0 0.0
    %3282 = vmatpush.msra.mxu0 0.0
    %3283 = vmatpush.msra.mxu0 0.0
    %3284 = vmatpush.msra.mxu0 0.0
    %3285 = vmatpush.msra.mxu0 0.0
    %3286 = vmatpush.msra.mxu0 0.0
    %3287 = vmatpush.msra.mxu0 0.0
    %3288 = vmatpush.msra.mxu0 0.0
    %3289 = vmatpush.msra.mxu0 0.0
    %3290 = vmatpush.msra.mxu0 0.0
    %3291 = vmatpush.msra.mxu0 0.0
    %3292 = vmatpush.msra.mxu0 0.0
    %3293 = vmatpush.msra.mxu0 0.0
    %3294 = vmatpush.msra.mxu0 %v3068
    %3295 = vmatmul.f32.gmra.mxu0 %v3217
    %v3296 = vpop.f32.mrf.mxu0
    %v3297 = vadd.f32 %v3174, %v3296
    %3298 = vdwg.mxu0
    %3299 = vmatpush.msra.mxu0 0.0
    %3300 = vmatpush.msra.mxu0 0.0
    %3301 = vmatpush.msra.mxu0 0.0
    %3302 = vmatpush.msra.mxu0 0.0
    %3303 = vmatpush.msra.mxu0 0.0
    %3304 = vmatpush.msra.mxu0 0.0
    %3305 = vmatpush.msra.mxu0 0.0
    %3306 = vmatpush.msra.mxu0 0.0
    %3307 = vmatpush.msra.mxu0 0.0
    %3308 = vmatpush.msra.mxu0 0.0
    %3309 = vmatpush.msra.mxu0 0.0
    %3310 = vmatpush.msra.mxu0 0.0
    %3311 = vmatpush.msra.mxu0 0.0
    %3312 = vmatpush.msra.mxu0 0.0
    %3313 = vmatpush.msra.mxu0 0.0
    %3314 = vmatpush.msra.mxu0 %v3067
    %3315 = vmatmul.f32.gmra.mxu0 %v3217
    %v3316 = vpop.f32.mrf.mxu0
    %v3317 = vadd.f32 %v3194, %v3316
    %3318 = vdwg.mxu0
    %3319 = vmatpush.msra.mxu0 0.0
    %3320 = vmatpush.msra.mxu0 0.0
    %3321 = vmatpush.msra.mxu0 0.0
    %3322 = vmatpush.msra.mxu0 0.0
    %3323 = vmatpush.msra.mxu0 0.0
    %3324 = vmatpush.msra.mxu0 0.0
    %3325 = vmatpush.msra.mxu0 0.0
    %3326 = vmatpush.msra.mxu0 0.0
    %3327 = vmatpush.msra.mxu0 0.0
    %3328 = vmatpush.msra.mxu0 0.0
    %3329 = vmatpush.msra.mxu0 0.0
    %3330 = vmatpush.msra.mxu0 0.0
    %3331 = vmatpush.msra.mxu0 0.0
    %3332 = vmatpush.msra.mxu0 0.0
    %3333 = vmatpush.msra.mxu0 0.0
    %3334 = vmatpush.msra.mxu0 %v3066
    %3335 = vmatmul.f32.gmra.mxu0 %v3217
    %v3336 = vpop.f32.mrf.mxu0
    %v3337 = vadd.f32 %v3214, %v3336
    %3338 = vdwg.mxu0
    %3339 = vrot.lane.b32.xlu0 %v3048, 17
    %v3340 = vpop.permute.xlu0 %3339
    %3341 = vrot.lane.b32.xlu0 %v3049, 17
    %v3342 = vpop.permute.xlu0 %3341
    %3343 = vrot.lane.b32.xlu0 %v3050, 17
    %v3344 = vpop.permute.xlu0 %3343
    %3345 = vrot.lane.b32.xlu0 %v3051, 17
    %v3346 = vpop.permute.xlu0 %3345
    %3347 = vrot.lane.b32.xlu0 %v3052, 17
    %v3348 = vpop.permute.xlu0 %3347
    %3349 = vrot.lane.b32.xlu0 %v3053, 17
    %v3350 = vpop.permute.xlu0 %3349
    %v3351 = vsel %vm447, %v3348, %v3350
    %v3352 = vsel %vm447, %v3346, %v3348
    %v3353 = vsel %vm447, %v3344, %v3346
    %v3354 = vsel %vm447, %v3342, %v3344
    %v3355 = vsel %vm447, %v3340, %v3342
    %v3356 = vsel %vm447, %v3350, %v3340
    %s3357 = scalar_lea.vmem %s6, 2
    %v3358 = vld [vmem:[%s3357] sm:$0x1]
    %v3360 = vsel %vm1758, %v3358, 0
    %3362 = vmatpush.msra.mxu0 0.0
    %3363 = vmatpush.msra.mxu0 0.0
    %3364 = vmatpush.msra.mxu0 0.0
    %3365 = vmatpush.msra.mxu0 0.0
    %3366 = vmatpush.msra.mxu0 0.0
    %3367 = vmatpush.msra.mxu0 0.0
    %3368 = vmatpush.msra.mxu0 0.0
    %3369 = vmatpush.msra.mxu0 0.0
    %3370 = vmatpush.msra.mxu0 0.0
    %3371 = vmatpush.msra.mxu0 0.0
    %3372 = vmatpush.msra.mxu0 0.0
    %3373 = vmatpush.msra.mxu0 0.0
    %3374 = vmatpush.msra.mxu0 0.0
    %3375 = vmatpush.msra.mxu0 0.0
    %3376 = vmatpush.msra.mxu0 0.0
    %3377 = vmatpush.msra.mxu0 %v3356
    %3378 = vmatmul.f32.gmra.mxu0 %v3360
    %v3379 = vpop.f32.mrf.mxu0
    %v3380 = vadd.f32 0.0, %v3379
    %3381 = vdwg.mxu0
    %3382 = vmatpush.msra.mxu0 0.0
    %3383 = vmatpush.msra.mxu0 0.0
    %3384 = vmatpush.msra.mxu0 0.0
    %3385 = vmatpush.msra.mxu0 0.0
    %3386 = vmatpush.msra.mxu0 0.0
    %3387 = vmatpush.msra.mxu0 0.0
    %3388 = vmatpush.msra.mxu0 0.0
    %3389 = vmatpush.msra.mxu0 0.0
    %3390 = vmatpush.msra.mxu0 0.0
    %3391 = vmatpush.msra.mxu0 0.0
    %3392 = vmatpush.msra.mxu0 0.0
    %3393 = vmatpush.msra.mxu0 0.0
    %3394 = vmatpush.msra.mxu0 0.0
    %3395 = vmatpush.msra.mxu0 0.0
    %3396 = vmatpush.msra.mxu0 0.0
    %3397 = vmatpush.msra.mxu0 %v3355
    %3398 = vmatmul.f32.gmra.mxu0 %v3360
    %v3399 = vpop.f32.mrf.mxu0
    %v3400 = vadd.f32 0.0, %v3399
    %3401 = vdwg.mxu0
    %3402 = vmatpush.msra.mxu0 0.0
    %3403 = vmatpush.msra.mxu0 0.0
    %3404 = vmatpush.msra.mxu0 0.0
    %3405 = vmatpush.msra.mxu0 0.0
    %3406 = vmatpush.msra.mxu0 0.0
    %3407 = vmatpush.msra.mxu0 0.0
    %3408 = vmatpush.msra.mxu0 0.0
    %3409 = vmatpush.msra.mxu0 0.0
    %3410 = vmatpush.msra.mxu0 0.0
    %3411 = vmatpush.msra.mxu0 0.0
    %3412 = vmatpush.msra.mxu0 0.0
    %3413 = vmatpush.msra.mxu0 0.0
    %3414 = vmatpush.msra.mxu0 0.0
    %3415 = vmatpush.msra.mxu0 0.0
    %3416 = vmatpush.msra.mxu0 0.0
    %3417 = vmatpush.msra.mxu0 %v3354
    %3418 = vmatmul.f32.gmra.mxu0 %v3360
    %v3419 = vpop.f32.mrf.mxu0
    %v3420 = vadd.f32 0.0, %v3419
    %3421 = vdwg.mxu0
    %3422 = vmatpush.msra.mxu0 0.0
    %3423 = vmatpush.msra.mxu0 0.0
    %3424 = vmatpush.msra.mxu0 0.0
    %3425 = vmatpush.msra.mxu0 0.0
    %3426 = vmatpush.msra.mxu0 0.0
    %3427 = vmatpush.msra.mxu0 0.0
    %3428 = vmatpush.msra.mxu0 0.0
    %3429 = vmatpush.msra.mxu0 0.0
    %3430 = vmatpush.msra.mxu0 0.0
    %3431 = vmatpush.msra.mxu0 0.0
    %3432 = vmatpush.msra.mxu0 0.0
    %3433 = vmatpush.msra.mxu0 0.0
    %3434 = vmatpush.msra.mxu0 0.0
    %3435 = vmatpush.msra.mxu0 0.0
    %3436 = vmatpush.msra.mxu0 0.0
    %3437 = vmatpush.msra.mxu0 %v3353
    %3438 = vmatmul.f32.gmra.mxu0 %v3360
    %v3439 = vpop.f32.mrf.mxu0
    %v3440 = vadd.f32 0.0, %v3439
    %3441 = vdwg.mxu0
    %3442 = vmatpush.msra.mxu0 0.0
    %3443 = vmatpush.msra.mxu0 0.0
    %3444 = vmatpush.msra.mxu0 0.0
    %3445 = vmatpush.msra.mxu0 0.0
    %3446 = vmatpush.msra.mxu0 0.0
    %3447 = vmatpush.msra.mxu0 0.0
    %3448 = vmatpush.msra.mxu0 0.0
    %3449 = vmatpush.msra.mxu0 0.0
    %3450 = vmatpush.msra.mxu0 0.0
    %3451 = vmatpush.msra.mxu0 0.0
    %3452 = vmatpush.msra.mxu0 0.0
    %3453 = vmatpush.msra.mxu0 0.0
    %3454 = vmatpush.msra.mxu0 0.0
    %3455 = vmatpush.msra.mxu0 0.0
    %3456 = vmatpush.msra.mxu0 0.0
    %3457 = vmatpush.msra.mxu0 %v3352
    %3458 = vmatmul.f32.gmra.mxu0 %v3360
    %v3459 = vpop.f32.mrf.mxu0
    %v3460 = vadd.f32 0.0, %v3459
    %3461 = vdwg.mxu0
    %3462 = vmatpush.msra.mxu0 0.0
    %3463 = vmatpush.msra.mxu0 0.0
    %3464 = vmatpush.msra.mxu0 0.0
    %3465 = vmatpush.msra.mxu0 0.0
    %3466 = vmatpush.msra.mxu0 0.0
    %3467 = vmatpush.msra.mxu0 0.0
    %3468 = vmatpush.msra.mxu0 0.0
    %3469 = vmatpush.msra.mxu0 0.0
    %3470 = vmatpush.msra.mxu0 0.0
    %3471 = vmatpush.msra.mxu0 0.0
    %3472 = vmatpush.msra.mxu0 0.0
    %3473 = vmatpush.msra.mxu0 0.0
    %3474 = vmatpush.msra.mxu0 0.0
    %3475 = vmatpush.msra.mxu0 0.0
    %3476 = vmatpush.msra.mxu0 0.0
    %3477 = vmatpush.msra.mxu0 %v3351
    %3478 = vmatmul.f32.gmra.mxu0 %v3360
    %v3479 = vpop.f32.mrf.mxu0
    %v3480 = vadd.f32 0.0, %v3479
    %3481 = vdwg.mxu0
    %v3482 = vadd.f32 %v3237, %v3380
    %v3483 = vadd.f32 %v3257, %v3400
    %v3484 = vadd.f32 %v3277, %v3420
    %v3485 = vadd.f32 %v3297, %v3440
    %v3486 = vadd.f32 %v3317, %v3460
    %v3487 = vadd.f32 %v3337, %v3480
    %3488 = vrot.lane.b32.xlu0 %v3048, 1
    %v3489 = vpop.permute.xlu0 %3488
    %3490 = vrot.lane.b32.xlu0 %v3049, 1
    %v3491 = vpop.permute.xlu0 %3490
    %3492 = vrot.lane.b32.xlu0 %v3050, 1
    %v3493 = vpop.permute.xlu0 %3492
    %3494 = vrot.lane.b32.xlu0 %v3051, 1
    %v3495 = vpop.permute.xlu0 %3494
    %3496 = vrot.lane.b32.xlu0 %v3052, 1
    %v3497 = vpop.permute.xlu0 %3496
    %3498 = vrot.lane.b32.xlu0 %v3053, 1
    %v3499 = vpop.permute.xlu0 %3498
    %v3500 = vsel %vm632, %v3497, %v3499
    %v3501 = vsel %vm632, %v3495, %v3497
    %v3502 = vsel %vm632, %v3493, %v3495
    %v3503 = vsel %vm632, %v3491, %v3493
    %v3504 = vsel %vm632, %v3489, %v3491
    %v3505 = vsel %vm632, %v3499, %v3489
    %s3506 = scalar_lea.vmem %s6, 3
    %v3507 = vld [vmem:[%s3506] sm:$0x1]
    %v3509 = vsel %vm1758, %v3507, 0
    %3511 = vmatpush.msra.mxu0 0.0
    %3512 = vmatpush.msra.mxu0 0.0
    %3513 = vmatpush.msra.mxu0 0.0
    %3514 = vmatpush.msra.mxu0 0.0
    %3515 = vmatpush.msra.mxu0 0.0
    %3516 = vmatpush.msra.mxu0 0.0
    %3517 = vmatpush.msra.mxu0 0.0
    %3518 = vmatpush.msra.mxu0 0.0
    %3519 = vmatpush.msra.mxu0 0.0
    %3520 = vmatpush.msra.mxu0 0.0
    %3521 = vmatpush.msra.mxu0 0.0
    %3522 = vmatpush.msra.mxu0 0.0
    %3523 = vmatpush.msra.mxu0 0.0
    %3524 = vmatpush.msra.mxu0 0.0
    %3525 = vmatpush.msra.mxu0 0.0
    %3526 = vmatpush.msra.mxu0 %v3505
    %3527 = vmatmul.f32.gmra.mxu0 %v3509
    %v3528 = vpop.f32.mrf.mxu0
    %v3529 = vadd.f32 0.0, %v3528
    %3530 = vdwg.mxu0
    %3531 = vmatpush.msra.mxu0 0.0
    %3532 = vmatpush.msra.mxu0 0.0
    %3533 = vmatpush.msra.mxu0 0.0
    %3534 = vmatpush.msra.mxu0 0.0
    %3535 = vmatpush.msra.mxu0 0.0
    %3536 = vmatpush.msra.mxu0 0.0
    %3537 = vmatpush.msra.mxu0 0.0
    %3538 = vmatpush.msra.mxu0 0.0
    %3539 = vmatpush.msra.mxu0 0.0
    %3540 = vmatpush.msra.mxu0 0.0
    %3541 = vmatpush.msra.mxu0 0.0
    %3542 = vmatpush.msra.mxu0 0.0
    %3543 = vmatpush.msra.mxu0 0.0
    %3544 = vmatpush.msra.mxu0 0.0
    %3545 = vmatpush.msra.mxu0 0.0
    %3546 = vmatpush.msra.mxu0 %v3504
    %3547 = vmatmul.f32.gmra.mxu0 %v3509
    %v3548 = vpop.f32.mrf.mxu0
    %v3549 = vadd.f32 0.0, %v3548
    %3550 = vdwg.mxu0
    %3551 = vmatpush.msra.mxu0 0.0
    %3552 = vmatpush.msra.mxu0 0.0
    %3553 = vmatpush.msra.mxu0 0.0
    %3554 = vmatpush.msra.mxu0 0.0
    %3555 = vmatpush.msra.mxu0 0.0
    %3556 = vmatpush.msra.mxu0 0.0
    %3557 = vmatpush.msra.mxu0 0.0
    %3558 = vmatpush.msra.mxu0 0.0
    %3559 = vmatpush.msra.mxu0 0.0
    %3560 = vmatpush.msra.mxu0 0.0
    %3561 = vmatpush.msra.mxu0 0.0
    %3562 = vmatpush.msra.mxu0 0.0
    %3563 = vmatpush.msra.mxu0 0.0
    %3564 = vmatpush.msra.mxu0 0.0
    %3565 = vmatpush.msra.mxu0 0.0
    %3566 = vmatpush.msra.mxu0 %v3503
    %3567 = vmatmul.f32.gmra.mxu0 %v3509
    %v3568 = vpop.f32.mrf.mxu0
    %v3569 = vadd.f32 0.0, %v3568
    %3570 = vdwg.mxu0
    %3571 = vmatpush.msra.mxu0 0.0
    %3572 = vmatpush.msra.mxu0 0.0
    %3573 = vmatpush.msra.mxu0 0.0
    %3574 = vmatpush.msra.mxu0 0.0
    %3575 = vmatpush.msra.mxu0 0.0
    %3576 = vmatpush.msra.mxu0 0.0
    %3577 = vmatpush.msra.mxu0 0.0
    %3578 = vmatpush.msra.mxu0 0.0
    %3579 = vmatpush.msra.mxu0 0.0
    %3580 = vmatpush.msra.mxu0 0.0
    %3581 = vmatpush.msra.mxu0 0.0
    %3582 = vmatpush.msra.mxu0 0.0
    %3583 = vmatpush.msra.mxu0 0.0
    %3584 = vmatpush.msra.mxu0 0.0
    %3585 = vmatpush.msra.mxu0 0.0
    %3586 = vmatpush.msra.mxu0 %v3502
    %3587 = vmatmul.f32.gmra.mxu0 %v3509
    %v3588 = vpop.f32.mrf.mxu0
    %v3589 = vadd.f32 0.0, %v3588
    %3590 = vdwg.mxu0
    %3591 = vmatpush.msra.mxu0 0.0
    %3592 = vmatpush.msra.mxu0 0.0
    %3593 = vmatpush.msra.mxu0 0.0
    %3594 = vmatpush.msra.mxu0 0.0
    %3595 = vmatpush.msra.mxu0 0.0
    %3596 = vmatpush.msra.mxu0 0.0
    %3597 = vmatpush.msra.mxu0 0.0
    %3598 = vmatpush.msra.mxu0 0.0
    %3599 = vmatpush.msra.mxu0 0.0
    %3600 = vmatpush.msra.mxu0 0.0
    %3601 = vmatpush.msra.mxu0 0.0
    %3602 = vmatpush.msra.mxu0 0.0
    %3603 = vmatpush.msra.mxu0 0.0
    %3604 = vmatpush.msra.mxu0 0.0
    %3605 = vmatpush.msra.mxu0 0.0
    %3606 = vmatpush.msra.mxu0 %v3501
    %3607 = vmatmul.f32.gmra.mxu0 %v3509
    %v3608 = vpop.f32.mrf.mxu0
    %v3609 = vadd.f32 0.0, %v3608
    %3610 = vdwg.mxu0
    %3611 = vmatpush.msra.mxu0 0.0
    %3612 = vmatpush.msra.mxu0 0.0
    %3613 = vmatpush.msra.mxu0 0.0
    %3614 = vmatpush.msra.mxu0 0.0
    %3615 = vmatpush.msra.mxu0 0.0
    %3616 = vmatpush.msra.mxu0 0.0
    %3617 = vmatpush.msra.mxu0 0.0
    %3618 = vmatpush.msra.mxu0 0.0
    %3619 = vmatpush.msra.mxu0 0.0
    %3620 = vmatpush.msra.mxu0 0.0
    %3621 = vmatpush.msra.mxu0 0.0
    %3622 = vmatpush.msra.mxu0 0.0
    %3623 = vmatpush.msra.mxu0 0.0
    %3624 = vmatpush.msra.mxu0 0.0
    %3625 = vmatpush.msra.mxu0 0.0
    %3626 = vmatpush.msra.mxu0 %v3500
    %3627 = vmatmul.f32.gmra.mxu0 %v3509
    %v3628 = vpop.f32.mrf.mxu0
    %v3629 = vadd.f32 0.0, %v3628
    %3630 = vdwg.mxu0
    %v3631 = vadd.f32 %v3482, %v3529
    %v3632 = vadd.f32 %v3483, %v3549
    %v3633 = vadd.f32 %v3484, %v3569
    %v3634 = vadd.f32 %v3485, %v3589
    %v3635 = vadd.f32 %v3486, %v3609
    %v3636 = vadd.f32 %v3487, %v3629
    %s3637 = scalar_lea.vmem %s6, 4
    %v3638 = vld [vmem:[%s3637] sm:$0x1]
    %v3640 = vsel %vm1758, %v3638, 0
    %3642 = vmatpush.msra.mxu0 0.0
    %3643 = vmatpush.msra.mxu0 0.0
    %3644 = vmatpush.msra.mxu0 0.0
    %3645 = vmatpush.msra.mxu0 0.0
    %3646 = vmatpush.msra.mxu0 0.0
    %3647 = vmatpush.msra.mxu0 0.0
    %3648 = vmatpush.msra.mxu0 0.0
    %3649 = vmatpush.msra.mxu0 0.0
    %3650 = vmatpush.msra.mxu0 0.0
    %3651 = vmatpush.msra.mxu0 0.0
    %3652 = vmatpush.msra.mxu0 0.0
    %3653 = vmatpush.msra.mxu0 0.0
    %3654 = vmatpush.msra.mxu0 0.0
    %3655 = vmatpush.msra.mxu0 0.0
    %3656 = vmatpush.msra.mxu0 0.0
    %3657 = vmatpush.msra.mxu0 %v3048
    %3658 = vmatmul.f32.gmra.mxu0 %v3640
    %v3659 = vpop.f32.mrf.mxu0
    %v3660 = vadd.f32 0.0, %v3659
    %3661 = vdwg.mxu0
    %3662 = vmatpush.msra.mxu0 0.0
    %3663 = vmatpush.msra.mxu0 0.0
    %3664 = vmatpush.msra.mxu0 0.0
    %3665 = vmatpush.msra.mxu0 0.0
    %3666 = vmatpush.msra.mxu0 0.0
    %3667 = vmatpush.msra.mxu0 0.0
    %3668 = vmatpush.msra.mxu0 0.0
    %3669 = vmatpush.msra.mxu0 0.0
    %3670 = vmatpush.msra.mxu0 0.0
    %3671 = vmatpush.msra.mxu0 0.0
    %3672 = vmatpush.msra.mxu0 0.0
    %3673 = vmatpush.msra.mxu0 0.0
    %3674 = vmatpush.msra.mxu0 0.0
    %3675 = vmatpush.msra.mxu0 0.0
    %3676 = vmatpush.msra.mxu0 0.0
    %3677 = vmatpush.msra.mxu0 %v3049
    %3678 = vmatmul.f32.gmra.mxu0 %v3640
    %v3679 = vpop.f32.mrf.mxu0
    %v3680 = vadd.f32 0.0, %v3679
    %3681 = vdwg.mxu0
    %3682 = vmatpush.msra.mxu0 0.0
    %3683 = vmatpush.msra.mxu0 0.0
    %3684 = vmatpush.msra.mxu0 0.0
    %3685 = vmatpush.msra.mxu0 0.0
    %3686 = vmatpush.msra.mxu0 0.0
    %3687 = vmatpush.msra.mxu0 0.0
    %3688 = vmatpush.msra.mxu0 0.0
    %3689 = vmatpush.msra.mxu0 0.0
    %3690 = vmatpush.msra.mxu0 0.0
    %3691 = vmatpush.msra.mxu0 0.0
    %3692 = vmatpush.msra.mxu0 0.0
    %3693 = vmatpush.msra.mxu0 0.0
    %3694 = vmatpush.msra.mxu0 0.0
    %3695 = vmatpush.msra.mxu0 0.0
    %3696 = vmatpush.msra.mxu0 0.0
    %3697 = vmatpush.msra.mxu0 %v3050
    %3698 = vmatmul.f32.gmra.mxu0 %v3640
    %v3699 = vpop.f32.mrf.mxu0
    %v3700 = vadd.f32 0.0, %v3699
    %3701 = vdwg.mxu0
    %3702 = vmatpush.msra.mxu0 0.0
    %3703 = vmatpush.msra.mxu0 0.0
    %3704 = vmatpush.msra.mxu0 0.0
    %3705 = vmatpush.msra.mxu0 0.0
    %3706 = vmatpush.msra.mxu0 0.0
    %3707 = vmatpush.msra.mxu0 0.0
    %3708 = vmatpush.msra.mxu0 0.0
    %3709 = vmatpush.msra.mxu0 0.0
    %3710 = vmatpush.msra.mxu0 0.0
    %3711 = vmatpush.msra.mxu0 0.0
    %3712 = vmatpush.msra.mxu0 0.0
    %3713 = vmatpush.msra.mxu0 0.0
    %3714 = vmatpush.msra.mxu0 0.0
    %3715 = vmatpush.msra.mxu0 0.0
    %3716 = vmatpush.msra.mxu0 0.0
    %3717 = vmatpush.msra.mxu0 %v3051
    %3718 = vmatmul.f32.gmra.mxu0 %v3640
    %v3719 = vpop.f32.mrf.mxu0
    %v3720 = vadd.f32 0.0, %v3719
    %3721 = vdwg.mxu0
    %3722 = vmatpush.msra.mxu0 0.0
    %3723 = vmatpush.msra.mxu0 0.0
    %3724 = vmatpush.msra.mxu0 0.0
    %3725 = vmatpush.msra.mxu0 0.0
    %3726 = vmatpush.msra.mxu0 0.0
    %3727 = vmatpush.msra.mxu0 0.0
    %3728 = vmatpush.msra.mxu0 0.0
    %3729 = vmatpush.msra.mxu0 0.0
    %3730 = vmatpush.msra.mxu0 0.0
    %3731 = vmatpush.msra.mxu0 0.0
    %3732 = vmatpush.msra.mxu0 0.0
    %3733 = vmatpush.msra.mxu0 0.0
    %3734 = vmatpush.msra.mxu0 0.0
    %3735 = vmatpush.msra.mxu0 0.0
    %3736 = vmatpush.msra.mxu0 0.0
    %3737 = vmatpush.msra.mxu0 %v3052
    %3738 = vmatmul.f32.gmra.mxu0 %v3640
    %v3739 = vpop.f32.mrf.mxu0
    %v3740 = vadd.f32 0.0, %v3739
    %3741 = vdwg.mxu0
    %3742 = vmatpush.msra.mxu0 0.0
    %3743 = vmatpush.msra.mxu0 0.0
    %3744 = vmatpush.msra.mxu0 0.0
    %3745 = vmatpush.msra.mxu0 0.0
    %3746 = vmatpush.msra.mxu0 0.0
    %3747 = vmatpush.msra.mxu0 0.0
    %3748 = vmatpush.msra.mxu0 0.0
    %3749 = vmatpush.msra.mxu0 0.0
    %3750 = vmatpush.msra.mxu0 0.0
    %3751 = vmatpush.msra.mxu0 0.0
    %3752 = vmatpush.msra.mxu0 0.0
    %3753 = vmatpush.msra.mxu0 0.0
    %3754 = vmatpush.msra.mxu0 0.0
    %3755 = vmatpush.msra.mxu0 0.0
    %3756 = vmatpush.msra.mxu0 0.0
    %3757 = vmatpush.msra.mxu0 %v3053
    %3758 = vmatmul.f32.gmra.mxu0 %v3640
    %v3759 = vpop.f32.mrf.mxu0
    %v3760 = vadd.f32 0.0, %v3759
    %3761 = vdwg.mxu0
    %v3762 = vadd.f32 %v3631, %v3660
    %v3763 = vadd.f32 %v3632, %v3680
    %v3764 = vadd.f32 %v3633, %v3700
    %v3765 = vadd.f32 %v3634, %v3720
    %v3766 = vadd.f32 %v3635, %v3740
    %v3767 = vadd.f32 %v3636, %v3760
    %3768 = vrot.lane.b32.xlu0 %v3048, 127
    %v3769 = vpop.permute.xlu0 %3768
    %3770 = vrot.lane.b32.xlu0 %v3049, 127
    %v3771 = vpop.permute.xlu0 %3770
    %3772 = vrot.lane.b32.xlu0 %v3050, 127
    %v3773 = vpop.permute.xlu0 %3772
    %3774 = vrot.lane.b32.xlu0 %v3051, 127
    %v3775 = vpop.permute.xlu0 %3774
    %3776 = vrot.lane.b32.xlu0 %v3052, 127
    %v3777 = vpop.permute.xlu0 %3776
    %3778 = vrot.lane.b32.xlu0 %v3053, 127
    %v3779 = vpop.permute.xlu0 %3778
    %v3780 = vsel %vm971, %v3777, %v3779
    %v3781 = vsel %vm971, %v3775, %v3777
    %v3782 = vsel %vm971, %v3773, %v3775
    %v3783 = vsel %vm971, %v3771, %v3773
    %v3784 = vsel %vm971, %v3769, %v3771
    %v3785 = vsel %vm971, %v3779, %v3769
    %s3786 = scalar_lea.vmem %s6, 5
    %v3787 = vld [vmem:[%s3786] sm:$0x1]
    %v3789 = vsel %vm1758, %v3787, 0
    %3791 = vmatpush.msra.mxu0 0.0
    %3792 = vmatpush.msra.mxu0 0.0
    %3793 = vmatpush.msra.mxu0 0.0
    %3794 = vmatpush.msra.mxu0 0.0
    %3795 = vmatpush.msra.mxu0 0.0
    %3796 = vmatpush.msra.mxu0 0.0
    %3797 = vmatpush.msra.mxu0 0.0
    %3798 = vmatpush.msra.mxu0 0.0
    %3799 = vmatpush.msra.mxu0 0.0
    %3800 = vmatpush.msra.mxu0 0.0
    %3801 = vmatpush.msra.mxu0 0.0
    %3802 = vmatpush.msra.mxu0 0.0
    %3803 = vmatpush.msra.mxu0 0.0
    %3804 = vmatpush.msra.mxu0 0.0
    %3805 = vmatpush.msra.mxu0 0.0
    %3806 = vmatpush.msra.mxu0 %v3784
    %3807 = vmatmul.f32.gmra.mxu0 %v3789
    %v3808 = vpop.f32.mrf.mxu0
    %v3809 = vadd.f32 0.0, %v3808
    %3810 = vdwg.mxu0
    %3811 = vmatpush.msra.mxu0 0.0
    %3812 = vmatpush.msra.mxu0 0.0
    %3813 = vmatpush.msra.mxu0 0.0
    %3814 = vmatpush.msra.mxu0 0.0
    %3815 = vmatpush.msra.mxu0 0.0
    %3816 = vmatpush.msra.mxu0 0.0
    %3817 = vmatpush.msra.mxu0 0.0
    %3818 = vmatpush.msra.mxu0 0.0
    %3819 = vmatpush.msra.mxu0 0.0
    %3820 = vmatpush.msra.mxu0 0.0
    %3821 = vmatpush.msra.mxu0 0.0
    %3822 = vmatpush.msra.mxu0 0.0
    %3823 = vmatpush.msra.mxu0 0.0
    %3824 = vmatpush.msra.mxu0 0.0
    %3825 = vmatpush.msra.mxu0 0.0
    %3826 = vmatpush.msra.mxu0 %v3783
    %3827 = vmatmul.f32.gmra.mxu0 %v3789
    %v3828 = vpop.f32.mrf.mxu0
    %v3829 = vadd.f32 0.0, %v3828
    %3830 = vdwg.mxu0
    %3831 = vmatpush.msra.mxu0 0.0
    %3832 = vmatpush.msra.mxu0 0.0
    %3833 = vmatpush.msra.mxu0 0.0
    %3834 = vmatpush.msra.mxu0 0.0
    %3835 = vmatpush.msra.mxu0 0.0
    %3836 = vmatpush.msra.mxu0 0.0
    %3837 = vmatpush.msra.mxu0 0.0
    %3838 = vmatpush.msra.mxu0 0.0
    %3839 = vmatpush.msra.mxu0 0.0
    %3840 = vmatpush.msra.mxu0 0.0
    %3841 = vmatpush.msra.mxu0 0.0
    %3842 = vmatpush.msra.mxu0 0.0
    %3843 = vmatpush.msra.mxu0 0.0
    %3844 = vmatpush.msra.mxu0 0.0
    %3845 = vmatpush.msra.mxu0 0.0
    %3846 = vmatpush.msra.mxu0 %v3782
    %3847 = vmatmul.f32.gmra.mxu0 %v3789
    %v3848 = vpop.f32.mrf.mxu0
    %v3849 = vadd.f32 0.0, %v3848
    %3850 = vdwg.mxu0
    %3851 = vmatpush.msra.mxu0 0.0
    %3852 = vmatpush.msra.mxu0 0.0
    %3853 = vmatpush.msra.mxu0 0.0
    %3854 = vmatpush.msra.mxu0 0.0
    %3855 = vmatpush.msra.mxu0 0.0
    %3856 = vmatpush.msra.mxu0 0.0
    %3857 = vmatpush.msra.mxu0 0.0
    %3858 = vmatpush.msra.mxu0 0.0
    %3859 = vmatpush.msra.mxu0 0.0
    %3860 = vmatpush.msra.mxu0 0.0
    %3861 = vmatpush.msra.mxu0 0.0
    %3862 = vmatpush.msra.mxu0 0.0
    %3863 = vmatpush.msra.mxu0 0.0
    %3864 = vmatpush.msra.mxu0 0.0
    %3865 = vmatpush.msra.mxu0 0.0
    %3866 = vmatpush.msra.mxu0 %v3781
    %3867 = vmatmul.f32.gmra.mxu0 %v3789
    %v3868 = vpop.f32.mrf.mxu0
    %v3869 = vadd.f32 0.0, %v3868
    %3870 = vdwg.mxu0
    %3871 = vmatpush.msra.mxu0 0.0
    %3872 = vmatpush.msra.mxu0 0.0
    %3873 = vmatpush.msra.mxu0 0.0
    %3874 = vmatpush.msra.mxu0 0.0
    %3875 = vmatpush.msra.mxu0 0.0
    %3876 = vmatpush.msra.mxu0 0.0
    %3877 = vmatpush.msra.mxu0 0.0
    %3878 = vmatpush.msra.mxu0 0.0
    %3879 = vmatpush.msra.mxu0 0.0
    %3880 = vmatpush.msra.mxu0 0.0
    %3881 = vmatpush.msra.mxu0 0.0
    %3882 = vmatpush.msra.mxu0 0.0
    %3883 = vmatpush.msra.mxu0 0.0
    %3884 = vmatpush.msra.mxu0 0.0
    %3885 = vmatpush.msra.mxu0 0.0
    %3886 = vmatpush.msra.mxu0 %v3780
    %3887 = vmatmul.f32.gmra.mxu0 %v3789
    %v3888 = vpop.f32.mrf.mxu0
    %v3889 = vadd.f32 0.0, %v3888
    %3890 = vdwg.mxu0
    %3891 = vmatpush.msra.mxu0 0.0
    %3892 = vmatpush.msra.mxu0 0.0
    %3893 = vmatpush.msra.mxu0 0.0
    %3894 = vmatpush.msra.mxu0 0.0
    %3895 = vmatpush.msra.mxu0 0.0
    %3896 = vmatpush.msra.mxu0 0.0
    %3897 = vmatpush.msra.mxu0 0.0
    %3898 = vmatpush.msra.mxu0 0.0
    %3899 = vmatpush.msra.mxu0 0.0
    %3900 = vmatpush.msra.mxu0 0.0
    %3901 = vmatpush.msra.mxu0 0.0
    %3902 = vmatpush.msra.mxu0 0.0
    %3903 = vmatpush.msra.mxu0 0.0
    %3904 = vmatpush.msra.mxu0 0.0
    %3905 = vmatpush.msra.mxu0 0.0
    %3906 = vmatpush.msra.mxu0 %v3785
    %3907 = vmatmul.f32.gmra.mxu0 %v3789
    %v3908 = vpop.f32.mrf.mxu0
    %v3909 = vadd.f32 0.0, %v3908
    %3910 = vdwg.mxu0
    %v3911 = vadd.f32 %v3762, %v3809
    %v3912 = vadd.f32 %v3763, %v3829
    %v3913 = vadd.f32 %v3764, %v3849
    %v3914 = vadd.f32 %v3765, %v3869
    %v3915 = vadd.f32 %v3766, %v3889
    %v3916 = vadd.f32 %v3767, %v3909
    %3917 = vrot.lane.b32.xlu0 %v3048, 111
    %v3918 = vpop.permute.xlu0 %3917
    %3919 = vrot.lane.b32.xlu0 %v3049, 111
    %v3920 = vpop.permute.xlu0 %3919
    %3921 = vrot.lane.b32.xlu0 %v3050, 111
    %v3922 = vpop.permute.xlu0 %3921
    %3923 = vrot.lane.b32.xlu0 %v3051, 111
    %v3924 = vpop.permute.xlu0 %3923
    %3925 = vrot.lane.b32.xlu0 %v3052, 111
    %v3926 = vpop.permute.xlu0 %3925
    %3927 = vrot.lane.b32.xlu0 %v3053, 111
    %v3928 = vpop.permute.xlu0 %3927
    %v3929 = vsel %vm1156, %v3926, %v3928
    %v3930 = vsel %vm1156, %v3924, %v3926
    %v3931 = vsel %vm1156, %v3922, %v3924
    %v3932 = vsel %vm1156, %v3920, %v3922
    %v3933 = vsel %vm1156, %v3918, %v3920
    %v3934 = vsel %vm1156, %v3928, %v3918
    %s3935 = scalar_lea.vmem %s6, 6
    %v3936 = vld [vmem:[%s3935] sm:$0x1]
    %v3938 = vsel %vm1758, %v3936, 0
    %3940 = vmatpush.msra.mxu0 0.0
    %3941 = vmatpush.msra.mxu0 0.0
    %3942 = vmatpush.msra.mxu0 0.0
    %3943 = vmatpush.msra.mxu0 0.0
    %3944 = vmatpush.msra.mxu0 0.0
    %3945 = vmatpush.msra.mxu0 0.0
    %3946 = vmatpush.msra.mxu0 0.0
    %3947 = vmatpush.msra.mxu0 0.0
    %3948 = vmatpush.msra.mxu0 0.0
    %3949 = vmatpush.msra.mxu0 0.0
    %3950 = vmatpush.msra.mxu0 0.0
    %3951 = vmatpush.msra.mxu0 0.0
    %3952 = vmatpush.msra.mxu0 0.0
    %3953 = vmatpush.msra.mxu0 0.0
    %3954 = vmatpush.msra.mxu0 0.0
    %3955 = vmatpush.msra.mxu0 %v3933
    %3956 = vmatmul.f32.gmra.mxu0 %v3938
    %v3957 = vpop.f32.mrf.mxu0
    %v3958 = vadd.f32 0.0, %v3957
    %3959 = vdwg.mxu0
    %3960 = vmatpush.msra.mxu0 0.0
    %3961 = vmatpush.msra.mxu0 0.0
    %3962 = vmatpush.msra.mxu0 0.0
    %3963 = vmatpush.msra.mxu0 0.0
    %3964 = vmatpush.msra.mxu0 0.0
    %3965 = vmatpush.msra.mxu0 0.0
    %3966 = vmatpush.msra.mxu0 0.0
    %3967 = vmatpush.msra.mxu0 0.0
    %3968 = vmatpush.msra.mxu0 0.0
    %3969 = vmatpush.msra.mxu0 0.0
    %3970 = vmatpush.msra.mxu0 0.0
    %3971 = vmatpush.msra.mxu0 0.0
    %3972 = vmatpush.msra.mxu0 0.0
    %3973 = vmatpush.msra.mxu0 0.0
    %3974 = vmatpush.msra.mxu0 0.0
    %3975 = vmatpush.msra.mxu0 %v3932
    %3976 = vmatmul.f32.gmra.mxu0 %v3938
    %v3977 = vpop.f32.mrf.mxu0
    %v3978 = vadd.f32 0.0, %v3977
    %3979 = vdwg.mxu0
    %3980 = vmatpush.msra.mxu0 0.0
    %3981 = vmatpush.msra.mxu0 0.0
    %3982 = vmatpush.msra.mxu0 0.0
    %3983 = vmatpush.msra.mxu0 0.0
    %3984 = vmatpush.msra.mxu0 0.0
    %3985 = vmatpush.msra.mxu0 0.0
    %3986 = vmatpush.msra.mxu0 0.0
    %3987 = vmatpush.msra.mxu0 0.0
    %3988 = vmatpush.msra.mxu0 0.0
    %3989 = vmatpush.msra.mxu0 0.0
    %3990 = vmatpush.msra.mxu0 0.0
    %3991 = vmatpush.msra.mxu0 0.0
    %3992 = vmatpush.msra.mxu0 0.0
    %3993 = vmatpush.msra.mxu0 0.0
    %3994 = vmatpush.msra.mxu0 0.0
    %3995 = vmatpush.msra.mxu0 %v3931
    %3996 = vmatmul.f32.gmra.mxu0 %v3938
    %v3997 = vpop.f32.mrf.mxu0
    %v3998 = vadd.f32 0.0, %v3997
    %3999 = vdwg.mxu0
    %4000 = vmatpush.msra.mxu0 0.0
    %4001 = vmatpush.msra.mxu0 0.0
    %4002 = vmatpush.msra.mxu0 0.0
    %4003 = vmatpush.msra.mxu0 0.0
    %4004 = vmatpush.msra.mxu0 0.0
    %4005 = vmatpush.msra.mxu0 0.0
    %4006 = vmatpush.msra.mxu0 0.0
    %4007 = vmatpush.msra.mxu0 0.0
    %4008 = vmatpush.msra.mxu0 0.0
    %4009 = vmatpush.msra.mxu0 0.0
    %4010 = vmatpush.msra.mxu0 0.0
    %4011 = vmatpush.msra.mxu0 0.0
    %4012 = vmatpush.msra.mxu0 0.0
    %4013 = vmatpush.msra.mxu0 0.0
    %4014 = vmatpush.msra.mxu0 0.0
    %4015 = vmatpush.msra.mxu0 %v3930
    %4016 = vmatmul.f32.gmra.mxu0 %v3938
    %v4017 = vpop.f32.mrf.mxu0
    %v4018 = vadd.f32 0.0, %v4017
    %4019 = vdwg.mxu0
    %4020 = vmatpush.msra.mxu0 0.0
    %4021 = vmatpush.msra.mxu0 0.0
    %4022 = vmatpush.msra.mxu0 0.0
    %4023 = vmatpush.msra.mxu0 0.0
    %4024 = vmatpush.msra.mxu0 0.0
    %4025 = vmatpush.msra.mxu0 0.0
    %4026 = vmatpush.msra.mxu0 0.0
    %4027 = vmatpush.msra.mxu0 0.0
    %4028 = vmatpush.msra.mxu0 0.0
    %4029 = vmatpush.msra.mxu0 0.0
    %4030 = vmatpush.msra.mxu0 0.0
    %4031 = vmatpush.msra.mxu0 0.0
    %4032 = vmatpush.msra.mxu0 0.0
    %4033 = vmatpush.msra.mxu0 0.0
    %4034 = vmatpush.msra.mxu0 0.0
    %4035 = vmatpush.msra.mxu0 %v3929
    %4036 = vmatmul.f32.gmra.mxu0 %v3938
    %v4037 = vpop.f32.mrf.mxu0
    %v4038 = vadd.f32 0.0, %v4037
    %4039 = vdwg.mxu0
    %4040 = vmatpush.msra.mxu0 0.0
    %4041 = vmatpush.msra.mxu0 0.0
    %4042 = vmatpush.msra.mxu0 0.0
    %4043 = vmatpush.msra.mxu0 0.0
    %4044 = vmatpush.msra.mxu0 0.0
    %4045 = vmatpush.msra.mxu0 0.0
    %4046 = vmatpush.msra.mxu0 0.0
    %4047 = vmatpush.msra.mxu0 0.0
    %4048 = vmatpush.msra.mxu0 0.0
    %4049 = vmatpush.msra.mxu0 0.0
    %4050 = vmatpush.msra.mxu0 0.0
    %4051 = vmatpush.msra.mxu0 0.0
    %4052 = vmatpush.msra.mxu0 0.0
    %4053 = vmatpush.msra.mxu0 0.0
    %4054 = vmatpush.msra.mxu0 0.0
    %4055 = vmatpush.msra.mxu0 %v3934
    %4056 = vmatmul.f32.gmra.mxu0 %v3938
    %v4057 = vpop.f32.mrf.mxu0
    %v4058 = vadd.f32 0.0, %v4057
    %4059 = vdwg.mxu0
    %v4060 = vadd.f32 %v3911, %v3958
    %v4061 = vadd.f32 %v3912, %v3978
    %v4062 = vadd.f32 %v3913, %v3998
    %v4063 = vadd.f32 %v3914, %v4018
    %v4064 = vadd.f32 %v3915, %v4038
    %v4065 = vadd.f32 %v3916, %v4058
    %4066 = vrot.lane.b32.xlu0 %v3048, 110
    %v4067 = vpop.permute.xlu0 %4066
    %4068 = vrot.lane.b32.xlu0 %v3049, 110
    %v4069 = vpop.permute.xlu0 %4068
    %4070 = vrot.lane.b32.xlu0 %v3050, 110
    %v4071 = vpop.permute.xlu0 %4070
    %4072 = vrot.lane.b32.xlu0 %v3051, 110
    %v4073 = vpop.permute.xlu0 %4072
    %4074 = vrot.lane.b32.xlu0 %v3052, 110
    %v4075 = vpop.permute.xlu0 %4074
    %4076 = vrot.lane.b32.xlu0 %v3053, 110
    %v4077 = vpop.permute.xlu0 %4076
    %v4078 = vsel %vm1341, %v4075, %v4077
    %v4079 = vsel %vm1341, %v4073, %v4075
    %v4080 = vsel %vm1341, %v4071, %v4073
    %v4081 = vsel %vm1341, %v4069, %v4071
    %v4082 = vsel %vm1341, %v4067, %v4069
    %v4083 = vsel %vm1341, %v4077, %v4067
    %s4084 = scalar_lea.vmem %s6, 7
    %v4085 = vld [vmem:[%s4084] sm:$0x1]
    %v4087 = vsel %vm1758, %v4085, 0
    %4089 = vmatpush.msra.mxu0 0.0
    %4090 = vmatpush.msra.mxu0 0.0
    %4091 = vmatpush.msra.mxu0 0.0
    %4092 = vmatpush.msra.mxu0 0.0
    %4093 = vmatpush.msra.mxu0 0.0
    %4094 = vmatpush.msra.mxu0 0.0
    %4095 = vmatpush.msra.mxu0 0.0
    %4096 = vmatpush.msra.mxu0 0.0
    %4097 = vmatpush.msra.mxu0 0.0
    %4098 = vmatpush.msra.mxu0 0.0
    %4099 = vmatpush.msra.mxu0 0.0
    %4100 = vmatpush.msra.mxu0 0.0
    %4101 = vmatpush.msra.mxu0 0.0
    %4102 = vmatpush.msra.mxu0 0.0
    %4103 = vmatpush.msra.mxu0 0.0
    %4104 = vmatpush.msra.mxu0 %v4082
    %4105 = vmatmul.f32.gmra.mxu0 %v4087
    %v4106 = vpop.f32.mrf.mxu0
    %v4107 = vadd.f32 0.0, %v4106
    %4108 = vdwg.mxu0
    %4109 = vmatpush.msra.mxu0 0.0
    %4110 = vmatpush.msra.mxu0 0.0
    %4111 = vmatpush.msra.mxu0 0.0
    %4112 = vmatpush.msra.mxu0 0.0
    %4113 = vmatpush.msra.mxu0 0.0
    %4114 = vmatpush.msra.mxu0 0.0
    %4115 = vmatpush.msra.mxu0 0.0
    %4116 = vmatpush.msra.mxu0 0.0
    %4117 = vmatpush.msra.mxu0 0.0
    %4118 = vmatpush.msra.mxu0 0.0
    %4119 = vmatpush.msra.mxu0 0.0
    %4120 = vmatpush.msra.mxu0 0.0
    %4121 = vmatpush.msra.mxu0 0.0
    %4122 = vmatpush.msra.mxu0 0.0
    %4123 = vmatpush.msra.mxu0 0.0
    %4124 = vmatpush.msra.mxu0 %v4081
    %4125 = vmatmul.f32.gmra.mxu0 %v4087
    %v4126 = vpop.f32.mrf.mxu0
    %v4127 = vadd.f32 0.0, %v4126
    %4128 = vdwg.mxu0
    %4129 = vmatpush.msra.mxu0 0.0
    %4130 = vmatpush.msra.mxu0 0.0
    %4131 = vmatpush.msra.mxu0 0.0
    %4132 = vmatpush.msra.mxu0 0.0
    %4133 = vmatpush.msra.mxu0 0.0
    %4134 = vmatpush.msra.mxu0 0.0
    %4135 = vmatpush.msra.mxu0 0.0
    %4136 = vmatpush.msra.mxu0 0.0
    %4137 = vmatpush.msra.mxu0 0.0
    %4138 = vmatpush.msra.mxu0 0.0
    %4139 = vmatpush.msra.mxu0 0.0
    %4140 = vmatpush.msra.mxu0 0.0
    %4141 = vmatpush.msra.mxu0 0.0
    %4142 = vmatpush.msra.mxu0 0.0
    %4143 = vmatpush.msra.mxu0 0.0
    %4144 = vmatpush.msra.mxu0 %v4080
    %4145 = vmatmul.f32.gmra.mxu0 %v4087
    %v4146 = vpop.f32.mrf.mxu0
    %v4147 = vadd.f32 0.0, %v4146
    %4148 = vdwg.mxu0
    %4149 = vmatpush.msra.mxu0 0.0
    %4150 = vmatpush.msra.mxu0 0.0
    %4151 = vmatpush.msra.mxu0 0.0
    %4152 = vmatpush.msra.mxu0 0.0
    %4153 = vmatpush.msra.mxu0 0.0
    %4154 = vmatpush.msra.mxu0 0.0
    %4155 = vmatpush.msra.mxu0 0.0
    %4156 = vmatpush.msra.mxu0 0.0
    %4157 = vmatpush.msra.mxu0 0.0
    %4158 = vmatpush.msra.mxu0 0.0
    %4159 = vmatpush.msra.mxu0 0.0
    %4160 = vmatpush.msra.mxu0 0.0
    %4161 = vmatpush.msra.mxu0 0.0
    %4162 = vmatpush.msra.mxu0 0.0
    %4163 = vmatpush.msra.mxu0 0.0
    %4164 = vmatpush.msra.mxu0 %v4079
    %4165 = vmatmul.f32.gmra.mxu0 %v4087
    %v4166 = vpop.f32.mrf.mxu0
    %v4167 = vadd.f32 0.0, %v4166
    %4168 = vdwg.mxu0
    %4169 = vmatpush.msra.mxu0 0.0
    %4170 = vmatpush.msra.mxu0 0.0
    %4171 = vmatpush.msra.mxu0 0.0
    %4172 = vmatpush.msra.mxu0 0.0
    %4173 = vmatpush.msra.mxu0 0.0
    %4174 = vmatpush.msra.mxu0 0.0
    %4175 = vmatpush.msra.mxu0 0.0
    %4176 = vmatpush.msra.mxu0 0.0
    %4177 = vmatpush.msra.mxu0 0.0
    %4178 = vmatpush.msra.mxu0 0.0
    %4179 = vmatpush.msra.mxu0 0.0
    %4180 = vmatpush.msra.mxu0 0.0
    %4181 = vmatpush.msra.mxu0 0.0
    %4182 = vmatpush.msra.mxu0 0.0
    %4183 = vmatpush.msra.mxu0 0.0
    %4184 = vmatpush.msra.mxu0 %v4078
    %4185 = vmatmul.f32.gmra.mxu0 %v4087
    %v4186 = vpop.f32.mrf.mxu0
    %v4187 = vadd.f32 0.0, %v4186
    %4188 = vdwg.mxu0
    %4189 = vmatpush.msra.mxu0 0.0
    %4190 = vmatpush.msra.mxu0 0.0
    %4191 = vmatpush.msra.mxu0 0.0
    %4192 = vmatpush.msra.mxu0 0.0
    %4193 = vmatpush.msra.mxu0 0.0
    %4194 = vmatpush.msra.mxu0 0.0
    %4195 = vmatpush.msra.mxu0 0.0
    %4196 = vmatpush.msra.mxu0 0.0
    %4197 = vmatpush.msra.mxu0 0.0
    %4198 = vmatpush.msra.mxu0 0.0
    %4199 = vmatpush.msra.mxu0 0.0
    %4200 = vmatpush.msra.mxu0 0.0
    %4201 = vmatpush.msra.mxu0 0.0
    %4202 = vmatpush.msra.mxu0 0.0
    %4203 = vmatpush.msra.mxu0 0.0
    %4204 = vmatpush.msra.mxu0 %v4083
    %4205 = vmatmul.f32.gmra.mxu0 %v4087
    %v4206 = vpop.f32.mrf.mxu0
    %v4207 = vadd.f32 0.0, %v4206
    %4208 = vdwg.mxu0
    %v4209 = vadd.f32 %v4060, %v4107
    %v4210 = vadd.f32 %v4061, %v4127
    %v4211 = vadd.f32 %v4062, %v4147
    %v4212 = vadd.f32 %v4063, %v4167
    %v4213 = vadd.f32 %v4064, %v4187
    %v4214 = vadd.f32 %v4065, %v4207
    %4215 = vrot.lane.b32.xlu0 %v3048, 109
    %v4216 = vpop.permute.xlu0 %4215
    %4217 = vrot.lane.b32.xlu0 %v3049, 109
    %v4218 = vpop.permute.xlu0 %4217
    %4219 = vrot.lane.b32.xlu0 %v3050, 109
    %v4220 = vpop.permute.xlu0 %4219
    %4221 = vrot.lane.b32.xlu0 %v3051, 109
    %v4222 = vpop.permute.xlu0 %4221
    %4223 = vrot.lane.b32.xlu0 %v3052, 109
    %v4224 = vpop.permute.xlu0 %4223
    %4225 = vrot.lane.b32.xlu0 %v3053, 109
    %v4226 = vpop.permute.xlu0 %4225
    %v4227 = vsel %vm1526, %v4224, %v4226
    %v4228 = vsel %vm1526, %v4222, %v4224
    %v4229 = vsel %vm1526, %v4220, %v4222
    %v4230 = vsel %vm1526, %v4218, %v4220
    %v4231 = vsel %vm1526, %v4216, %v4218
    %v4232 = vsel %vm1526, %v4226, %v4216
    %s4233 = scalar_lea.vmem %s6, 8
    %v4234 = vld [vmem:[%s4233] sm:$0x1]
    %v4236 = vsel %vm1758, %v4234, 0
    %4238 = vmatpush.msra.mxu0 0.0
    %4239 = vmatpush.msra.mxu0 0.0
    %4240 = vmatpush.msra.mxu0 0.0
    %4241 = vmatpush.msra.mxu0 0.0
    %4242 = vmatpush.msra.mxu0 0.0
    %4243 = vmatpush.msra.mxu0 0.0
    %4244 = vmatpush.msra.mxu0 0.0
    %4245 = vmatpush.msra.mxu0 0.0
    %4246 = vmatpush.msra.mxu0 0.0
    %4247 = vmatpush.msra.mxu0 0.0
    %4248 = vmatpush.msra.mxu0 0.0
    %4249 = vmatpush.msra.mxu0 0.0
    %4250 = vmatpush.msra.mxu0 0.0
    %4251 = vmatpush.msra.mxu0 0.0
    %4252 = vmatpush.msra.mxu0 0.0
    %4253 = vmatpush.msra.mxu0 %v4231
    %4254 = vmatmul.f32.gmra.mxu0 %v4236
    %v4255 = vpop.f32.mrf.mxu0
    %v4256 = vadd.f32 0.0, %v4255
    %4257 = vdwg.mxu0
    %4258 = vmatpush.msra.mxu0 0.0
    %4259 = vmatpush.msra.mxu0 0.0
    %4260 = vmatpush.msra.mxu0 0.0
    %4261 = vmatpush.msra.mxu0 0.0
    %4262 = vmatpush.msra.mxu0 0.0
    %4263 = vmatpush.msra.mxu0 0.0
    %4264 = vmatpush.msra.mxu0 0.0
    %4265 = vmatpush.msra.mxu0 0.0
    %4266 = vmatpush.msra.mxu0 0.0
    %4267 = vmatpush.msra.mxu0 0.0
    %4268 = vmatpush.msra.mxu0 0.0
    %4269 = vmatpush.msra.mxu0 0.0
    %4270 = vmatpush.msra.mxu0 0.0
    %4271 = vmatpush.msra.mxu0 0.0
    %4272 = vmatpush.msra.mxu0 0.0
    %4273 = vmatpush.msra.mxu0 %v4230
    %4274 = vmatmul.f32.gmra.mxu0 %v4236
    %v4275 = vpop.f32.mrf.mxu0
    %v4276 = vadd.f32 0.0, %v4275
    %4277 = vdwg.mxu0
    %4278 = vmatpush.msra.mxu0 0.0
    %4279 = vmatpush.msra.mxu0 0.0
    %4280 = vmatpush.msra.mxu0 0.0
    %4281 = vmatpush.msra.mxu0 0.0
    %4282 = vmatpush.msra.mxu0 0.0
    %4283 = vmatpush.msra.mxu0 0.0
    %4284 = vmatpush.msra.mxu0 0.0
    %4285 = vmatpush.msra.mxu0 0.0
    %4286 = vmatpush.msra.mxu0 0.0
    %4287 = vmatpush.msra.mxu0 0.0
    %4288 = vmatpush.msra.mxu0 0.0
    %4289 = vmatpush.msra.mxu0 0.0
    %4290 = vmatpush.msra.mxu0 0.0
    %4291 = vmatpush.msra.mxu0 0.0
    %4292 = vmatpush.msra.mxu0 0.0
    %4293 = vmatpush.msra.mxu0 %v4229
    %4294 = vmatmul.f32.gmra.mxu0 %v4236
    %v4295 = vpop.f32.mrf.mxu0
    %v4296 = vadd.f32 0.0, %v4295
    %4297 = vdwg.mxu0
    %4298 = vmatpush.msra.mxu0 0.0
    %4299 = vmatpush.msra.mxu0 0.0
    %4300 = vmatpush.msra.mxu0 0.0
    %4301 = vmatpush.msra.mxu0 0.0
    %4302 = vmatpush.msra.mxu0 0.0
    %4303 = vmatpush.msra.mxu0 0.0
    %4304 = vmatpush.msra.mxu0 0.0
    %4305 = vmatpush.msra.mxu0 0.0
    %4306 = vmatpush.msra.mxu0 0.0
    %4307 = vmatpush.msra.mxu0 0.0
    %4308 = vmatpush.msra.mxu0 0.0
    %4309 = vmatpush.msra.mxu0 0.0
    %4310 = vmatpush.msra.mxu0 0.0
    %4311 = vmatpush.msra.mxu0 0.0
    %4312 = vmatpush.msra.mxu0 0.0
    %4313 = vmatpush.msra.mxu0 %v4228
    %4314 = vmatmul.f32.gmra.mxu0 %v4236
    %v4315 = vpop.f32.mrf.mxu0
    %v4316 = vadd.f32 0.0, %v4315
    %4317 = vdwg.mxu0
    %4318 = vmatpush.msra.mxu0 0.0
    %4319 = vmatpush.msra.mxu0 0.0
    %4320 = vmatpush.msra.mxu0 0.0
    %4321 = vmatpush.msra.mxu0 0.0
    %4322 = vmatpush.msra.mxu0 0.0
    %4323 = vmatpush.msra.mxu0 0.0
    %4324 = vmatpush.msra.mxu0 0.0
    %4325 = vmatpush.msra.mxu0 0.0
    %4326 = vmatpush.msra.mxu0 0.0
    %4327 = vmatpush.msra.mxu0 0.0
    %4328 = vmatpush.msra.mxu0 0.0
    %4329 = vmatpush.msra.mxu0 0.0
    %4330 = vmatpush.msra.mxu0 0.0
    %4331 = vmatpush.msra.mxu0 0.0
    %4332 = vmatpush.msra.mxu0 0.0
    %4333 = vmatpush.msra.mxu0 %v4227
    %4334 = vmatmul.f32.gmra.mxu0 %v4236
    %v4335 = vpop.f32.mrf.mxu0
    %v4336 = vadd.f32 0.0, %v4335
    %4337 = vdwg.mxu0
    %4338 = vmatpush.msra.mxu0 0.0
    %4339 = vmatpush.msra.mxu0 0.0
    %4340 = vmatpush.msra.mxu0 0.0
    %4341 = vmatpush.msra.mxu0 0.0
    %4342 = vmatpush.msra.mxu0 0.0
    %4343 = vmatpush.msra.mxu0 0.0
    %4344 = vmatpush.msra.mxu0 0.0
    %4345 = vmatpush.msra.mxu0 0.0
    %4346 = vmatpush.msra.mxu0 0.0
    %4347 = vmatpush.msra.mxu0 0.0
    %4348 = vmatpush.msra.mxu0 0.0
    %4349 = vmatpush.msra.mxu0 0.0
    %4350 = vmatpush.msra.mxu0 0.0
    %4351 = vmatpush.msra.mxu0 0.0
    %4352 = vmatpush.msra.mxu0 0.0
    %4353 = vmatpush.msra.mxu0 %v4232
    %4354 = vmatmul.f32.gmra.mxu0 %v4236
    %v4355 = vpop.f32.mrf.mxu0
    %v4356 = vadd.f32 0.0, %v4355
    %4357 = vdwg.mxu0
    %v4358 = vadd.f32 %v4209, %v4256
    %v4359 = vadd.f32 %v4210, %v4276
    %v4360 = vadd.f32 %v4211, %v4296
    %v4361 = vadd.f32 %v4212, %v4316
    %v4362 = vadd.f32 %v4213, %v4336
    %v4363 = vadd.f32 %v4214, %v4356
    %v4364 = vld [vmem:[#allocation2] sm:$0x1]
    %4366 = vset.pattern.permute.xlu0 0
    %4367 = vperm.xlu0 %4366, %v4364
    %v4368 = vpop.permute.xlu0 %4367
    %v4370 = vperm.slane %v4368, 0
    %v4371 = vadd.f32 %v4358, %v4370
    %v4372 = vadd.f32 %v4359, %v4370
    %v4373 = vadd.f32 %v4360, %v4370
    %v4374 = vadd.f32 %v4361, %v4370
    %v4375 = vadd.f32 %v4362, %v4370
    %v4376 = vadd.f32 %v4363, %v4370
    %vm4377 = vcmp.gt.f32.partialorder %v53, 0.0
    %v4381 = vrot.slane %v4372, 7
    %v4382 = vrot.slane %v4373, 6
    %vm4383 = vcmask 1040384
    %v4384 = vsel %vm4383, %v4371, %v4381
    %vm4385 = vcmask 1041408
    %v4386 = vsel %vm4385, %v4384, %v4382
    %v4388 = vsel %vm4377, %v4386, -1e+30
    %v4390 = vperm.slane %v4388, 0
    %v4391 = vperm.slane %v4388, 1
    %v4392 = vperm.slane %v4388, 2
    %v4396 = vsel %vm4383, %v4390, -inf
    %v4397 = vsel %vm4383, %v4391, -inf
    %v4398 = vsel %vm4383, %v4392, -inf
    %v4399 = vmax.f32 %v4396, %v4397
    %v4400 = vmax.f32 %v4399, %v4398
    %4401 = vmax.xlane.f32.xlu0 %v4400
    %v4402 = vpop.xlane.xlu0 %4401
    %v4404 = vperm.slane %v4402, 0
    %v4406 = vsub.f32 %v4388, %v4404
    %v4407 = vmul.f32 %v4406, 1.442695
    %v4408 = vpow.pop %v4407
    %v4410 = vperm.slane %v4408, 0
    %v4411 = vperm.slane %v4408, 1
    %v4412 = vperm.slane %v4408, 2
    %v4416 = vsel %vm4383, %v4410, 0.0
    %v4417 = vsel %vm4383, %v4411, 0.0
    %v4418 = vadd.f32 %v4416, %v4417
    %v4419 = vsel %vm4383, %v4412, 0.0
    %v4420 = vadd.f32 %v4418, %v4419
    %4421 = vadd.xlane.f32.xlu0 %v4420
    %v4422 = vpop.xlane.xlu0 %4421
    %v4423 = vrcp.pop %v4422
    %v4425 = vperm.slane %v4423, 0
    %v4427 = vmul.f32 %v4408, %v4425
    %v4428 = vld [vmem:[%s9] sm:$0x1]
    %v4429 = vrot.slane %v50, 3
    %v4430 = vrot.slane %v51, 6
    %v4431 = vrot.slane %v51, 1
    %v4432 = vsel %vm4383, %v50, %v4429
    %vm4433 = vcmask 1042434
    %v4434 = vsel %vm4433, %v4430, %v4431
    %v4435 = vsel %vm4385, %v4432, %v4434
    %v4437 = vmul.f32 %v4427, %v4435
    %v4438 = vld [vmem:[%s8] sm:$0xff]
    %v4439 = vld [vmem:[%s8 + $0x8] sm:$0xff]
    %v4440 = vld [vmem:[%s8 + $0x10] sm:$0xff]
    %v4441 = vld [vmem:[%s8 + $0x18] sm:$0xff]
    %v4442 = vld [vmem:[%s8 + $0x20] sm:$0xff]
    %v4443 = vld [vmem:[%s8 + $0x28] sm:$0xff]
    %v4444 = vld [vmem:[%s8 + $0x30] sm:$0xff]
    %v4445 = vld [vmem:[%s8 + $0x38] sm:$0xff]
    %v4446 = vld [vmem:[%s8 + $0x40] sm:$0xff]
    %v4447 = vld [vmem:[%s8 + $0x48] sm:$0xff]
    %v4448 = vld [vmem:[%s8 + $0x50] sm:$0xff]
    %v4449 = vld [vmem:[%s8 + $0x58] sm:$0xff]
    %v4450 = vld [vmem:[%s8 + $0x60] sm:$0xff]
    %v4451 = vld [vmem:[%s8 + $0x68] sm:$0xff]
    %v4452 = vld [vmem:[%s8 + $0x70] sm:$0xff]
    %v4453 = vld [vmem:[%s8 + $0x78] sm:$0xff]
    %v4454 = vld [vmem:[%s8 + $0x80] sm:$0xff]
    %v4455 = vld [vmem:[%s8 + $0x88] sm:$0xff]
    %v4456 = vld [vmem:[%s8 + $0x90] sm:$0xff]
    %v4457 = vld [vmem:[%s8 + $0x98] sm:$0xff]
    %v4458 = vld [vmem:[%s8 + $0xa0] sm:$0xff]
    %v4459 = vld [vmem:[%s8 + $0xa8] sm:$0xff]
    %v4460 = vld [vmem:[%s8 + $0xb0] sm:$0xff]
    %v4461 = vld [vmem:[%s8 + $0xb8] sm:$0xff]
    %v4462 = vld [vmem:[%s8 + $0xc0] sm:$0xff]
    %v4463 = vld [vmem:[%s8 + $0xc8] sm:$0xff]
    %v4464 = vld [vmem:[%s8 + $0xd0] sm:$0xff]
    %v4465 = vld [vmem:[%s8 + $0xd8] sm:$0xff]
    %v4466 = vld [vmem:[%s8 + $0xe0] sm:$0xff]
    %v4467 = vld [vmem:[%s8 + $0xe8] sm:$0xff]
    %v4468 = vld [vmem:[%s8 + $0xf0] sm:$0xff]
    %v4469 = vld [vmem:[%s8 + $0xf8] sm:$0xff]
    %v4470 = vld [vmem:[%s8 + $0x100] sm:$0xff]
    %v4471 = vld [vmem:[%s8 + $0x108] sm:$0xff]
    %v4472 = vld [vmem:[%s8 + $0x110] sm:$0xff]
    %v4473 = vld [vmem:[%s8 + $0x118] sm:$0xff]
    %v4474 = vld [vmem:[%s8 + $0x120] sm:$0xff]
    %v4475 = vld [vmem:[%s8 + $0x128] sm:$0xff]
    %v4476 = vld [vmem:[%s8 + $0x130] sm:$0xff]
    %v4477 = vld [vmem:[%s8 + $0x138] sm:$0xff]
    %v4478 = vld [vmem:[%s8 + $0x140] sm:$0xff]
    %v4479 = vld [vmem:[%s8 + $0x148] sm:$0xff]
    %v4480 = vld [vmem:[%s8 + $0x150] sm:$0xff]
    %v4481 = vld [vmem:[%s8 + $0x158] sm:$0xff]
    %v4482 = vld [vmem:[%s8 + $0x160] sm:$0xff]
    %v4483 = vld [vmem:[%s8 + $0x168] sm:$0xff]
    %v4484 = vld [vmem:[%s8 + $0x170] sm:$0xff]
    %v4485 = vld [vmem:[%s8 + $0x178] sm:$0xff]
    %v4487 = vperm.slane %v4437, 0
    %v4488 = vperm.slane %v4437, 1
    %v4489 = vperm.slane %v4437, 2
    %4493 = vmatpush.msra.mxu0 %v4453
    %4494 = vmatpush.msra.mxu0 %v4452
    %4495 = vmatpush.msra.mxu0 %v4451
    %4496 = vmatpush.msra.mxu0 %v4450
    %4497 = vmatpush.msra.mxu0 %v4449
    %4498 = vmatpush.msra.mxu0 %v4448
    %4499 = vmatpush.msra.mxu0 %v4447
    %4500 = vmatpush.msra.mxu0 %v4446
    %4501 = vmatpush.msra.mxu0 %v4445
    %4502 = vmatpush.msra.mxu0 %v4444
    %4503 = vmatpush.msra.mxu0 %v4443
    %4504 = vmatpush.msra.mxu0 %v4442
    %4505 = vmatpush.msra.mxu0 %v4441
    %4506 = vmatpush.msra.mxu0 %v4440
    %4507 = vmatpush.msra.mxu0 %v4439
    %4508 = vmatpush.msra.mxu0 %v4438
    %4509 = vmatmul.f32.gmra.mxu0 %v4487
    %v4510 = vpop.f32.mrf.mxu0
    %v4511 = vadd.f32 0.0, %v4510
    %4512 = vdwg.mxu0
    %4513 = vmatpush.msra.mxu0 %v4469
    %4514 = vmatpush.msra.mxu0 %v4468
    %4515 = vmatpush.msra.mxu0 %v4467
    %4516 = vmatpush.msra.mxu0 %v4466
    %4517 = vmatpush.msra.mxu0 %v4465
    %4518 = vmatpush.msra.mxu0 %v4464
    %4519 = vmatpush.msra.mxu0 %v4463
    %4520 = vmatpush.msra.mxu0 %v4462
    %4521 = vmatpush.msra.mxu0 %v4461
    %4522 = vmatpush.msra.mxu0 %v4460
    %4523 = vmatpush.msra.mxu0 %v4459
    %4524 = vmatpush.msra.mxu0 %v4458
    %4525 = vmatpush.msra.mxu0 %v4457
    %4526 = vmatpush.msra.mxu0 %v4456
    %4527 = vmatpush.msra.mxu0 %v4455
    %4528 = vmatpush.msra.mxu0 %v4454
    %4529 = vmatmul.f32.gmra.mxu0 %v4488
    %v4530 = vpop.f32.mrf.mxu0
    %v4531 = vadd.f32 %v4511, %v4530
    %4532 = vdwg.mxu0
    %4533 = vmatpush.msra.mxu0 %v4485
    %4534 = vmatpush.msra.mxu0 %v4484
    %4535 = vmatpush.msra.mxu0 %v4483
    %4536 = vmatpush.msra.mxu0 %v4482
    %4537 = vmatpush.msra.mxu0 %v4481
    %4538 = vmatpush.msra.mxu0 %v4480
    %4539 = vmatpush.msra.mxu0 %v4479
    %4540 = vmatpush.msra.mxu0 %v4478
    %4541 = vmatpush.msra.mxu0 %v4477
    %4542 = vmatpush.msra.mxu0 %v4476
    %4543 = vmatpush.msra.mxu0 %v4475
    %4544 = vmatpush.msra.mxu0 %v4474
    %4545 = vmatpush.msra.mxu0 %v4473
    %4546 = vmatpush.msra.mxu0 %v4472
    %4547 = vmatpush.msra.mxu0 %v4471
    %4548 = vmatpush.msra.mxu0 %v4470
    %4549 = vmatmul.f32.gmra.mxu0 %v4489
    %v4550 = vpop.f32.mrf.mxu0
    %v4551 = vadd.f32 %v4531, %v4550
    %4552 = vdwg.mxu0
    %v4553 = vadd.f32 %v4428, %v4551
    %4554 = vst [vmem:[#allocation1] sm:$0xff] %v50
    %4555 = vst [vmem:[#allocation1 + $0x8] sm:$0xff] %v51
    %s4556 = scalar_lea.vmem [#allocation1], 1
    %v4557 = vld [vmem:[%s4556] ss:$4 sm:$0xff]
    %v4559 = vmul.f32 %v4427, %v4557
    %s4560 = scalar_lea.vmem %s8, 384
    %v4561 = vld [vmem:[%s4560] sm:$0xff]
    %v4562 = vld [vmem:[%s4560 + $0x8] sm:$0xff]
    %v4563 = vld [vmem:[%s4560 + $0x10] sm:$0xff]
    %v4564 = vld [vmem:[%s4560 + $0x18] sm:$0xff]
    %v4565 = vld [vmem:[%s4560 + $0x20] sm:$0xff]
    %v4566 = vld [vmem:[%s4560 + $0x28] sm:$0xff]
    %v4567 = vld [vmem:[%s4560 + $0x30] sm:$0xff]
    %v4568 = vld [vmem:[%s4560 + $0x38] sm:$0xff]
    %v4569 = vld [vmem:[%s4560 + $0x40] sm:$0xff]
    %v4570 = vld [vmem:[%s4560 + $0x48] sm:$0xff]
    %v4571 = vld [vmem:[%s4560 + $0x50] sm:$0xff]
    %v4572 = vld [vmem:[%s4560 + $0x58] sm:$0xff]
    %v4573 = vld [vmem:[%s4560 + $0x60] sm:$0xff]
    %v4574 = vld [vmem:[%s4560 + $0x68] sm:$0xff]
    %v4575 = vld [vmem:[%s4560 + $0x70] sm:$0xff]
    %v4576 = vld [vmem:[%s4560 + $0x78] sm:$0xff]
    %v4577 = vld [vmem:[%s4560 + $0x80] sm:$0xff]
    %v4578 = vld [vmem:[%s4560 + $0x88] sm:$0xff]
    %v4579 = vld [vmem:[%s4560 + $0x90] sm:$0xff]
    %v4580 = vld [vmem:[%s4560 + $0x98] sm:$0xff]
    %v4581 = vld [vmem:[%s4560 + $0xa0] sm:$0xff]
    %v4582 = vld [vmem:[%s4560 + $0xa8] sm:$0xff]
    %v4583 = vld [vmem:[%s4560 + $0xb0] sm:$0xff]
    %v4584 = vld [vmem:[%s4560 + $0xb8] sm:$0xff]
    %v4585 = vld [vmem:[%s4560 + $0xc0] sm:$0xff]
    %v4586 = vld [vmem:[%s4560 + $0xc8] sm:$0xff]
    %v4587 = vld [vmem:[%s4560 + $0xd0] sm:$0xff]
    %v4588 = vld [vmem:[%s4560 + $0xd8] sm:$0xff]
    %v4589 = vld [vmem:[%s4560 + $0xe0] sm:$0xff]
    %v4590 = vld [vmem:[%s4560 + $0xe8] sm:$0xff]
    %v4591 = vld [vmem:[%s4560 + $0xf0] sm:$0xff]
    %v4592 = vld [vmem:[%s4560 + $0xf8] sm:$0xff]
    %v4593 = vld [vmem:[%s4560 + $0x100] sm:$0xff]
    %v4594 = vld [vmem:[%s4560 + $0x108] sm:$0xff]
    %v4595 = vld [vmem:[%s4560 + $0x110] sm:$0xff]
    %v4596 = vld [vmem:[%s4560 + $0x118] sm:$0xff]
    %v4597 = vld [vmem:[%s4560 + $0x120] sm:$0xff]
    %v4598 = vld [vmem:[%s4560 + $0x128] sm:$0xff]
    %v4599 = vld [vmem:[%s4560 + $0x130] sm:$0xff]
    %v4600 = vld [vmem:[%s4560 + $0x138] sm:$0xff]
    %v4601 = vld [vmem:[%s4560 + $0x140] sm:$0xff]
    %v4602 = vld [vmem:[%s4560 + $0x148] sm:$0xff]
    %v4603 = vld [vmem:[%s4560 + $0x150] sm:$0xff]
    %v4604 = vld [vmem:[%s4560 + $0x158] sm:$0xff]
    %v4605 = vld [vmem:[%s4560 + $0x160] sm:$0xff]
    %v4606 = vld [vmem:[%s4560 + $0x168] sm:$0xff]
    %v4607 = vld [vmem:[%s4560 + $0x170] sm:$0xff]
    %v4608 = vld [vmem:[%s4560 + $0x178] sm:$0xff]
    %v4610 = vperm.slane %v4559, 0
    %v4611 = vperm.slane %v4559, 1
    %v4612 = vperm.slane %v4559, 2
    %4616 = vmatpush.msra.mxu0 %v4576
    %4617 = vmatpush.msra.mxu0 %v4575
    %4618 = vmatpush.msra.mxu0 %v4574
    %4619 = vmatpush.msra.mxu0 %v4573
    %4620 = vmatpush.msra.mxu0 %v4572
    %4621 = vmatpush.msra.mxu0 %v4571
    %4622 = vmatpush.msra.mxu0 %v4570
    %4623 = vmatpush.msra.mxu0 %v4569
    %4624 = vmatpush.msra.mxu0 %v4568
    %4625 = vmatpush.msra.mxu0 %v4567
    %4626 = vmatpush.msra.mxu0 %v4566
    %4627 = vmatpush.msra.mxu0 %v4565
    %4628 = vmatpush.msra.mxu0 %v4564
    %4629 = vmatpush.msra.mxu0 %v4563
    %4630 = vmatpush.msra.mxu0 %v4562
    %4631 = vmatpush.msra.mxu0 %v4561
    %4632 = vmatmul.f32.gmra.mxu0 %v4610
    %v4633 = vpop.f32.mrf.mxu0
    %v4634 = vadd.f32 0.0, %v4633
    %4635 = vdwg.mxu0
    %4636 = vmatpush.msra.mxu0 %v4592
    %4637 = vmatpush.msra.mxu0 %v4591
    %4638 = vmatpush.msra.mxu0 %v4590
    %4639 = vmatpush.msra.mxu0 %v4589
    %4640 = vmatpush.msra.mxu0 %v4588
    %4641 = vmatpush.msra.mxu0 %v4587
    %4642 = vmatpush.msra.mxu0 %v4586
    %4643 = vmatpush.msra.mxu0 %v4585
    %4644 = vmatpush.msra.mxu0 %v4584
    %4645 = vmatpush.msra.mxu0 %v4583
    %4646 = vmatpush.msra.mxu0 %v4582
    %4647 = vmatpush.msra.mxu0 %v4581
    %4648 = vmatpush.msra.mxu0 %v4580
    %4649 = vmatpush.msra.mxu0 %v4579
    %4650 = vmatpush.msra.mxu0 %v4578
    %4651 = vmatpush.msra.mxu0 %v4577
    %4652 = vmatmul.f32.gmra.mxu0 %v4611
    %v4653 = vpop.f32.mrf.mxu0
    %v4654 = vadd.f32 %v4634, %v4653
    %4655 = vdwg.mxu0
    %4656 = vmatpush.msra.mxu0 %v4608
    %4657 = vmatpush.msra.mxu0 %v4607
    %4658 = vmatpush.msra.mxu0 %v4606
    %4659 = vmatpush.msra.mxu0 %v4605
    %4660 = vmatpush.msra.mxu0 %v4604
    %4661 = vmatpush.msra.mxu0 %v4603
    %4662 = vmatpush.msra.mxu0 %v4602
    %4663 = vmatpush.msra.mxu0 %v4601
    %4664 = vmatpush.msra.mxu0 %v4600
    %4665 = vmatpush.msra.mxu0 %v4599
    %4666 = vmatpush.msra.mxu0 %v4598
    %4667 = vmatpush.msra.mxu0 %v4597
    %4668 = vmatpush.msra.mxu0 %v4596
    %4669 = vmatpush.msra.mxu0 %v4595
    %4670 = vmatpush.msra.mxu0 %v4594
    %4671 = vmatpush.msra.mxu0 %v4593
    %4672 = vmatmul.f32.gmra.mxu0 %v4612
    %v4673 = vpop.f32.mrf.mxu0
    %v4674 = vadd.f32 %v4654, %v4673
    %4675 = vdwg.mxu0
    %v4676 = vadd.f32 %v4553, %v4674
    %4677 = vst [vmem:[#allocation1] sm:$0xff] %v50
    %4678 = vst [vmem:[#allocation1 + $0x8] sm:$0xff] %v51
    %s4679 = scalar_lea.vmem [#allocation1], 2
    %v4680 = vld [vmem:[%s4679] ss:$4 sm:$0xff]
    %v4682 = vmul.f32 %v4427, %v4680
    %s4683 = scalar_lea.vmem %s8, 768
    %v4684 = vld [vmem:[%s4683] sm:$0xff]
    %v4685 = vld [vmem:[%s4683 + $0x8] sm:$0xff]
    %v4686 = vld [vmem:[%s4683 + $0x10] sm:$0xff]
    %v4687 = vld [vmem:[%s4683 + $0x18] sm:$0xff]
    %v4688 = vld [vmem:[%s4683 + $0x20] sm:$0xff]
    %v4689 = vld [vmem:[%s4683 + $0x28] sm:$0xff]
    %v4690 = vld [vmem:[%s4683 + $0x30] sm:$0xff]
    %v4691 = vld [vmem:[%s4683 + $0x38] sm:$0xff]
    %v4692 = vld [vmem:[%s4683 + $0x40] sm:$0xff]
    %v4693 = vld [vmem:[%s4683 + $0x48] sm:$0xff]
    %v4694 = vld [vmem:[%s4683 + $0x50] sm:$0xff]
    %v4695 = vld [vmem:[%s4683 + $0x58] sm:$0xff]
    %v4696 = vld [vmem:[%s4683 + $0x60] sm:$0xff]
    %v4697 = vld [vmem:[%s4683 + $0x68] sm:$0xff]
    %v4698 = vld [vmem:[%s4683 + $0x70] sm:$0xff]
    %v4699 = vld [vmem:[%s4683 + $0x78] sm:$0xff]
    %v4700 = vld [vmem:[%s4683 + $0x80] sm:$0xff]
    %v4701 = vld [vmem:[%s4683 + $0x88] sm:$0xff]
    %v4702 = vld [vmem:[%s4683 + $0x90] sm:$0xff]
    %v4703 = vld [vmem:[%s4683 + $0x98] sm:$0xff]
    %v4704 = vld [vmem:[%s4683 + $0xa0] sm:$0xff]
    %v4705 = vld [vmem:[%s4683 + $0xa8] sm:$0xff]
    %v4706 = vld [vmem:[%s4683 + $0xb0] sm:$0xff]
    %v4707 = vld [vmem:[%s4683 + $0xb8] sm:$0xff]
    %v4708 = vld [vmem:[%s4683 + $0xc0] sm:$0xff]
    %v4709 = vld [vmem:[%s4683 + $0xc8] sm:$0xff]
    %v4710 = vld [vmem:[%s4683 + $0xd0] sm:$0xff]
    %v4711 = vld [vmem:[%s4683 + $0xd8] sm:$0xff]
    %v4712 = vld [vmem:[%s4683 + $0xe0] sm:$0xff]
    %v4713 = vld [vmem:[%s4683 + $0xe8] sm:$0xff]
    %v4714 = vld [vmem:[%s4683 + $0xf0] sm:$0xff]
    %v4715 = vld [vmem:[%s4683 + $0xf8] sm:$0xff]
    %v4716 = vld [vmem:[%s4683 + $0x100] sm:$0xff]
    %v4717 = vld [vmem:[%s4683 + $0x108] sm:$0xff]
    %v4718 = vld [vmem:[%s4683 + $0x110] sm:$0xff]
    %v4719 = vld [vmem:[%s4683 + $0x118] sm:$0xff]
    %v4720 = vld [vmem:[%s4683 + $0x120] sm:$0xff]
    %v4721 = vld [vmem:[%s4683 + $0x128] sm:$0xff]
    %v4722 = vld [vmem:[%s4683 + $0x130] sm:$0xff]
    %v4723 = vld [vmem:[%s4683 + $0x138] sm:$0xff]
    %v4724 = vld [vmem:[%s4683 + $0x140] sm:$0xff]
    %v4725 = vld [vmem:[%s4683 + $0x148] sm:$0xff]
    %v4726 = vld [vmem:[%s4683 + $0x150] sm:$0xff]
    %v4727 = vld [vmem:[%s4683 + $0x158] sm:$0xff]
    %v4728 = vld [vmem:[%s4683 + $0x160] sm:$0xff]
    %v4729 = vld [vmem:[%s4683 + $0x168] sm:$0xff]
    %v4730 = vld [vmem:[%s4683 + $0x170] sm:$0xff]
    %v4731 = vld [vmem:[%s4683 + $0x178] sm:$0xff]
    %v4733 = vperm.slane %v4682, 0
    %v4734 = vperm.slane %v4682, 1
    %v4735 = vperm.slane %v4682, 2
    %4739 = vmatpush.msra.mxu0 %v4699
    %4740 = vmatpush.msra.mxu0 %v4698
    %4741 = vmatpush.msra.mxu0 %v4697
    %4742 = vmatpush.msra.mxu0 %v4696
    %4743 = vmatpush.msra.mxu0 %v4695
    %4744 = vmatpush.msra.mxu0 %v4694
    %4745 = vmatpush.msra.mxu0 %v4693
    %4746 = vmatpush.msra.mxu0 %v4692
    %4747 = vmatpush.msra.mxu0 %v4691
    %4748 = vmatpush.msra.mxu0 %v4690
    %4749 = vmatpush.msra.mxu0 %v4689
    %4750 = vmatpush.msra.mxu0 %v4688
    %4751 = vmatpush.msra.mxu0 %v4687
    %4752 = vmatpush.msra.mxu0 %v4686
    %4753 = vmatpush.msra.mxu0 %v4685
    %4754 = vmatpush.msra.mxu0 %v4684
    %4755 = vmatmul.f32.gmra.mxu0 %v4733
    %v4756 = vpop.f32.mrf.mxu0
    %v4757 = vadd.f32 0.0, %v4756
    %4758 = vdwg.mxu0
    %4759 = vmatpush.msra.mxu0 %v4715
    %4760 = vmatpush.msra.mxu0 %v4714
    %4761 = vmatpush.msra.mxu0 %v4713
    %4762 = vmatpush.msra.mxu0 %v4712
    %4763 = vmatpush.msra.mxu0 %v4711
    %4764 = vmatpush.msra.mxu0 %v4710
    %4765 = vmatpush.msra.mxu0 %v4709
    %4766 = vmatpush.msra.mxu0 %v4708
    %4767 = vmatpush.msra.mxu0 %v4707
    %4768 = vmatpush.msra.mxu0 %v4706
    %4769 = vmatpush.msra.mxu0 %v4705
    %4770 = vmatpush.msra.mxu0 %v4704
    %4771 = vmatpush.msra.mxu0 %v4703
    %4772 = vmatpush.msra.mxu0 %v4702
    %4773 = vmatpush.msra.mxu0 %v4701
    %4774 = vmatpush.msra.mxu0 %v4700
    %4775 = vmatmul.f32.gmra.mxu0 %v4734
    %v4776 = vpop.f32.mrf.mxu0
    %v4777 = vadd.f32 %v4757, %v4776
    %4778 = vdwg.mxu0
    %4779 = vmatpush.msra.mxu0 %v4731
    %4780 = vmatpush.msra.mxu0 %v4730
    %4781 = vmatpush.msra.mxu0 %v4729
    %4782 = vmatpush.msra.mxu0 %v4728
    %4783 = vmatpush.msra.mxu0 %v4727
    %4784 = vmatpush.msra.mxu0 %v4726
    %4785 = vmatpush.msra.mxu0 %v4725
    %4786 = vmatpush.msra.mxu0 %v4724
    %4787 = vmatpush.msra.mxu0 %v4723
    %4788 = vmatpush.msra.mxu0 %v4722
    %4789 = vmatpush.msra.mxu0 %v4721
    %4790 = vmatpush.msra.mxu0 %v4720
    %4791 = vmatpush.msra.mxu0 %v4719
    %4792 = vmatpush.msra.mxu0 %v4718
    %4793 = vmatpush.msra.mxu0 %v4717
    %4794 = vmatpush.msra.mxu0 %v4716
    %4795 = vmatmul.f32.gmra.mxu0 %v4735
    %v4796 = vpop.f32.mrf.mxu0
    %v4797 = vadd.f32 %v4777, %v4796
    %4798 = vdwg.mxu0
    %v4799 = vadd.f32 %v4676, %v4797
    %v4800 = vld [vmem:[%s10] sm:$0xff]
    %v4801 = vld [vmem:[%s10 + $0x8] sm:$0xff]
    %v4802 = vld [vmem:[%s10 + $0x10] sm:$0xff]
    %v4803 = vld [vmem:[%s10 + $0x18] sm:$0xff]
    %v4804 = vld [vmem:[%s11] sm:$0x1]
    %vm4805 = vcmask 261120
    %v4807 = vsel %vm4805, %v4799, 0
    %4809 = vmatpush.msra.mxu0 0.0
    %4810 = vmatpush.msra.mxu0 0.0
    %4811 = vmatpush.msra.mxu0 0.0
    %4812 = vmatpush.msra.mxu0 0.0
    %4813 = vmatpush.msra.mxu0 0.0
    %4814 = vmatpush.msra.mxu0 0.0
    %4815 = vmatpush.msra.mxu0 0.0
    %4816 = vmatpush.msra.mxu0 0.0
    %4817 = vmatpush.msra.mxu0 0.0
    %4818 = vmatpush.msra.mxu0 0.0
    %4819 = vmatpush.msra.mxu0 0.0
    %4820 = vmatpush.msra.mxu0 0.0
    %4821 = vmatpush.msra.mxu0 %v4803
    %4822 = vmatpush.msra.mxu0 %v4802
    %4823 = vmatpush.msra.mxu0 %v4801
    %4824 = vmatpush.msra.mxu0 %v4800
    %4825 = vmatmul.f32.gmra.mxu0 %v4807
    %v4826 = vpop.f32.mrf.mxu0
    %v4827 = vadd.f32 %v4804, %v4826
    %4828 = vdwg.mxu0
    %v4829 = vmax.f32 %v4827, 0.0
    %v4830 = vld [vmem:[%s12] sm:$0xff]
    %v4831 = vld [vmem:[%s12 + $0x8] sm:$0xff]
    %v4832 = vld [vmem:[%s12 + $0x10] sm:$0xff]
    %v4833 = vld [vmem:[%s12 + $0x18] sm:$0xff]
    %v4834 = vld [vmem:[%s13] sm:$0x1]
    %v4836 = vsel %vm4805, %v4829, 0
    %4838 = vmatpush.msra.mxu0 0.0
    %4839 = vmatpush.msra.mxu0 0.0
    %4840 = vmatpush.msra.mxu0 0.0
    %4841 = vmatpush.msra.mxu0 0.0
    %4842 = vmatpush.msra.mxu0 0.0
    %4843 = vmatpush.msra.mxu0 0.0
    %4844 = vmatpush.msra.mxu0 0.0
    %4845 = vmatpush.msra.mxu0 0.0
    %4846 = vmatpush.msra.mxu0 0.0
    %4847 = vmatpush.msra.mxu0 0.0
    %4848 = vmatpush.msra.mxu0 0.0
    %4849 = vmatpush.msra.mxu0 0.0
    %4850 = vmatpush.msra.mxu0 %v4833
    %4851 = vmatpush.msra.mxu0 %v4832
    %4852 = vmatpush.msra.mxu0 %v4831
    %4853 = vmatpush.msra.mxu0 %v4830
    %4854 = vmatmul.f32.gmra.mxu0 %v4836
    %v4855 = vpop.f32.mrf.mxu0
    %v4856 = vadd.f32 %v4834, %v4855
    %4857 = vdwg.mxu0
    %v4858 = vmul.f32 %v4856, %v4856
    %v4859 = vsel %vm4383, %v4858, 0.0
    %4860 = vadd.xlane.f32.xlu0 %v4859
    %v4861 = vpop.xlane.xlu0 %4860
    %v4862 = vmax.f32 %v4861, 1e-24
    %v4863 = vrsqrt.pop %v4862
    %v4864 = vmul.f32 %v4863, %v4862
    %v4865 = vmul.f32 %v4864, %v4863
    %v4866 = vmul.f32 0.5, %v4865
    %v4867 = vsub.f32 1.5, %v4866
    %v4868 = vmul.f32 %v4863, %v4867
    %vm4869 = vweird.f32 %v4862
    %vm4870 = vweird.f32 %v4863
    %vm4871 = vmor %vm4869, %vm4870
    %v4872 = vsel %vm4871, %v4863, %v4868
    %v4873 = vmul.f32 %v4856, %v4872
    %4874 = vst [vmem:[#allocation3] sm:$0x1] %v4873
    %v4875 = vrot.slane %v53, 3
    %vm4877 = vcmp.gt.f32.partialorder %v4875, 0.0
    %v4881 = vrot.slane %v4375, 7
    %v4882 = vrot.slane %v4376, 6
    %v4883 = vsel %vm4383, %v4374, %v4881
    %v4884 = vsel %vm4385, %v4883, %v4882
    %v4886 = vsel %vm4877, %v4884, -1e+30
    %v4888 = vperm.slane %v4886, 0
    %v4889 = vperm.slane %v4886, 1
    %v4890 = vperm.slane %v4886, 2
    %v4894 = vsel %vm4383, %v4888, -inf
    %v4895 = vsel %vm4383, %v4889, -inf
    %v4896 = vsel %vm4383, %v4890, -inf
    %v4897 = vmax.f32 %v4894, %v4895
    %v4898 = vmax.f32 %v4897, %v4896
    %4899 = vmax.xlane.f32.xlu0 %v4898
    %v4900 = vpop.xlane.xlu0 %4899
    %v4902 = vperm.slane %v4900, 0
    %v4904 = vsub.f32 %v4886, %v4902
    %v4905 = vmul.f32 %v4904, 1.442695
    %v4906 = vpow.pop %v4905
    %v4908 = vperm.slane %v4906, 0
    %v4909 = vperm.slane %v4906, 1
    %v4910 = vperm.slane %v4906, 2
    %v4914 = vsel %vm4383, %v4908, 0.0
    %v4915 = vsel %vm4383, %v4909, 0.0
    %v4916 = vadd.f32 %v4914, %v4915
    %v4917 = vsel %vm4383, %v4910, 0.0
    %v4918 = vadd.f32 %v4916, %v4917
    %4919 = vadd.xlane.f32.xlu0 %v4918
    %v4920 = vpop.xlane.xlu0 %4919
    %v4921 = vrcp.pop %v4920
    %v4923 = vperm.slane %v4921, 0
    %v4925 = vmul.f32 %v4906, %v4923
    %v4926 = vld [vmem:[%s9] sm:$0x1]
    %v4927 = vrot.slane %v51, 3
    %v4928 = vrot.slane %v52, 6
    %v4929 = vrot.slane %v52, 1
    %v4930 = vsel %vm4383, %v51, %v4927
    %v4931 = vsel %vm4433, %v4928, %v4929
    %v4932 = vsel %vm4385, %v4930, %v4931
    %v4933 = vrot.slane %v4932, 1
    %v4935 = vmul.f32 %v4925, %v4933
    %v4936 = vld [vmem:[%s8] sm:$0xff]
    %v4937 = vld [vmem:[%s8 + $0x8] sm:$0xff]
    %v4938 = vld [vmem:[%s8 + $0x10] sm:$0xff]
    %v4939 = vld [vmem:[%s8 + $0x18] sm:$0xff]
    %v4940 = vld [vmem:[%s8 + $0x20] sm:$0xff]
    %v4941 = vld [vmem:[%s8 + $0x28] sm:$0xff]
    %v4942 = vld [vmem:[%s8 + $0x30] sm:$0xff]
    %v4943 = vld [vmem:[%s8 + $0x38] sm:$0xff]
    %v4944 = vld [vmem:[%s8 + $0x40] sm:$0xff]
    %v4945 = vld [vmem:[%s8 + $0x48] sm:$0xff]
    %v4946 = vld [vmem:[%s8 + $0x50] sm:$0xff]
    %v4947 = vld [vmem:[%s8 + $0x58] sm:$0xff]
    %v4948 = vld [vmem:[%s8 + $0x60] sm:$0xff]
    %v4949 = vld [vmem:[%s8 + $0x68] sm:$0xff]
    %v4950 = vld [vmem:[%s8 + $0x70] sm:$0xff]
    %v4951 = vld [vmem:[%s8 + $0x78] sm:$0xff]
    %v4952 = vld [vmem:[%s8 + $0x80] sm:$0xff]
    %v4953 = vld [vmem:[%s8 + $0x88] sm:$0xff]
    %v4954 = vld [vmem:[%s8 + $0x90] sm:$0xff]
    %v4955 = vld [vmem:[%s8 + $0x98] sm:$0xff]
    %v4956 = vld [vmem:[%s8 + $0xa0] sm:$0xff]
    %v4957 = vld [vmem:[%s8 + $0xa8] sm:$0xff]
    %v4958 = vld [vmem:[%s8 + $0xb0] sm:$0xff]
    %v4959 = vld [vmem:[%s8 + $0xb8] sm:$0xff]
    %v4960 = vld [vmem:[%s8 + $0xc0] sm:$0xff]
    %v4961 = vld [vmem:[%s8 + $0xc8] sm:$0xff]
    %v4962 = vld [vmem:[%s8 + $0xd0] sm:$0xff]
    %v4963 = vld [vmem:[%s8 + $0xd8] sm:$0xff]
    %v4964 = vld [vmem:[%s8 + $0xe0] sm:$0xff]
    %v4965 = vld [vmem:[%s8 + $0xe8] sm:$0xff]
    %v4966 = vld [vmem:[%s8 + $0xf0] sm:$0xff]
    %v4967 = vld [vmem:[%s8 + $0xf8] sm:$0xff]
    %v4968 = vld [vmem:[%s8 + $0x100] sm:$0xff]
    %v4969 = vld [vmem:[%s8 + $0x108] sm:$0xff]
    %v4970 = vld [vmem:[%s8 + $0x110] sm:$0xff]
    %v4971 = vld [vmem:[%s8 + $0x118] sm:$0xff]
    %v4972 = vld [vmem:[%s8 + $0x120] sm:$0xff]
    %v4973 = vld [vmem:[%s8 + $0x128] sm:$0xff]
    %v4974 = vld [vmem:[%s8 + $0x130] sm:$0xff]
    %v4975 = vld [vmem:[%s8 + $0x138] sm:$0xff]
    %v4976 = vld [vmem:[%s8 + $0x140] sm:$0xff]
    %v4977 = vld [vmem:[%s8 + $0x148] sm:$0xff]
    %v4978 = vld [vmem:[%s8 + $0x150] sm:$0xff]
    %v4979 = vld [vmem:[%s8 + $0x158] sm:$0xff]
    %v4980 = vld [vmem:[%s8 + $0x160] sm:$0xff]
    %v4981 = vld [vmem:[%s8 + $0x168] sm:$0xff]
    %v4982 = vld [vmem:[%s8 + $0x170] sm:$0xff]
    %v4983 = vld [vmem:[%s8 + $0x178] sm:$0xff]
    %v4985 = vperm.slane %v4935, 0
    %v4986 = vperm.slane %v4935, 1
    %v4987 = vperm.slane %v4935, 2
    %4991 = vmatpush.msra.mxu0 %v4951
    %4992 = vmatpush.msra.mxu0 %v4950
    %4993 = vmatpush.msra.mxu0 %v4949
    %4994 = vmatpush.msra.mxu0 %v4948
    %4995 = vmatpush.msra.mxu0 %v4947
    %4996 = vmatpush.msra.mxu0 %v4946
    %4997 = vmatpush.msra.mxu0 %v4945
    %4998 = vmatpush.msra.mxu0 %v4944
    %4999 = vmatpush.msra.mxu0 %v4943
    %5000 = vmatpush.msra.mxu0 %v4942
    %5001 = vmatpush.msra.mxu0 %v4941
    %5002 = vmatpush.msra.mxu0 %v4940
    %5003 = vmatpush.msra.mxu0 %v4939
    %5004 = vmatpush.msra.mxu0 %v4938
    %5005 = vmatpush.msra.mxu0 %v4937
    %5006 = vmatpush.msra.mxu0 %v4936
    %5007 = vmatmul.f32.gmra.mxu0 %v4985
    %v5008 = vpop.f32.mrf.mxu0
    %v5009 = vadd.f32 0.0, %v5008
    %5010 = vdwg.mxu0
    %5011 = vmatpush.msra.mxu0 %v4967
    %5012 = vmatpush.msra.mxu0 %v4966
    %5013 = vmatpush.msra.mxu0 %v4965
    %5014 = vmatpush.msra.mxu0 %v4964
    %5015 = vmatpush.msra.mxu0 %v4963
    %5016 = vmatpush.msra.mxu0 %v4962
    %5017 = vmatpush.msra.mxu0 %v4961
    %5018 = vmatpush.msra.mxu0 %v4960
    %5019 = vmatpush.msra.mxu0 %v4959
    %5020 = vmatpush.msra.mxu0 %v4958
    %5021 = vmatpush.msra.mxu0 %v4957
    %5022 = vmatpush.msra.mxu0 %v4956
    %5023 = vmatpush.msra.mxu0 %v4955
    %5024 = vmatpush.msra.mxu0 %v4954
    %5025 = vmatpush.msra.mxu0 %v4953
    %5026 = vmatpush.msra.mxu0 %v4952
    %5027 = vmatmul.f32.gmra.mxu0 %v4986
    %v5028 = vpop.f32.mrf.mxu0
    %v5029 = vadd.f32 %v5009, %v5028
    %5030 = vdwg.mxu0
    %5031 = vmatpush.msra.mxu0 %v4983
    %5032 = vmatpush.msra.mxu0 %v4982
    %5033 = vmatpush.msra.mxu0 %v4981
    %5034 = vmatpush.msra.mxu0 %v4980
    %5035 = vmatpush.msra.mxu0 %v4979
    %5036 = vmatpush.msra.mxu0 %v4978
    %5037 = vmatpush.msra.mxu0 %v4977
    %5038 = vmatpush.msra.mxu0 %v4976
    %5039 = vmatpush.msra.mxu0 %v4975
    %5040 = vmatpush.msra.mxu0 %v4974
    %5041 = vmatpush.msra.mxu0 %v4973
    %5042 = vmatpush.msra.mxu0 %v4972
    %5043 = vmatpush.msra.mxu0 %v4971
    %5044 = vmatpush.msra.mxu0 %v4970
    %5045 = vmatpush.msra.mxu0 %v4969
    %5046 = vmatpush.msra.mxu0 %v4968
    %5047 = vmatmul.f32.gmra.mxu0 %v4987
    %v5048 = vpop.f32.mrf.mxu0
    %v5049 = vadd.f32 %v5029, %v5048
    %5050 = vdwg.mxu0
    %v5051 = vadd.f32 %v4926, %v5049
    %5052 = vst [vmem:[#allocation1] sm:$0xff] %v51
    %5053 = vst [vmem:[#allocation1 + $0x8] sm:$0xff] %v52
    %s5054 = scalar_lea.vmem [#allocation1], 1
    %v5055 = vld [vmem:[%s5054] ss:$4 sm:$0xff]
    %v5056 = vrot.slane %v5055, 1
    %v5058 = vmul.f32 %v4925, %v5056
    %v5059 = vld [vmem:[%s4560] sm:$0xff]
    %v5060 = vld [vmem:[%s4560 + $0x8] sm:$0xff]
    %v5061 = vld [vmem:[%s4560 + $0x10] sm:$0xff]
    %v5062 = vld [vmem:[%s4560 + $0x18] sm:$0xff]
    %v5063 = vld [vmem:[%s4560 + $0x20] sm:$0xff]
    %v5064 = vld [vmem:[%s4560 + $0x28] sm:$0xff]
    %v5065 = vld [vmem:[%s4560 + $0x30] sm:$0xff]
    %v5066 = vld [vmem:[%s4560 + $0x38] sm:$0xff]
    %v5067 = vld [vmem:[%s4560 + $0x40] sm:$0xff]
    %v5068 = vld [vmem:[%s4560 + $0x48] sm:$0xff]
    %v5069 = vld [vmem:[%s4560 + $0x50] sm:$0xff]
    %v5070 = vld [vmem:[%s4560 + $0x58] sm:$0xff]
    %v5071 = vld [vmem:[%s4560 + $0x60] sm:$0xff]
    %v5072 = vld [vmem:[%s4560 + $0x68] sm:$0xff]
    %v5073 = vld [vmem:[%s4560 + $0x70] sm:$0xff]
    %v5074 = vld [vmem:[%s4560 + $0x78] sm:$0xff]
    %v5075 = vld [vmem:[%s4560 + $0x80] sm:$0xff]
    %v5076 = vld [vmem:[%s4560 + $0x88] sm:$0xff]
    %v5077 = vld [vmem:[%s4560 + $0x90] sm:$0xff]
    %v5078 = vld [vmem:[%s4560 + $0x98] sm:$0xff]
    %v5079 = vld [vmem:[%s4560 + $0xa0] sm:$0xff]
    %v5080 = vld [vmem:[%s4560 + $0xa8] sm:$0xff]
    %v5081 = vld [vmem:[%s4560 + $0xb0] sm:$0xff]
    %v5082 = vld [vmem:[%s4560 + $0xb8] sm:$0xff]
    %v5083 = vld [vmem:[%s4560 + $0xc0] sm:$0xff]
    %v5084 = vld [vmem:[%s4560 + $0xc8] sm:$0xff]
    %v5085 = vld [vmem:[%s4560 + $0xd0] sm:$0xff]
    %v5086 = vld [vmem:[%s4560 + $0xd8] sm:$0xff]
    %v5087 = vld [vmem:[%s4560 + $0xe0] sm:$0xff]
    %v5088 = vld [vmem:[%s4560 + $0xe8] sm:$0xff]
    %v5089 = vld [vmem:[%s4560 + $0xf0] sm:$0xff]
    %v5090 = vld [vmem:[%s4560 + $0xf8] sm:$0xff]
    %v5091 = vld [vmem:[%s4560 + $0x100] sm:$0xff]
    %v5092 = vld [vmem:[%s4560 + $0x108] sm:$0xff]
    %v5093 = vld [vmem:[%s4560 + $0x110] sm:$0xff]
    %v5094 = vld [vmem:[%s4560 + $0x118] sm:$0xff]
    %v5095 = vld [vmem:[%s4560 + $0x120] sm:$0xff]
    %v5096 = vld [vmem:[%s4560 + $0x128] sm:$0xff]
    %v5097 = vld [vmem:[%s4560 + $0x130] sm:$0xff]
    %v5098 = vld [vmem:[%s4560 + $0x138] sm:$0xff]
    %v5099 = vld [vmem:[%s4560 + $0x140] sm:$0xff]
    %v5100 = vld [vmem:[%s4560 + $0x148] sm:$0xff]
    %v5101 = vld [vmem:[%s4560 + $0x150] sm:$0xff]
    %v5102 = vld [vmem:[%s4560 + $0x158] sm:$0xff]
    %v5103 = vld [vmem:[%s4560 + $0x160] sm:$0xff]
    %v5104 = vld [vmem:[%s4560 + $0x168] sm:$0xff]
    %v5105 = vld [vmem:[%s4560 + $0x170] sm:$0xff]
    %v5106 = vld [vmem:[%s4560 + $0x178] sm:$0xff]
    %v5108 = vperm.slane %v5058, 0
    %v5109 = vperm.slane %v5058, 1
    %v5110 = vperm.slane %v5058, 2
    %5114 = vmatpush.msra.mxu0 %v5074
    %5115 = vmatpush.msra.mxu0 %v5073
    %5116 = vmatpush.msra.mxu0 %v5072
    %5117 = vmatpush.msra.mxu0 %v5071
    %5118 = vmatpush.msra.mxu0 %v5070
    %5119 = vmatpush.msra.mxu0 %v5069
    %5120 = vmatpush.msra.mxu0 %v5068
    %5121 = vmatpush.msra.mxu0 %v5067
    %5122 = vmatpush.msra.mxu0 %v5066
    %5123 = vmatpush.msra.mxu0 %v5065
    %5124 = vmatpush.msra.mxu0 %v5064
    %5125 = vmatpush.msra.mxu0 %v5063
    %5126 = vmatpush.msra.mxu0 %v5062
    %5127 = vmatpush.msra.mxu0 %v5061
    %5128 = vmatpush.msra.mxu0 %v5060
    %5129 = vmatpush.msra.mxu0 %v5059
    %5130 = vmatmul.f32.gmra.mxu0 %v5108
    %v5131 = vpop.f32.mrf.mxu0
    %v5132 = vadd.f32 0.0, %v5131
    %5133 = vdwg.mxu0
    %5134 = vmatpush.msra.mxu0 %v5090
    %5135 = vmatpush.msra.mxu0 %v5089
    %5136 = vmatpush.msra.mxu0 %v5088
    %5137 = vmatpush.msra.mxu0 %v5087
    %5138 = vmatpush.msra.mxu0 %v5086
    %5139 = vmatpush.msra.mxu0 %v5085
    %5140 = vmatpush.msra.mxu0 %v5084
    %5141 = vmatpush.msra.mxu0 %v5083
    %5142 = vmatpush.msra.mxu0 %v5082
    %5143 = vmatpush.msra.mxu0 %v5081
    %5144 = vmatpush.msra.mxu0 %v5080
    %5145 = vmatpush.msra.mxu0 %v5079
    %5146 = vmatpush.msra.mxu0 %v5078
    %5147 = vmatpush.msra.mxu0 %v5077
    %5148 = vmatpush.msra.mxu0 %v5076
    %5149 = vmatpush.msra.mxu0 %v5075
    %5150 = vmatmul.f32.gmra.mxu0 %v5109
    %v5151 = vpop.f32.mrf.mxu0
    %v5152 = vadd.f32 %v5132, %v5151
    %5153 = vdwg.mxu0
    %5154 = vmatpush.msra.mxu0 %v5106
    %5155 = vmatpush.msra.mxu0 %v5105
    %5156 = vmatpush.msra.mxu0 %v5104
    %5157 = vmatpush.msra.mxu0 %v5103
    %5158 = vmatpush.msra.mxu0 %v5102
    %5159 = vmatpush.msra.mxu0 %v5101
    %5160 = vmatpush.msra.mxu0 %v5100
    %5161 = vmatpush.msra.mxu0 %v5099
    %5162 = vmatpush.msra.mxu0 %v5098
    %5163 = vmatpush.msra.mxu0 %v5097
    %5164 = vmatpush.msra.mxu0 %v5096
    %5165 = vmatpush.msra.mxu0 %v5095
    %5166 = vmatpush.msra.mxu0 %v5094
    %5167 = vmatpush.msra.mxu0 %v5093
    %5168 = vmatpush.msra.mxu0 %v5092
    %5169 = vmatpush.msra.mxu0 %v5091
    %5170 = vmatmul.f32.gmra.mxu0 %v5110
    %v5171 = vpop.f32.mrf.mxu0
    %v5172 = vadd.f32 %v5152, %v5171
    %5173 = vdwg.mxu0
    %v5174 = vadd.f32 %v5051, %v5172
    %5175 = vst [vmem:[#allocation1] sm:$0xff] %v51
    %5176 = vst [vmem:[#allocation1 + $0x8] sm:$0xff] %v52
    %s5177 = scalar_lea.vmem [#allocation1], 2
    %v5178 = vld [vmem:[%s5177] ss:$4 sm:$0xff]
    %v5179 = vrot.slane %v5178, 1
    %v5181 = vmul.f32 %v4925, %v5179
    %v5182 = vld [vmem:[%s4683] sm:$0xff]
    %v5183 = vld [vmem:[%s4683 + $0x8] sm:$0xff]
    %v5184 = vld [vmem:[%s4683 + $0x10] sm:$0xff]
    %v5185 = vld [vmem:[%s4683 + $0x18] sm:$0xff]
    %v5186 = vld [vmem:[%s4683 + $0x20] sm:$0xff]
    %v5187 = vld [vmem:[%s4683 + $0x28] sm:$0xff]
    %v5188 = vld [vmem:[%s4683 + $0x30] sm:$0xff]
    %v5189 = vld [vmem:[%s4683 + $0x38] sm:$0xff]
    %v5190 = vld [vmem:[%s4683 + $0x40] sm:$0xff]
    %v5191 = vld [vmem:[%s4683 + $0x48] sm:$0xff]
    %v5192 = vld [vmem:[%s4683 + $0x50] sm:$0xff]
    %v5193 = vld [vmem:[%s4683 + $0x58] sm:$0xff]
    %v5194 = vld [vmem:[%s4683 + $0x60] sm:$0xff]
    %v5195 = vld [vmem:[%s4683 + $0x68] sm:$0xff]
    %v5196 = vld [vmem:[%s4683 + $0x70] sm:$0xff]
    %v5197 = vld [vmem:[%s4683 + $0x78] sm:$0xff]
    %v5198 = vld [vmem:[%s4683 + $0x80] sm:$0xff]
    %v5199 = vld [vmem:[%s4683 + $0x88] sm:$0xff]
    %v5200 = vld [vmem:[%s4683 + $0x90] sm:$0xff]
    %v5201 = vld [vmem:[%s4683 + $0x98] sm:$0xff]
    %v5202 = vld [vmem:[%s4683 + $0xa0] sm:$0xff]
    %v5203 = vld [vmem:[%s4683 + $0xa8] sm:$0xff]
    %v5204 = vld [vmem:[%s4683 + $0xb0] sm:$0xff]
    %v5205 = vld [vmem:[%s4683 + $0xb8] sm:$0xff]
    %v5206 = vld [vmem:[%s4683 + $0xc0] sm:$0xff]
    %v5207 = vld [vmem:[%s4683 + $0xc8] sm:$0xff]
    %v5208 = vld [vmem:[%s4683 + $0xd0] sm:$0xff]
    %v5209 = vld [vmem:[%s4683 + $0xd8] sm:$0xff]
    %v5210 = vld [vmem:[%s4683 + $0xe0] sm:$0xff]
    %v5211 = vld [vmem:[%s4683 + $0xe8] sm:$0xff]
    %v5212 = vld [vmem:[%s4683 + $0xf0] sm:$0xff]
    %v5213 = vld [vmem:[%s4683 + $0xf8] sm:$0xff]
    %v5214 = vld [vmem:[%s4683 + $0x100] sm:$0xff]
    %v5215 = vld [vmem:[%s4683 + $0x108] sm:$0xff]
    %v5216 = vld [vmem:[%s4683 + $0x110] sm:$0xff]
    %v5217 = vld [vmem:[%s4683 + $0x118] sm:$0xff]
    %v5218 = vld [vmem:[%s4683 + $0x120] sm:$0xff]
    %v5219 = vld [vmem:[%s4683 + $0x128] sm:$0xff]
    %v5220 = vld [vmem:[%s4683 + $0x130] sm:$0xff]
    %v5221 = vld [vmem:[%s4683 + $0x138] sm:$0xff]
    %v5222 = vld [vmem:[%s4683 + $0x140] sm:$0xff]
    %v5223 = vld [vmem:[%s4683 + $0x148] sm:$0xff]
    %v5224 = vld [vmem:[%s4683 + $0x150] sm:$0xff]
    %v5225 = vld [vmem:[%s4683 + $0x158] sm:$0xff]
    %v5226 = vld [vmem:[%s4683 + $0x160] sm:$0xff]
    %v5227 = vld [vmem:[%s4683 + $0x168] sm:$0xff]
    %v5228 = vld [vmem:[%s4683 + $0x170] sm:$0xff]
    %v5229 = vld [vmem:[%s4683 + $0x178] sm:$0xff]
    %v5231 = vperm.slane %v5181, 0
    %v5232 = vperm.slane %v5181, 1
    %v5233 = vperm.slane %v5181, 2
    %5237 = vmatpush.msra.mxu0 %v5197
    %5238 = vmatpush.msra.mxu0 %v5196
    %5239 = vmatpush.msra.mxu0 %v5195
    %5240 = vmatpush.msra.mxu0 %v5194
    %5241 = vmatpush.msra.mxu0 %v5193
    %5242 = vmatpush.msra.mxu0 %v5192
    %5243 = vmatpush.msra.mxu0 %v5191
    %5244 = vmatpush.msra.mxu0 %v5190
    %5245 = vmatpush.msra.mxu0 %v5189
    %5246 = vmatpush.msra.mxu0 %v5188
    %5247 = vmatpush.msra.mxu0 %v5187
    %5248 = vmatpush.msra.mxu0 %v5186
    %5249 = vmatpush.msra.mxu0 %v5185
    %5250 = vmatpush.msra.mxu0 %v5184
    %5251 = vmatpush.msra.mxu0 %v5183
    %5252 = vmatpush.msra.mxu0 %v5182
    %5253 = vmatmul.f32.gmra.mxu0 %v5231
    %v5254 = vpop.f32.mrf.mxu0
    %v5255 = vadd.f32 0.0, %v5254
    %5256 = vdwg.mxu0
    %5257 = vmatpush.msra.mxu0 %v5213
    %5258 = vmatpush.msra.mxu0 %v5212
    %5259 = vmatpush.msra.mxu0 %v5211
    %5260 = vmatpush.msra.mxu0 %v5210
    %5261 = vmatpush.msra.mxu0 %v5209
    %5262 = vmatpush.msra.mxu0 %v5208
    %5263 = vmatpush.msra.mxu0 %v5207
    %5264 = vmatpush.msra.mxu0 %v5206
    %5265 = vmatpush.msra.mxu0 %v5205
    %5266 = vmatpush.msra.mxu0 %v5204
    %5267 = vmatpush.msra.mxu0 %v5203
    %5268 = vmatpush.msra.mxu0 %v5202
    %5269 = vmatpush.msra.mxu0 %v5201
    %5270 = vmatpush.msra.mxu0 %v5200
    %5271 = vmatpush.msra.mxu0 %v5199
    %5272 = vmatpush.msra.mxu0 %v5198
    %5273 = vmatmul.f32.gmra.mxu0 %v5232
    %v5274 = vpop.f32.mrf.mxu0
    %v5275 = vadd.f32 %v5255, %v5274
    %5276 = vdwg.mxu0
    %5277 = vmatpush.msra.mxu0 %v5229
    %5278 = vmatpush.msra.mxu0 %v5228
    %5279 = vmatpush.msra.mxu0 %v5227
    %5280 = vmatpush.msra.mxu0 %v5226
    %5281 = vmatpush.msra.mxu0 %v5225
    %5282 = vmatpush.msra.mxu0 %v5224
    %5283 = vmatpush.msra.mxu0 %v5223
    %5284 = vmatpush.msra.mxu0 %v5222
    %5285 = vmatpush.msra.mxu0 %v5221
    %5286 = vmatpush.msra.mxu0 %v5220
    %5287 = vmatpush.msra.mxu0 %v5219
    %5288 = vmatpush.msra.mxu0 %v5218
    %5289 = vmatpush.msra.mxu0 %v5217
    %5290 = vmatpush.msra.mxu0 %v5216
    %5291 = vmatpush.msra.mxu0 %v5215
    %5292 = vmatpush.msra.mxu0 %v5214
    %5293 = vmatmul.f32.gmra.mxu0 %v5233
    %v5294 = vpop.f32.mrf.mxu0
    %v5295 = vadd.f32 %v5275, %v5294
    %5296 = vdwg.mxu0
    %v5297 = vadd.f32 %v5174, %v5295
    %v5298 = vld [vmem:[%s10] sm:$0xff]
    %v5299 = vld [vmem:[%s10 + $0x8] sm:$0xff]
    %v5300 = vld [vmem:[%s10 + $0x10] sm:$0xff]
    %v5301 = vld [vmem:[%s10 + $0x18] sm:$0xff]
    %v5302 = vld [vmem:[%s11] sm:$0x1]
    %v5304 = vsel %vm4805, %v5297, 0
    %5306 = vmatpush.msra.mxu0 0.0
    %5307 = vmatpush.msra.mxu0 0.0
    %5308 = vmatpush.msra.mxu0 0.0
    %5309 = vmatpush.msra.mxu0 0.0
    %5310 = vmatpush.msra.mxu0 0.0
    %5311 = vmatpush.msra.mxu0 0.0
    %5312 = vmatpush.msra.mxu0 0.0
    %5313 = vmatpush.msra.mxu0 0.0
    %5314 = vmatpush.msra.mxu0 0.0
    %5315 = vmatpush.msra.mxu0 0.0
    %5316 = vmatpush.msra.mxu0 0.0
    %5317 = vmatpush.msra.mxu0 0.0
    %5318 = vmatpush.msra.mxu0 %v5301
    %5319 = vmatpush.msra.mxu0 %v5300
    %5320 = vmatpush.msra.mxu0 %v5299
    %5321 = vmatpush.msra.mxu0 %v5298
    %5322 = vmatmul.f32.gmra.mxu0 %v5304
    %v5323 = vpop.f32.mrf.mxu0
    %v5324 = vadd.f32 %v5302, %v5323
    %5325 = vdwg.mxu0
    %v5326 = vmax.f32 %v5324, 0.0
    %v5327 = vld [vmem:[%s12] sm:$0xff]
    %v5328 = vld [vmem:[%s12 + $0x8] sm:$0xff]
    %v5329 = vld [vmem:[%s12 + $0x10] sm:$0xff]
    %v5330 = vld [vmem:[%s12 + $0x18] sm:$0xff]
    %v5331 = vld [vmem:[%s13] sm:$0x1]
    %v5333 = vsel %vm4805, %v5326, 0
    %5335 = vmatpush.msra.mxu0 0.0
    %5336 = vmatpush.msra.mxu0 0.0
    %5337 = vmatpush.msra.mxu0 0.0
    %5338 = vmatpush.msra.mxu0 0.0
    %5339 = vmatpush.msra.mxu0 0.0
    %5340 = vmatpush.msra.mxu0 0.0
    %5341 = vmatpush.msra.mxu0 0.0
    %5342 = vmatpush.msra.mxu0 0.0
    %5343 = vmatpush.msra.mxu0 0.0
    %5344 = vmatpush.msra.mxu0 0.0
    %5345 = vmatpush.msra.mxu0 0.0
    %5346 = vmatpush.msra.mxu0 0.0
    %5347 = vmatpush.msra.mxu0 %v5330
    %5348 = vmatpush.msra.mxu0 %v5329
    %5349 = vmatpush.msra.mxu0 %v5328
    %5350 = vmatpush.msra.mxu0 %v5327
    %5351 = vmatmul.f32.gmra.mxu0 %v5333
    %v5352 = vpop.f32.mrf.mxu0
    %v5353 = vadd.f32 %v5331, %v5352
    %5354 = vdwg.mxu0
    %v5355 = vmul.f32 %v5353, %v5353
    %v5356 = vsel %vm4383, %v5355, 0.0
    %5357 = vadd.xlane.f32.xlu0 %v5356
    %v5358 = vpop.xlane.xlu0 %5357
    %v5359 = vmax.f32 %v5358, 1e-24
    %v5360 = vrsqrt.pop %v5359
    %v5361 = vmul.f32 %v5360, %v5359
    %v5362 = vmul.f32 %v5361, %v5360
    %v5363 = vmul.f32 0.5, %v5362
    %v5364 = vsub.f32 1.5, %v5363
    %v5365 = vmul.f32 %v5360, %v5364
    %vm5366 = vweird.f32 %v5359
    %vm5367 = vweird.f32 %v5360
    %vm5368 = vmor %vm5366, %vm5367
    %v5369 = vsel %vm5368, %v5360, %v5365
    %v5370 = vmul.f32 %v5353, %v5369
    %5371 = vst [vmem:[#allocation3 + $0x1] sm:$0x1] %v5370
    // Predicated region
    $region58: #{contrastive_att_patch_forward.1} parent=1 // pred_check
      _
    $region59: #{contrastive_att_patch_forward.1} parent=1 // pred_check_branch
      %5373 = sbr.rel (0) target = $region61
    $region60: #{contrastive_att_patch_forward.1} parent=1 // pred_region
      %5375 = vsyncadd [#allocation4], 0
      %s5377 = sshll.u32 [#allocation3], 4
      %s5378 = int_to_ptr.vmem [resolvable:$true] %s5377
      %s5379 = sshll.u32 %s14, 4
      %s5380 = int_to_ptr.hbm [resolvable:$true] %s5379
      %5382 = dma.vmem_to_hbm [thread:$0]  %s5378, 32, %s5380, [#allocation4]
    $region61: #{contrastive_att_patch_forward.1} parent=1 // pred_fallthru
      _
    // Predicated region
    $region62: #{contrastive_att_patch_forward.1} parent=1 // pred_check
      _
    $region63: #{contrastive_att_patch_forward.1} parent=1 // pred_check_branch
      %5384 = sbr.rel (0) target = $region65
    $region64: #{contrastive_att_patch_forward.1} parent=1 // pred_region
      %5386 = dma.done [#allocation4], 32
    $region65: #{contrastive_att_patch_forward.1} parent=1 // pred_fallthru
      _
    %5387 = vsyncpa [#allocation4], 1

</llo_original>
